<compile_context>
chip_gen: v6e
topology: v6e:2x2x1
jax: 0.10.0
libtpu: 0.0.40
codegen_flags: <defaults>
</compile_context>

<pallas_src>
import math

import jax
import jax.numpy as jnp
from jax.experimental import pallas as pl
from jax.experimental.pallas import tpu as pltpu


_TARGET_BLOCK_BYTES = 4 * 1024 * 1024   # ~4 MiB blocks: ~86% of HBM roofline
_VMEM_LIMIT_BYTES = 32 * 1024 * 1024    # explicit scoped-VMEM budget (safe on v5e/v6e/v7x)
_MIN_KERNEL_BYTES = 64 * 1024           # below this, plain jnp beats kernel-launch overhead
_MIN_SPLIT_BYTES = 1 * 1024 * 1024      # above this, force >= 2 blocks (v7x: 2 TensorCores)


def _swish_transform(x):
    """x * sigmoid(x), computed exactly in f32 (the divide is hidden under DMA)."""
    xf = x.astype(jnp.float32)
    return xf * (1.0 / (1.0 + jnp.exp(-xf)))


def _make_elementwise_kernel(transform_func):
    def kernel(x_ref, o_ref):
        o_ref[...] = transform_func(x_ref[...]).astype(o_ref.dtype)
    return kernel


def _pallas_elementwise_2d(transform_func, x2d):
    """Run the elementwise kernel over a lane-dense (rows, lanes) slab."""
    rows, lanes = x2d.shape
    itemsize = jnp.dtype(x2d.dtype).itemsize

    # Sublane alignment: 8 rows for 32-bit, 16 for bf16/fp16, 32 for 8-bit.
    row_align = max(8, 32 // itemsize)
    row_bytes = lanes * itemsize

    # Block rows: reach ~_TARGET_BLOCK_BYTES, aligned to sublane packing,
    # never bigger than the (aligned) data itself.
    rows_aligned = -(-rows // row_align) * row_align
    block_rows = max(row_align,
                     (_TARGET_BLOCK_BYTES // row_bytes) // row_align * row_align)
    block_rows = min(block_rows, rows_aligned)

    # v7x: 2 TensorCores share the "parallel" grid — make sure mid-size
    # tensors produce at least 2 blocks so neither core idles.
    if rows * row_bytes > _MIN_SPLIT_BYTES:
        while block_rows > row_align and pl.cdiv(rows, block_rows) < 2:
            block_rows = max(row_align, (block_rows // 2) // row_align * row_align)

    grid = pl.cdiv(rows, block_rows)   # partial tail block is masked by Pallas

    return pl.pallas_call(
        _make_elementwise_kernel(transform_func),
        out_shape=jax.ShapeDtypeStruct((rows, lanes), x2d.dtype),
        grid=(grid,),
        in_specs=[pl.BlockSpec((block_rows, lanes), lambda i: (i, 0))],
        out_specs=pl.BlockSpec((block_rows, lanes), lambda i: (i, 0)),
        compiler_params=pltpu.CompilerParams(
            dimension_semantics=("parallel",),
            vmem_limit_bytes=_VMEM_LIMIT_BYTES,
        ),
    )(x2d)


def _elementwise_pallas(transform_func, x):
    """Apply an elementwise transform via a Pallas TPU kernel.

    The input is flattened to a lane-dense (rows, lanes) slab (no padding in
    the common case), processed in ~4 MiB blocks over a 1-D 'parallel' grid,
    and reshaped back to the original shape.
    """
    orig_shape = x.shape
    orig_dtype = x.dtype
    total = math.prod(orig_shape) if orig_shape else 1
    itemsize = jnp.dtype(orig_dtype).itemsize

    # Tiny inputs: the fused XLA elementwise op is faster than the
    # ravel/reshape plumbing + kernel-launch/per-step overhead.
    if total * itemsize < _MIN_KERNEL_BYTES:
        return transform_func(x).astype(orig_dtype)

    flat = jnp.ravel(x)

    # Widest lane-dense layout that divides the flat length exactly -> no
    # full-tensor pad before the kernel and no slice copy after it.
    lanes = next((l for l in (512, 256, 128) if total % l == 0), None)
    if lanes is not None:
        out2d = _pallas_elementwise_2d(transform_func,
                                       flat.reshape(total // lanes, lanes))
        return out2d.reshape(orig_shape)

    # Ragged size: kernel on the 128-aligned bulk, <128-element tail in jnp.
    bulk = (total // 128) * 128
    bulk_out = _pallas_elementwise_2d(transform_func,
                                      flat[:bulk].reshape(bulk // 128, 128))
    tail_out = transform_func(flat[bulk:]).astype(orig_dtype)
    return jnp.concatenate([bulk_out.reshape(-1), tail_out]).reshape(orig_shape)


class Lambda:
    """Pallas-backed equivalent of keratorch's `Lambda(transform_func)`.

    `transform_func` must be an elementwise (shape-preserving) function built
    from jnp primitives; it is traced inside the Pallas kernel body.
    """
    # TODO(synk): non-elementwise transform_funcs (reshapes, reductions, ...)
    # have no single generic Pallas lowering; only elementwise is kernelized.

    def __init__(self, transform_func):
        self.transform_func = transform_func

    def __call__(self, inputs):
        return _elementwise_pallas(self.transform_func, inputs)

    forward = __call__


if __name__ == "__main__":
    key = jax.random.PRNGKey(0)
    k_small, k_big = jax.random.split(key)

    module = Lambda(_swish_transform)   # Lambda(lambda x: x * sigmoid(x))

    # Small NCHW input (tiny-input fast path).
    x_small = jax.random.normal(k_small, (2, 4, 16, 16), dtype=jnp.float32)
    out_small = module(x_small)

    # Larger input that exercises the Pallas kernel with a multi-block grid.
    x_big = jax.random.normal(k_big, (8, 32, 64, 64), dtype=jnp.float32)
    out_big = module(x_big)

    jax.block_until_ready((out_small, out_big))

    # Reference check in plain JAX (same math the PyTorch lambda would do).
    ref_small = x_small * jax.nn.sigmoid(x_small)
    ref_big = x_big * jax.nn.sigmoid(x_big)

    assert out_small.shape == x_small.shape and out_small.dtype == x_small.dtype
    assert out_big.shape == x_big.shape and out_big.dtype == x_big.dtype
    assert jnp.allclose(out_small, ref_small, atol=1e-5, rtol=1e-5), float(
        jnp.max(jnp.abs(out_small - ref_small)))
    assert jnp.allclose(out_big, ref_big, atol=1e-5, rtol=1e-5), float(
        jnp.max(jnp.abs(out_big - ref_big)))

    print("KERNEL_OK")
</pallas_src>

<mosaic_0001>
module attributes {stable_mosaic.version = 11 : i64} {
  func.func @kernel(%arg0: i32, %arg1: memref<1024x512xf32, #tpu.memory_space<vmem>>, %arg2: memref<1024x512xf32, #tpu.memory_space<vmem>>) attributes {dimension_semantics = [#tpu.dimension_semantics<parallel>], iteration_bounds = array<i64: 2>, scalar_prefetch = 0 : i64, scratch_operands = 0 : i64, tpu.core_type = #tpu.core_type<tc>, window_params = [{transform_indices = @transform_0, window_bounds = array<i64: 1024, 512>}, {transform_indices = @transform_1, window_bounds = array<i64: 1024, 512>}]} {
    %c0 = arith.constant 0 : index
    %c0_0 = arith.constant 0 : index
    %0 = vector.load %arg1[%c0, %c0_0] : memref<1024x512xf32, #tpu.memory_space<vmem>>, vector<1024x512xf32>
    %cst = arith.constant 0.000000e+00 : f32
    %1 = vector.broadcast %cst : f32 to vector<1024x512xf32>
    %2 = arith.subf %1, %0 : vector<1024x512xf32>
    %3 = math.exp %2 : vector<1024x512xf32>
    %cst_1 = arith.constant 1.000000e+00 : f32
    %4 = vector.broadcast %cst_1 : f32 to vector<1024x512xf32>
    %5 = arith.addf %4, %3 : vector<1024x512xf32>
    %cst_2 = arith.constant 1.000000e+00 : f32
    %6 = vector.broadcast %cst_2 : f32 to vector<1024x512xf32>
    %7 = arith.divf %6, %5 : vector<1024x512xf32>
    %8 = arith.mulf %0, %7 : vector<1024x512xf32>
    %c0_3 = arith.constant 0 : index
    %c0_4 = arith.constant 0 : index
    %9 = vector.load %arg2[%c0_3, %c0_4] : memref<1024x512xf32, #tpu.memory_space<vmem>>, vector<1024x512xf32>
    tpu.vector_store %arg2[%c0_3, %c0_4], %8 {strides = array<i32>} : memref<1024x512xf32, #tpu.memory_space<vmem>>, vector<1024x512xf32>,
    return
  }
  func.func @transform_0(%arg0: i32) -> (i32, i32) {
    %c0_i32 = arith.constant 0 : i32
    %c0_i32_0 = arith.constant 0 : i32
    return %arg0, %c0_i32 : i32, i32
  }
  func.func @transform_1(%arg0: i32) -> (i32, i32) {
    %c0_i32 = arith.constant 0 : i32
    %c0_i32_0 = arith.constant 0 : i32
    return %arg0, %c0_i32 : i32, i32
  }
}

</mosaic_0001>

<llo_original>
// kernel: tpu_custom_call.1
$region0: #{tpu_custom_call.1}
  #allocation0 [shape = 'u32[]', space=smem, size = 0x4, offset = 0x4, fixed_abs, tag = 'smem constant byte address 0x4 - core index']
  #allocation1 [shape = 'u32[144,128]{1,0:T(1,128)}', space=vmem, size = 0x12000, scoped, tag = 'internal scratch']
  %s0 = inlined_call_operand.hbm [shape: f32[2048,512], index: 0, kind: input, shape index: {}]
  %s1 = inlined_call_operand.hbm [shape: f32[2048,512], index: 1, kind: output, shape index: {}]
  %s2 = sld [smem:[#allocation0]]
  $region41: #{tpu_custom_call.1} parent=0
    _
  %s4 = ssub.s32 1, %s2
  %s5 = scalar_select 0, %s4, %s2
  $region1: #{tpu_custom_call.1} parent=0
    #allocation2 [shape = 'u8[4194304]{0}', space=vmem, size = 0x400000, scoped, tag = 'input window, operand 0']
    #allocation3 [shape = 's32[2]{0}', space=sflag, size = 0x8, scoped, tag = 'scoped memory for tpu_custom_call.1']
    #allocation4 [shape = 's32[2]{0}', space=sflag, size = 0x8, scoped, tag = 'scoped memory for tpu_custom_call.1']
    #allocation5 [shape = 'u8[4194304]{0}', space=vmem, size = 0x400000, scoped, tag = 'output window, operand 0']
    %6 = vsyncpa [#allocation3], 0
    %s7 = scalar_lea.sflag [#allocation3], 1
    %8 = vsyncpa %s7, 0
    %9 = vsyncpa [#allocation4], 0
    %s10 = scalar_lea.sflag [#allocation4], 1
    %11 = vsyncpa %s10, 0
    loop: start=0, step=1, limit=4
    $region2: #{tpu_custom_call.1} parent=1 // loop_pre_header
      _
    $region3: #{tpu_custom_call.1} parent=1 // loop_header
      %s13 = sphi 0, %s17
      %p14 = scmp.ge.s32.totalorder %s13, 4
      %s23 = sphi 0, %s25
      %s26 = sphi 0, %s23
      %s27 = sphi 0, %s26
      %s43 = sphi 0, %s27
      %s49 = sphi 0, %s51
      %s52 = sphi 0, %s49
      %s53 = sphi 0, %s52
      %s69 = sphi 0, %s53
    $region4: #{tpu_custom_call.1} parent=1 // loop_header_branch
      %16 = sbr.rel (%p14) target = $region8
    $region5: #{tpu_custom_call.1} parent=1 // loop_body
      %s18 = ssub.s32 %s13, 1
      %s19 = ssub.s32 %s13, 2
      %s20 = sadd.s32 %s13, 1
      %s21 = ssub.s32 %s13, %s20
      %p22 = scmp.eq.s32.totalorder %s21, 0
      %s24 = sadd.s32 %s23, 1
      %s25 = scalar_select %p22, %s23, %s24
      %p28 = pneg %p22
      %p29 = scmp.eq.s32.totalorder %s13, 1
      %p30 = por %p28, %p29
      %p31 = scmp.ne.s32.totalorder %s23, %s26
      %p32 = scmp.eq.s32.totalorder %s13, 0
      %p33 = por %p31, %p32
      %p34 = scmp.ne.s32.totalorder %s23, %s26
      %p35 = scmp.eq.s32.totalorder %s18, 1
      %p36 = por %p34, %p35
      %p37 = scmp.ne.s32.totalorder %s26, %s27
      %p38 = scmp.eq.s32.totalorder %s18, 0
      %p39 = por %p37, %p38
      %p40 = scmp.ne.s32.totalorder %s26, %s27
      %p41 = scmp.eq.s32.totalorder %s19, 1
      %p42 = por %p40, %p41
      %p44 = scmp.ne.s32.totalorder %s27, %s43
      %p45 = scmp.eq.s32.totalorder %s19, 0
      %p46 = por %p44, %p45
      %s47 = ssub.s32 %s13, %s20
      %p48 = scmp.eq.s32.totalorder %s47, 0
      %s50 = sadd.s32 %s49, 1
      %s51 = scalar_select %p48, %s49, %s50
      %p54 = pneg %p48
      %p55 = scmp.eq.s32.totalorder %s13, 1
      %p56 = por %p54, %p55
      %p57 = scmp.ne.s32.totalorder %s49, %s52
      %p58 = scmp.eq.s32.totalorder %s13, 0
      %p59 = por %p57, %p58
      %p60 = scmp.ne.s32.totalorder %s49, %s52
      %p61 = scmp.eq.s32.totalorder %s18, 1
      %p62 = por %p60, %p61
      %p63 = scmp.ne.s32.totalorder %s52, %s53
      %p64 = scmp.eq.s32.totalorder %s18, 0
      %p65 = por %p63, %p64
      %p66 = scmp.ne.s32.totalorder %s52, %s53
      %p67 = scmp.eq.s32.totalorder %s19, 1
      %p68 = por %p66, %p67
      %p70 = scmp.ne.s32.totalorder %s53, %s69
      %p71 = scmp.eq.s32.totalorder %s19, 0
      %p72 = por %p70, %p71
      %p73 = scmp.le.s32.totalorder 1, %s13
      %p74 = scmp.lt.s32.totalorder %s13, 3
      %p75 = pnand %p73, %p74
      %p76 = pneg %p75
      // Predicated region
      $region9: #{tpu_custom_call.1} parent=5 // pred_check
        _
      $region10: #{tpu_custom_call.1} parent=5 // pred_check_branch
        %78 = sbr.rel (%p75) target = $region12
      $region11: #{tpu_custom_call.1} parent=5 // pred_region
        %s79 = ssub.s32 %s13, 1
      $region12: #{tpu_custom_call.1} parent=5 // pred_fallthru
        _
      %p80 = scmp.lt.s32.totalorder %s13, 2
      // Predicated region
      $region13: #{tpu_custom_call.1} parent=5 // pred_check
        %p81 = pneg %p80
      $region14: #{tpu_custom_call.1} parent=5 // pred_check_branch
        %83 = sbr.rel (%p81) target = $region16
      $region15: #{tpu_custom_call.1} parent=5 // pred_region
        // Predicated region
        $region17: #{tpu_custom_call.1} parent=15 // pred_check
          %p84 = pneg %p33
        $region18: #{tpu_custom_call.1} parent=15 // pred_check_branch
          %86 = sbr.rel (%p84) target = $region20
        $region19: #{tpu_custom_call.1} parent=15 // pred_region
          %s87 = sand.u32 %s23, 1
          %s88 = scalar_lea.sflag [#allocation3], %s87
          %s89 = sand.u32 %s23, 1
          %s90 = smul.addr %s89, 4096
          %s91 = scalar_lea.vmem [#allocation2], %s90
          %s92 = smul.u32 128, %s13
          %s94 = ssub.s32 65536, 65536
          %95 = vsyncadd %s88, %s94
          %s96 = smul.addr %s92, 4
          %s97 = smul.addr %s96, 128
          %s98 = scalar_lea.hbm %s0, %s97
          %s99 = sshll.u32 %s91, 4
          %s100 = int_to_ptr.vmem [resolvable:$true] %s99
          %105 = dma.hbm_to_vmem [thread:$0]  %s98, 65536, %s100, %s88, 512, 512, 32
        $region20: #{tpu_custom_call.1} parent=15 // pred_fallthru
          _
      $region16: #{tpu_custom_call.1} parent=5 // pred_fallthru
        _
      %p106 = scmp.le.s32.totalorder 1, %s13
      %p107 = scmp.lt.s32.totalorder %s13, 3
      %p108 = pnand %p106, %p107
      %p109 = pneg %p108
      // Predicated region
      $region21: #{tpu_custom_call.1} parent=5 // pred_check
        _
      $region22: #{tpu_custom_call.1} parent=5 // pred_check_branch
        %111 = sbr.rel (%p108) target = $region24
      $region23: #{tpu_custom_call.1} parent=5 // pred_region
        %s112 = ssub.s32 %s13, 1
        %s113 = sand.u32 %s26, 1
        %s114 = scalar_lea.sflag [#allocation3], %s113
        %s115 = sand.u32 %s26, 1
        %s116 = smul.addr %s115, 4096
        %s117 = scalar_lea.vmem [#allocation2], %s116
        // Predicated region
        $region25: #{tpu_custom_call.1} parent=23 // pred_check
          %p118 = pneg %p39
        $region26: #{tpu_custom_call.1} parent=23 // pred_check_branch
          %120 = sbr.rel (%p118) target = $region28
        $region27: #{tpu_custom_call.1} parent=23 // pred_region
          %121 = dma.done %s114, 65536
        $region28: #{tpu_custom_call.1} parent=23 // pred_fallthru
          _
        %s122 = sand.u32 %s26, 1
        %s123 = scalar_lea.sflag [#allocation3], %s122
        %s124 = sand.u32 %s26, 1
        %s125 = smul.addr %s124, 4096
        %s126 = scalar_lea.vmem [#allocation2], %s125
        %p127 = pneg %p39
        %p128 = pneg %p36
        %p129 = pneg %p65
        %p130 = pneg %p62
        %s131 = sand.u32 %s52, 1
        %s132 = scalar_lea.sflag [#allocation4], %s131
        %s133 = sand.u32 %s52, 1
        %s134 = smul.addr %s133, 4096
        %s135 = scalar_lea.vmem [#allocation5], %s134
        %s136 = smul.u32 128, %s18
        %s137 = smul.u32 128, %s18
        %v138 = vld [vmem:[%s117] sm:$0xff]
        %v139 = vld [vmem:[%s117 + $0x8] sm:$0xff]
        %v140 = vld [vmem:[%s117 + $0x10] sm:$0xff]
        %v141 = vld [vmem:[%s117 + $0x18] sm:$0xff]
        %v142 = vld [vmem:[%s117 + $0x20] sm:$0xff]
        %v143 = vld [vmem:[%s117 + $0x28] sm:$0xff]
        %v144 = vld [vmem:[%s117 + $0x30] sm:$0xff]
        %v145 = vld [vmem:[%s117 + $0x38] sm:$0xff]
        %v146 = vld [vmem:[%s117 + $0x40] sm:$0xff]
        %v147 = vld [vmem:[%s117 + $0x48] sm:$0xff]
        %v148 = vld [vmem:[%s117 + $0x50] sm:$0xff]
        %v149 = vld [vmem:[%s117 + $0x58] sm:$0xff]
        %v150 = vld [vmem:[%s117 + $0x60] sm:$0xff]
        %v151 = vld [vmem:[%s117 + $0x68] sm:$0xff]
        %v152 = vld [vmem:[%s117 + $0x70] sm:$0xff]
        %v153 = vld [vmem:[%s117 + $0x78] sm:$0xff]
        %v154 = vld [vmem:[%s117 + $0x80] sm:$0xff]
        %v155 = vld [vmem:[%s117 + $0x88] sm:$0xff]
        %v156 = vld [vmem:[%s117 + $0x90] sm:$0xff]
        %v157 = vld [vmem:[%s117 + $0x98] sm:$0xff]
        %v158 = vld [vmem:[%s117 + $0xa0] sm:$0xff]
        %v159 = vld [vmem:[%s117 + $0xa8] sm:$0xff]
        %v160 = vld [vmem:[%s117 + $0xb0] sm:$0xff]
        %v161 = vld [vmem:[%s117 + $0xb8] sm:$0xff]
        %v162 = vld [vmem:[%s117 + $0xc0] sm:$0xff]
        %v163 = vld [vmem:[%s117 + $0xc8] sm:$0xff]
        %v164 = vld [vmem:[%s117 + $0xd0] sm:$0xff]
        %v165 = vld [vmem:[%s117 + $0xd8] sm:$0xff]
        %v166 = vld [vmem:[%s117 + $0xe0] sm:$0xff]
        %v167 = vld [vmem:[%s117 + $0xe8] sm:$0xff]
        %v168 = vld [vmem:[%s117 + $0xf0] sm:$0xff]
        %v169 = vld [vmem:[%s117 + $0xf8] sm:$0xff]
        %v170 = vld [vmem:[%s117 + $0x100] sm:$0xff]
        %v171 = vld [vmem:[%s117 + $0x108] sm:$0xff]
        %v172 = vld [vmem:[%s117 + $0x110] sm:$0xff]
        %v173 = vld [vmem:[%s117 + $0x118] sm:$0xff]
        %v174 = vld [vmem:[%s117 + $0x120] sm:$0xff]
        %v175 = vld [vmem:[%s117 + $0x128] sm:$0xff]
        %v176 = vld [vmem:[%s117 + $0x130] sm:$0xff]
        %v177 = vld [vmem:[%s117 + $0x138] sm:$0xff]
        %v178 = vld [vmem:[%s117 + $0x140] sm:$0xff]
        %v179 = vld [vmem:[%s117 + $0x148] sm:$0xff]
        %v180 = vld [vmem:[%s117 + $0x150] sm:$0xff]
        %v181 = vld [vmem:[%s117 + $0x158] sm:$0xff]
        %v182 = vld [vmem:[%s117 + $0x160] sm:$0xff]
        %v183 = vld [vmem:[%s117 + $0x168] sm:$0xff]
        %v184 = vld [vmem:[%s117 + $0x170] sm:$0xff]
        %v185 = vld [vmem:[%s117 + $0x178] sm:$0xff]
        %v186 = vld [vmem:[%s117 + $0x180] sm:$0xff]
        %v187 = vld [vmem:[%s117 + $0x188] sm:$0xff]
        %v188 = vld [vmem:[%s117 + $0x190] sm:$0xff]
        %v189 = vld [vmem:[%s117 + $0x198] sm:$0xff]
        %v190 = vld [vmem:[%s117 + $0x1a0] sm:$0xff]
        %v191 = vld [vmem:[%s117 + $0x1a8] sm:$0xff]
        %v192 = vld [vmem:[%s117 + $0x1b0] sm:$0xff]
        %v193 = vld [vmem:[%s117 + $0x1b8] sm:$0xff]
        %v194 = vld [vmem:[%s117 + $0x1c0] sm:$0xff]
        %v195 = vld [vmem:[%s117 + $0x1c8] sm:$0xff]
        %v196 = vld [vmem:[%s117 + $0x1d0] sm:$0xff]
        %v197 = vld [vmem:[%s117 + $0x1d8] sm:$0xff]
        %v198 = vld [vmem:[%s117 + $0x1e0] sm:$0xff]
        %v199 = vld [vmem:[%s117 + $0x1e8] sm:$0xff]
        %v200 = vld [vmem:[%s117 + $0x1f0] sm:$0xff]
        %v201 = vld [vmem:[%s117 + $0x1f8] sm:$0xff]
        %v202 = vld [vmem:[%s117 + $0x200] sm:$0xff]
        %v203 = vld [vmem:[%s117 + $0x208] sm:$0xff]
        %v204 = vld [vmem:[%s117 + $0x210] sm:$0xff]
        %v205 = vld [vmem:[%s117 + $0x218] sm:$0xff]
        %v206 = vld [vmem:[%s117 + $0x220] sm:$0xff]
        %v207 = vld [vmem:[%s117 + $0x228] sm:$0xff]
        %v208 = vld [vmem:[%s117 + $0x230] sm:$0xff]
        %v209 = vld [vmem:[%s117 + $0x238] sm:$0xff]
        %v210 = vld [vmem:[%s117 + $0x240] sm:$0xff]
        %v211 = vld [vmem:[%s117 + $0x248] sm:$0xff]
        %v212 = vld [vmem:[%s117 + $0x250] sm:$0xff]
        %v213 = vld [vmem:[%s117 + $0x258] sm:$0xff]
        %v214 = vld [vmem:[%s117 + $0x260] sm:$0xff]
        %v215 = vld [vmem:[%s117 + $0x268] sm:$0xff]
        %v216 = vld [vmem:[%s117 + $0x270] sm:$0xff]
        %v217 = vld [vmem:[%s117 + $0x278] sm:$0xff]
        %v218 = vld [vmem:[%s117 + $0x280] sm:$0xff]
        %v219 = vld [vmem:[%s117 + $0x288] sm:$0xff]
        %v220 = vld [vmem:[%s117 + $0x290] sm:$0xff]
        %v221 = vld [vmem:[%s117 + $0x298] sm:$0xff]
        %v222 = vld [vmem:[%s117 + $0x2a0] sm:$0xff]
        %v223 = vld [vmem:[%s117 + $0x2a8] sm:$0xff]
        %v224 = vld [vmem:[%s117 + $0x2b0] sm:$0xff]
        %v225 = vld [vmem:[%s117 + $0x2b8] sm:$0xff]
        %v226 = vld [vmem:[%s117 + $0x2c0] sm:$0xff]
        %v227 = vld [vmem:[%s117 + $0x2c8] sm:$0xff]
        %v228 = vld [vmem:[%s117 + $0x2d0] sm:$0xff]
        %v229 = vld [vmem:[%s117 + $0x2d8] sm:$0xff]
        %v230 = vld [vmem:[%s117 + $0x2e0] sm:$0xff]
        %v231 = vld [vmem:[%s117 + $0x2e8] sm:$0xff]
        %v232 = vld [vmem:[%s117 + $0x2f0] sm:$0xff]
        %v233 = vld [vmem:[%s117 + $0x2f8] sm:$0xff]
        %v234 = vld [vmem:[%s117 + $0x300] sm:$0xff]
        %v235 = vld [vmem:[%s117 + $0x308] sm:$0xff]
        %v236 = vld [vmem:[%s117 + $0x310] sm:$0xff]
        %v237 = vld [vmem:[%s117 + $0x318] sm:$0xff]
        %v238 = vld [vmem:[%s117 + $0x320] sm:$0xff]
        %v239 = vld [vmem:[%s117 + $0x328] sm:$0xff]
        %v240 = vld [vmem:[%s117 + $0x330] sm:$0xff]
        %v241 = vld [vmem:[%s117 + $0x338] sm:$0xff]
        %v242 = vld [vmem:[%s117 + $0x340] sm:$0xff]
        %v243 = vld [vmem:[%s117 + $0x348] sm:$0xff]
        %v244 = vld [vmem:[%s117 + $0x350] sm:$0xff]
        %v245 = vld [vmem:[%s117 + $0x358] sm:$0xff]
        %v246 = vld [vmem:[%s117 + $0x360] sm:$0xff]
        %v247 = vld [vmem:[%s117 + $0x368] sm:$0xff]
        %v248 = vld [vmem:[%s117 + $0x370] sm:$0xff]
        %v249 = vld [vmem:[%s117 + $0x378] sm:$0xff]
        %v250 = vld [vmem:[%s117 + $0x380] sm:$0xff]
        %v251 = vld [vmem:[%s117 + $0x388] sm:$0xff]
        %v252 = vld [vmem:[%s117 + $0x390] sm:$0xff]
        %v253 = vld [vmem:[%s117 + $0x398] sm:$0xff]
        %v254 = vld [vmem:[%s117 + $0x3a0] sm:$0xff]
        %v255 = vld [vmem:[%s117 + $0x3a8] sm:$0xff]
        %v256 = vld [vmem:[%s117 + $0x3b0] sm:$0xff]
        %v257 = vld [vmem:[%s117 + $0x3b8] sm:$0xff]
        %v258 = vld [vmem:[%s117 + $0x3c0] sm:$0xff]
        %v259 = vld [vmem:[%s117 + $0x3c8] sm:$0xff]
        %v260 = vld [vmem:[%s117 + $0x3d0] sm:$0xff]
        %v261 = vld [vmem:[%s117 + $0x3d8] sm:$0xff]
        %v262 = vld [vmem:[%s117 + $0x3e0] sm:$0xff]
        %v263 = vld [vmem:[%s117 + $0x3e8] sm:$0xff]
        %v264 = vld [vmem:[%s117 + $0x3f0] sm:$0xff]
        %v265 = vld [vmem:[%s117 + $0x3f8] sm:$0xff]
        %v266 = vld [vmem:[%s117 + $0x400] sm:$0xff]
        %v267 = vld [vmem:[%s117 + $0x408] sm:$0xff]
        %v268 = vld [vmem:[%s117 + $0x410] sm:$0xff]
        %v269 = vld [vmem:[%s117 + $0x418] sm:$0xff]
        %v270 = vld [vmem:[%s117 + $0x420] sm:$0xff]
        %v271 = vld [vmem:[%s117 + $0x428] sm:$0xff]
        %v272 = vld [vmem:[%s117 + $0x430] sm:$0xff]
        %v273 = vld [vmem:[%s117 + $0x438] sm:$0xff]
        %v274 = vld [vmem:[%s117 + $0x440] sm:$0xff]
        %v275 = vld [vmem:[%s117 + $0x448] sm:$0xff]
        %v276 = vld [vmem:[%s117 + $0x450] sm:$0xff]
        %v277 = vld [vmem:[%s117 + $0x458] sm:$0xff]
        %v278 = vld [vmem:[%s117 + $0x460] sm:$0xff]
        %v279 = vld [vmem:[%s117 + $0x468] sm:$0xff]
        %v280 = vld [vmem:[%s117 + $0x470] sm:$0xff]
        %v281 = vld [vmem:[%s117 + $0x478] sm:$0xff]
        %v282 = vld [vmem:[%s117 + $0x480] sm:$0xff]
        %v283 = vld [vmem:[%s117 + $0x488] sm:$0xff]
        %v284 = vld [vmem:[%s117 + $0x490] sm:$0xff]
        %v285 = vld [vmem:[%s117 + $0x498] sm:$0xff]
        %v286 = vld [vmem:[%s117 + $0x4a0] sm:$0xff]
        %v287 = vld [vmem:[%s117 + $0x4a8] sm:$0xff]
        %v288 = vld [vmem:[%s117 + $0x4b0] sm:$0xff]
        %v289 = vld [vmem:[%s117 + $0x4b8] sm:$0xff]
        %v290 = vld [vmem:[%s117 + $0x4c0] sm:$0xff]
        %v291 = vld [vmem:[%s117 + $0x4c8] sm:$0xff]
        %v292 = vld [vmem:[%s117 + $0x4d0] sm:$0xff]
        %v293 = vld [vmem:[%s117 + $0x4d8] sm:$0xff]
        %v294 = vld [vmem:[%s117 + $0x4e0] sm:$0xff]
        %v295 = vld [vmem:[%s117 + $0x4e8] sm:$0xff]
        %v296 = vld [vmem:[%s117 + $0x4f0] sm:$0xff]
        %v297 = vld [vmem:[%s117 + $0x4f8] sm:$0xff]
        %v298 = vld [vmem:[%s117 + $0x500] sm:$0xff]
        %v299 = vld [vmem:[%s117 + $0x508] sm:$0xff]
        %v300 = vld [vmem:[%s117 + $0x510] sm:$0xff]
        %v301 = vld [vmem:[%s117 + $0x518] sm:$0xff]
        %v302 = vld [vmem:[%s117 + $0x520] sm:$0xff]
        %v303 = vld [vmem:[%s117 + $0x528] sm:$0xff]
        %v304 = vld [vmem:[%s117 + $0x530] sm:$0xff]
        %v305 = vld [vmem:[%s117 + $0x538] sm:$0xff]
        %v306 = vld [vmem:[%s117 + $0x540] sm:$0xff]
        %v307 = vld [vmem:[%s117 + $0x548] sm:$0xff]
        %v308 = vld [vmem:[%s117 + $0x550] sm:$0xff]
        %v309 = vld [vmem:[%s117 + $0x558] sm:$0xff]
        %v310 = vld [vmem:[%s117 + $0x560] sm:$0xff]
        %v311 = vld [vmem:[%s117 + $0x568] sm:$0xff]
        %v312 = vld [vmem:[%s117 + $0x570] sm:$0xff]
        %v313 = vld [vmem:[%s117 + $0x578] sm:$0xff]
        %v314 = vld [vmem:[%s117 + $0x580] sm:$0xff]
        %v315 = vld [vmem:[%s117 + $0x588] sm:$0xff]
        %v316 = vld [vmem:[%s117 + $0x590] sm:$0xff]
        %v317 = vld [vmem:[%s117 + $0x598] sm:$0xff]
        %v318 = vld [vmem:[%s117 + $0x5a0] sm:$0xff]
        %v319 = vld [vmem:[%s117 + $0x5a8] sm:$0xff]
        %v320 = vld [vmem:[%s117 + $0x5b0] sm:$0xff]
        %v321 = vld [vmem:[%s117 + $0x5b8] sm:$0xff]
        %v322 = vld [vmem:[%s117 + $0x5c0] sm:$0xff]
        %v323 = vld [vmem:[%s117 + $0x5c8] sm:$0xff]
        %v324 = vld [vmem:[%s117 + $0x5d0] sm:$0xff]
        %v325 = vld [vmem:[%s117 + $0x5d8] sm:$0xff]
        %v326 = vld [vmem:[%s117 + $0x5e0] sm:$0xff]
        %v327 = vld [vmem:[%s117 + $0x5e8] sm:$0xff]
        %v328 = vld [vmem:[%s117 + $0x5f0] sm:$0xff]
        %v329 = vld [vmem:[%s117 + $0x5f8] sm:$0xff]
        %v330 = vld [vmem:[%s117 + $0x600] sm:$0xff]
        %v331 = vld [vmem:[%s117 + $0x608] sm:$0xff]
        %v332 = vld [vmem:[%s117 + $0x610] sm:$0xff]
        %v333 = vld [vmem:[%s117 + $0x618] sm:$0xff]
        %v334 = vld [vmem:[%s117 + $0x620] sm:$0xff]
        %v335 = vld [vmem:[%s117 + $0x628] sm:$0xff]
        %v336 = vld [vmem:[%s117 + $0x630] sm:$0xff]
        %v337 = vld [vmem:[%s117 + $0x638] sm:$0xff]
        %v338 = vld [vmem:[%s117 + $0x640] sm:$0xff]
        %v339 = vld [vmem:[%s117 + $0x648] sm:$0xff]
        %v340 = vld [vmem:[%s117 + $0x650] sm:$0xff]
        %v341 = vld [vmem:[%s117 + $0x658] sm:$0xff]
        %v342 = vld [vmem:[%s117 + $0x660] sm:$0xff]
        %v343 = vld [vmem:[%s117 + $0x668] sm:$0xff]
        %v344 = vld [vmem:[%s117 + $0x670] sm:$0xff]
        %v345 = vld [vmem:[%s117 + $0x678] sm:$0xff]
        %v346 = vld [vmem:[%s117 + $0x680] sm:$0xff]
        %v347 = vld [vmem:[%s117 + $0x688] sm:$0xff]
        %v348 = vld [vmem:[%s117 + $0x690] sm:$0xff]
        %v349 = vld [vmem:[%s117 + $0x698] sm:$0xff]
        %v350 = vld [vmem:[%s117 + $0x6a0] sm:$0xff]
        %v351 = vld [vmem:[%s117 + $0x6a8] sm:$0xff]
        %v352 = vld [vmem:[%s117 + $0x6b0] sm:$0xff]
        %v353 = vld [vmem:[%s117 + $0x6b8] sm:$0xff]
        %v354 = vld [vmem:[%s117 + $0x6c0] sm:$0xff]
        %v355 = vld [vmem:[%s117 + $0x6c8] sm:$0xff]
        %v356 = vld [vmem:[%s117 + $0x6d0] sm:$0xff]
        %v357 = vld [vmem:[%s117 + $0x6d8] sm:$0xff]
        %v358 = vld [vmem:[%s117 + $0x6e0] sm:$0xff]
        %v359 = vld [vmem:[%s117 + $0x6e8] sm:$0xff]
        %v360 = vld [vmem:[%s117 + $0x6f0] sm:$0xff]
        %v361 = vld [vmem:[%s117 + $0x6f8] sm:$0xff]
        %v362 = vld [vmem:[%s117 + $0x700] sm:$0xff]
        %v363 = vld [vmem:[%s117 + $0x708] sm:$0xff]
        %v364 = vld [vmem:[%s117 + $0x710] sm:$0xff]
        %v365 = vld [vmem:[%s117 + $0x718] sm:$0xff]
        %v366 = vld [vmem:[%s117 + $0x720] sm:$0xff]
        %v367 = vld [vmem:[%s117 + $0x728] sm:$0xff]
        %v368 = vld [vmem:[%s117 + $0x730] sm:$0xff]
        %v369 = vld [vmem:[%s117 + $0x738] sm:$0xff]
        %v370 = vld [vmem:[%s117 + $0x740] sm:$0xff]
        %v371 = vld [vmem:[%s117 + $0x748] sm:$0xff]
        %v372 = vld [vmem:[%s117 + $0x750] sm:$0xff]
        %v373 = vld [vmem:[%s117 + $0x758] sm:$0xff]
        %v374 = vld [vmem:[%s117 + $0x760] sm:$0xff]
        %v375 = vld [vmem:[%s117 + $0x768] sm:$0xff]
        %v376 = vld [vmem:[%s117 + $0x770] sm:$0xff]
        %v377 = vld [vmem:[%s117 + $0x778] sm:$0xff]
        %v378 = vld [vmem:[%s117 + $0x780] sm:$0xff]
        %v379 = vld [vmem:[%s117 + $0x788] sm:$0xff]
        %v380 = vld [vmem:[%s117 + $0x790] sm:$0xff]
        %v381 = vld [vmem:[%s117 + $0x798] sm:$0xff]
        %v382 = vld [vmem:[%s117 + $0x7a0] sm:$0xff]
        %v383 = vld [vmem:[%s117 + $0x7a8] sm:$0xff]
        %v384 = vld [vmem:[%s117 + $0x7b0] sm:$0xff]
        %v385 = vld [vmem:[%s117 + $0x7b8] sm:$0xff]
        %v386 = vld [vmem:[%s117 + $0x7c0] sm:$0xff]
        %v387 = vld [vmem:[%s117 + $0x7c8] sm:$0xff]
        %v388 = vld [vmem:[%s117 + $0x7d0] sm:$0xff]
        %v389 = vld [vmem:[%s117 + $0x7d8] sm:$0xff]
        %v390 = vld [vmem:[%s117 + $0x7e0] sm:$0xff]
        %v391 = vld [vmem:[%s117 + $0x7e8] sm:$0xff]
        %v392 = vld [vmem:[%s117 + $0x7f0] sm:$0xff]
        %v393 = vld [vmem:[%s117 + $0x7f8] sm:$0xff]
        %v394 = vld [vmem:[%s117 + $0x800] sm:$0xff]
        %v395 = vld [vmem:[%s117 + $0x808] sm:$0xff]
        %v396 = vld [vmem:[%s117 + $0x810] sm:$0xff]
        %v397 = vld [vmem:[%s117 + $0x818] sm:$0xff]
        %v398 = vld [vmem:[%s117 + $0x820] sm:$0xff]
        %v399 = vld [vmem:[%s117 + $0x828] sm:$0xff]
        %v400 = vld [vmem:[%s117 + $0x830] sm:$0xff]
        %v401 = vld [vmem:[%s117 + $0x838] sm:$0xff]
        %v402 = vld [vmem:[%s117 + $0x840] sm:$0xff]
        %v403 = vld [vmem:[%s117 + $0x848] sm:$0xff]
        %v404 = vld [vmem:[%s117 + $0x850] sm:$0xff]
        %v405 = vld [vmem:[%s117 + $0x858] sm:$0xff]
        %v406 = vld [vmem:[%s117 + $0x860] sm:$0xff]
        %v407 = vld [vmem:[%s117 + $0x868] sm:$0xff]
        %v408 = vld [vmem:[%s117 + $0x870] sm:$0xff]
        %v409 = vld [vmem:[%s117 + $0x878] sm:$0xff]
        %v410 = vld [vmem:[%s117 + $0x880] sm:$0xff]
        %v411 = vld [vmem:[%s117 + $0x888] sm:$0xff]
        %v412 = vld [vmem:[%s117 + $0x890] sm:$0xff]
        %v413 = vld [vmem:[%s117 + $0x898] sm:$0xff]
        %v414 = vld [vmem:[%s117 + $0x8a0] sm:$0xff]
        %v415 = vld [vmem:[%s117 + $0x8a8] sm:$0xff]
        %v416 = vld [vmem:[%s117 + $0x8b0] sm:$0xff]
        %v417 = vld [vmem:[%s117 + $0x8b8] sm:$0xff]
        %v418 = vld [vmem:[%s117 + $0x8c0] sm:$0xff]
        %v419 = vld [vmem:[%s117 + $0x8c8] sm:$0xff]
        %v420 = vld [vmem:[%s117 + $0x8d0] sm:$0xff]
        %v421 = vld [vmem:[%s117 + $0x8d8] sm:$0xff]
        %v422 = vld [vmem:[%s117 + $0x8e0] sm:$0xff]
        %v423 = vld [vmem:[%s117 + $0x8e8] sm:$0xff]
        %v424 = vld [vmem:[%s117 + $0x8f0] sm:$0xff]
        %v425 = vld [vmem:[%s117 + $0x8f8] sm:$0xff]
        %v426 = vld [vmem:[%s117 + $0x900] sm:$0xff]
        %v427 = vld [vmem:[%s117 + $0x908] sm:$0xff]
        %v428 = vld [vmem:[%s117 + $0x910] sm:$0xff]
        %v429 = vld [vmem:[%s117 + $0x918] sm:$0xff]
        %v430 = vld [vmem:[%s117 + $0x920] sm:$0xff]
        %v431 = vld [vmem:[%s117 + $0x928] sm:$0xff]
        %v432 = vld [vmem:[%s117 + $0x930] sm:$0xff]
        %v433 = vld [vmem:[%s117 + $0x938] sm:$0xff]
        %v434 = vld [vmem:[%s117 + $0x940] sm:$0xff]
        %v435 = vld [vmem:[%s117 + $0x948] sm:$0xff]
        %v436 = vld [vmem:[%s117 + $0x950] sm:$0xff]
        %v437 = vld [vmem:[%s117 + $0x958] sm:$0xff]
        %v438 = vld [vmem:[%s117 + $0x960] sm:$0xff]
        %v439 = vld [vmem:[%s117 + $0x968] sm:$0xff]
        %v440 = vld [vmem:[%s117 + $0x970] sm:$0xff]
        %v441 = vld [vmem:[%s117 + $0x978] sm:$0xff]
        %v442 = vld [vmem:[%s117 + $0x980] sm:$0xff]
        %v443 = vld [vmem:[%s117 + $0x988] sm:$0xff]
        %v444 = vld [vmem:[%s117 + $0x990] sm:$0xff]
        %v445 = vld [vmem:[%s117 + $0x998] sm:$0xff]
        %v446 = vld [vmem:[%s117 + $0x9a0] sm:$0xff]
        %v447 = vld [vmem:[%s117 + $0x9a8] sm:$0xff]
        %v448 = vld [vmem:[%s117 + $0x9b0] sm:$0xff]
        %v449 = vld [vmem:[%s117 + $0x9b8] sm:$0xff]
        %v450 = vld [vmem:[%s117 + $0x9c0] sm:$0xff]
        %v451 = vld [vmem:[%s117 + $0x9c8] sm:$0xff]
        %v452 = vld [vmem:[%s117 + $0x9d0] sm:$0xff]
        %v453 = vld [vmem:[%s117 + $0x9d8] sm:$0xff]
        %v454 = vld [vmem:[%s117 + $0x9e0] sm:$0xff]
        %v455 = vld [vmem:[%s117 + $0x9e8] sm:$0xff]
        %v456 = vld [vmem:[%s117 + $0x9f0] sm:$0xff]
        %v457 = vld [vmem:[%s117 + $0x9f8] sm:$0xff]
        %v458 = vld [vmem:[%s117 + $0xa00] sm:$0xff]
        %v459 = vld [vmem:[%s117 + $0xa08] sm:$0xff]
        %v460 = vld [vmem:[%s117 + $0xa10] sm:$0xff]
        %v461 = vld [vmem:[%s117 + $0xa18] sm:$0xff]
        %v462 = vld [vmem:[%s117 + $0xa20] sm:$0xff]
        %v463 = vld [vmem:[%s117 + $0xa28] sm:$0xff]
        %v464 = vld [vmem:[%s117 + $0xa30] sm:$0xff]
        %v465 = vld [vmem:[%s117 + $0xa38] sm:$0xff]
        %v466 = vld [vmem:[%s117 + $0xa40] sm:$0xff]
        %v467 = vld [vmem:[%s117 + $0xa48] sm:$0xff]
        %v468 = vld [vmem:[%s117 + $0xa50] sm:$0xff]
        %v469 = vld [vmem:[%s117 + $0xa58] sm:$0xff]
        %v470 = vld [vmem:[%s117 + $0xa60] sm:$0xff]
        %v471 = vld [vmem:[%s117 + $0xa68] sm:$0xff]
        %v472 = vld [vmem:[%s117 + $0xa70] sm:$0xff]
        %v473 = vld [vmem:[%s117 + $0xa78] sm:$0xff]
        %v474 = vld [vmem:[%s117 + $0xa80] sm:$0xff]
        %v475 = vld [vmem:[%s117 + $0xa88] sm:$0xff]
        %v476 = vld [vmem:[%s117 + $0xa90] sm:$0xff]
        %v477 = vld [vmem:[%s117 + $0xa98] sm:$0xff]
        %v478 = vld [vmem:[%s117 + $0xaa0] sm:$0xff]
        %v479 = vld [vmem:[%s117 + $0xaa8] sm:$0xff]
        %v480 = vld [vmem:[%s117 + $0xab0] sm:$0xff]
        %v481 = vld [vmem:[%s117 + $0xab8] sm:$0xff]
        %v482 = vld [vmem:[%s117 + $0xac0] sm:$0xff]
        %v483 = vld [vmem:[%s117 + $0xac8] sm:$0xff]
        %v484 = vld [vmem:[%s117 + $0xad0] sm:$0xff]
        %v485 = vld [vmem:[%s117 + $0xad8] sm:$0xff]
        %v486 = vld [vmem:[%s117 + $0xae0] sm:$0xff]
        %v487 = vld [vmem:[%s117 + $0xae8] sm:$0xff]
        %v488 = vld [vmem:[%s117 + $0xaf0] sm:$0xff]
        %v489 = vld [vmem:[%s117 + $0xaf8] sm:$0xff]
        %v490 = vld [vmem:[%s117 + $0xb00] sm:$0xff]
        %v491 = vld [vmem:[%s117 + $0xb08] sm:$0xff]
        %v492 = vld [vmem:[%s117 + $0xb10] sm:$0xff]
        %v493 = vld [vmem:[%s117 + $0xb18] sm:$0xff]
        %v494 = vld [vmem:[%s117 + $0xb20] sm:$0xff]
        %v495 = vld [vmem:[%s117 + $0xb28] sm:$0xff]
        %v496 = vld [vmem:[%s117 + $0xb30] sm:$0xff]
        %v497 = vld [vmem:[%s117 + $0xb38] sm:$0xff]
        %v498 = vld [vmem:[%s117 + $0xb40] sm:$0xff]
        %v499 = vld [vmem:[%s117 + $0xb48] sm:$0xff]
        %v500 = vld [vmem:[%s117 + $0xb50] sm:$0xff]
        %v501 = vld [vmem:[%s117 + $0xb58] sm:$0xff]
        %v502 = vld [vmem:[%s117 + $0xb60] sm:$0xff]
        %v503 = vld [vmem:[%s117 + $0xb68] sm:$0xff]
        %v504 = vld [vmem:[%s117 + $0xb70] sm:$0xff]
        %v505 = vld [vmem:[%s117 + $0xb78] sm:$0xff]
        %v506 = vld [vmem:[%s117 + $0xb80] sm:$0xff]
        %v507 = vld [vmem:[%s117 + $0xb88] sm:$0xff]
        %v508 = vld [vmem:[%s117 + $0xb90] sm:$0xff]
        %v509 = vld [vmem:[%s117 + $0xb98] sm:$0xff]
        %v510 = vld [vmem:[%s117 + $0xba0] sm:$0xff]
        %v511 = vld [vmem:[%s117 + $0xba8] sm:$0xff]
        %v512 = vld [vmem:[%s117 + $0xbb0] sm:$0xff]
        %v513 = vld [vmem:[%s117 + $0xbb8] sm:$0xff]
        %v514 = vld [vmem:[%s117 + $0xbc0] sm:$0xff]
        %v515 = vld [vmem:[%s117 + $0xbc8] sm:$0xff]
        %v516 = vld [vmem:[%s117 + $0xbd0] sm:$0xff]
        %v517 = vld [vmem:[%s117 + $0xbd8] sm:$0xff]
        %v518 = vld [vmem:[%s117 + $0xbe0] sm:$0xff]
        %v519 = vld [vmem:[%s117 + $0xbe8] sm:$0xff]
        %v520 = vld [vmem:[%s117 + $0xbf0] sm:$0xff]
        %v521 = vld [vmem:[%s117 + $0xbf8] sm:$0xff]
        %v522 = vld [vmem:[%s117 + $0xc00] sm:$0xff]
        %v523 = vld [vmem:[%s117 + $0xc08] sm:$0xff]
        %v524 = vld [vmem:[%s117 + $0xc10] sm:$0xff]
        %v525 = vld [vmem:[%s117 + $0xc18] sm:$0xff]
        %v526 = vld [vmem:[%s117 + $0xc20] sm:$0xff]
        %v527 = vld [vmem:[%s117 + $0xc28] sm:$0xff]
        %v528 = vld [vmem:[%s117 + $0xc30] sm:$0xff]
        %v529 = vld [vmem:[%s117 + $0xc38] sm:$0xff]
        %v530 = vld [vmem:[%s117 + $0xc40] sm:$0xff]
        %v531 = vld [vmem:[%s117 + $0xc48] sm:$0xff]
        %v532 = vld [vmem:[%s117 + $0xc50] sm:$0xff]
        %v533 = vld [vmem:[%s117 + $0xc58] sm:$0xff]
        %v534 = vld [vmem:[%s117 + $0xc60] sm:$0xff]
        %v535 = vld [vmem:[%s117 + $0xc68] sm:$0xff]
        %v536 = vld [vmem:[%s117 + $0xc70] sm:$0xff]
        %v537 = vld [vmem:[%s117 + $0xc78] sm:$0xff]
        %v538 = vld [vmem:[%s117 + $0xc80] sm:$0xff]
        %v539 = vld [vmem:[%s117 + $0xc88] sm:$0xff]
        %v540 = vld [vmem:[%s117 + $0xc90] sm:$0xff]
        %v541 = vld [vmem:[%s117 + $0xc98] sm:$0xff]
        %v542 = vld [vmem:[%s117 + $0xca0] sm:$0xff]
        %v543 = vld [vmem:[%s117 + $0xca8] sm:$0xff]
        %v544 = vld [vmem:[%s117 + $0xcb0] sm:$0xff]
        %v545 = vld [vmem:[%s117 + $0xcb8] sm:$0xff]
        %v546 = vld [vmem:[%s117 + $0xcc0] sm:$0xff]
        %v547 = vld [vmem:[%s117 + $0xcc8] sm:$0xff]
        %v548 = vld [vmem:[%s117 + $0xcd0] sm:$0xff]
        %v549 = vld [vmem:[%s117 + $0xcd8] sm:$0xff]
        %v550 = vld [vmem:[%s117 + $0xce0] sm:$0xff]
        %v551 = vld [vmem:[%s117 + $0xce8] sm:$0xff]
        %v552 = vld [vmem:[%s117 + $0xcf0] sm:$0xff]
        %v553 = vld [vmem:[%s117 + $0xcf8] sm:$0xff]
        %v554 = vld [vmem:[%s117 + $0xd00] sm:$0xff]
        %v555 = vld [vmem:[%s117 + $0xd08] sm:$0xff]
        %v556 = vld [vmem:[%s117 + $0xd10] sm:$0xff]
        %v557 = vld [vmem:[%s117 + $0xd18] sm:$0xff]
        %v558 = vld [vmem:[%s117 + $0xd20] sm:$0xff]
        %v559 = vld [vmem:[%s117 + $0xd28] sm:$0xff]
        %v560 = vld [vmem:[%s117 + $0xd30] sm:$0xff]
        %v561 = vld [vmem:[%s117 + $0xd38] sm:$0xff]
        %v562 = vld [vmem:[%s117 + $0xd40] sm:$0xff]
        %v563 = vld [vmem:[%s117 + $0xd48] sm:$0xff]
        %v564 = vld [vmem:[%s117 + $0xd50] sm:$0xff]
        %v565 = vld [vmem:[%s117 + $0xd58] sm:$0xff]
        %v566 = vld [vmem:[%s117 + $0xd60] sm:$0xff]
        %v567 = vld [vmem:[%s117 + $0xd68] sm:$0xff]
        %v568 = vld [vmem:[%s117 + $0xd70] sm:$0xff]
        %v569 = vld [vmem:[%s117 + $0xd78] sm:$0xff]
        %v570 = vld [vmem:[%s117 + $0xd80] sm:$0xff]
        %v571 = vld [vmem:[%s117 + $0xd88] sm:$0xff]
        %v572 = vld [vmem:[%s117 + $0xd90] sm:$0xff]
        %v573 = vld [vmem:[%s117 + $0xd98] sm:$0xff]
        %v574 = vld [vmem:[%s117 + $0xda0] sm:$0xff]
        %v575 = vld [vmem:[%s117 + $0xda8] sm:$0xff]
        %v576 = vld [vmem:[%s117 + $0xdb0] sm:$0xff]
        %v577 = vld [vmem:[%s117 + $0xdb8] sm:$0xff]
        %v578 = vld [vmem:[%s117 + $0xdc0] sm:$0xff]
        %v579 = vld [vmem:[%s117 + $0xdc8] sm:$0xff]
        %v580 = vld [vmem:[%s117 + $0xdd0] sm:$0xff]
        %v581 = vld [vmem:[%s117 + $0xdd8] sm:$0xff]
        %v582 = vld [vmem:[%s117 + $0xde0] sm:$0xff]
        %v583 = vld [vmem:[%s117 + $0xde8] sm:$0xff]
        %v584 = vld [vmem:[%s117 + $0xdf0] sm:$0xff]
        %v585 = vld [vmem:[%s117 + $0xdf8] sm:$0xff]
        %v586 = vld [vmem:[%s117 + $0xe00] sm:$0xff]
        %v587 = vld [vmem:[%s117 + $0xe08] sm:$0xff]
        %v588 = vld [vmem:[%s117 + $0xe10] sm:$0xff]
        %v589 = vld [vmem:[%s117 + $0xe18] sm:$0xff]
        %v590 = vld [vmem:[%s117 + $0xe20] sm:$0xff]
        %v591 = vld [vmem:[%s117 + $0xe28] sm:$0xff]
        %v592 = vld [vmem:[%s117 + $0xe30] sm:$0xff]
        %v593 = vld [vmem:[%s117 + $0xe38] sm:$0xff]
        %v594 = vld [vmem:[%s117 + $0xe40] sm:$0xff]
        %v595 = vld [vmem:[%s117 + $0xe48] sm:$0xff]
        %v596 = vld [vmem:[%s117 + $0xe50] sm:$0xff]
        %v597 = vld [vmem:[%s117 + $0xe58] sm:$0xff]
        %v598 = vld [vmem:[%s117 + $0xe60] sm:$0xff]
        %v599 = vld [vmem:[%s117 + $0xe68] sm:$0xff]
        %v600 = vld [vmem:[%s117 + $0xe70] sm:$0xff]
        %v601 = vld [vmem:[%s117 + $0xe78] sm:$0xff]
        %v602 = vld [vmem:[%s117 + $0xe80] sm:$0xff]
        %v603 = vld [vmem:[%s117 + $0xe88] sm:$0xff]
        %v604 = vld [vmem:[%s117 + $0xe90] sm:$0xff]
        %v605 = vld [vmem:[%s117 + $0xe98] sm:$0xff]
        %v606 = vld [vmem:[%s117 + $0xea0] sm:$0xff]
        %v607 = vld [vmem:[%s117 + $0xea8] sm:$0xff]
        %v608 = vld [vmem:[%s117 + $0xeb0] sm:$0xff]
        %v609 = vld [vmem:[%s117 + $0xeb8] sm:$0xff]
        %v610 = vld [vmem:[%s117 + $0xec0] sm:$0xff]
        %v611 = vld [vmem:[%s117 + $0xec8] sm:$0xff]
        %v612 = vld [vmem:[%s117 + $0xed0] sm:$0xff]
        %v613 = vld [vmem:[%s117 + $0xed8] sm:$0xff]
        %v614 = vld [vmem:[%s117 + $0xee0] sm:$0xff]
        %v615 = vld [vmem:[%s117 + $0xee8] sm:$0xff]
        %v616 = vld [vmem:[%s117 + $0xef0] sm:$0xff]
        %v617 = vld [vmem:[%s117 + $0xef8] sm:$0xff]
        %v618 = vld [vmem:[%s117 + $0xf00] sm:$0xff]
        %v619 = vld [vmem:[%s117 + $0xf08] sm:$0xff]
        %v620 = vld [vmem:[%s117 + $0xf10] sm:$0xff]
        %v621 = vld [vmem:[%s117 + $0xf18] sm:$0xff]
        %v622 = vld [vmem:[%s117 + $0xf20] sm:$0xff]
        %v623 = vld [vmem:[%s117 + $0xf28] sm:$0xff]
        %v624 = vld [vmem:[%s117 + $0xf30] sm:$0xff]
        %v625 = vld [vmem:[%s117 + $0xf38] sm:$0xff]
        %v626 = vld [vmem:[%s117 + $0xf40] sm:$0xff]
        %v627 = vld [vmem:[%s117 + $0xf48] sm:$0xff]
        %v628 = vld [vmem:[%s117 + $0xf50] sm:$0xff]
        %v629 = vld [vmem:[%s117 + $0xf58] sm:$0xff]
        %v630 = vld [vmem:[%s117 + $0xf60] sm:$0xff]
        %v631 = vld [vmem:[%s117 + $0xf68] sm:$0xff]
        %v632 = vld [vmem:[%s117 + $0xf70] sm:$0xff]
        %v633 = vld [vmem:[%s117 + $0xf78] sm:$0xff]
        %v634 = vld [vmem:[%s117 + $0xf80] sm:$0xff]
        %v635 = vld [vmem:[%s117 + $0xf88] sm:$0xff]
        %v636 = vld [vmem:[%s117 + $0xf90] sm:$0xff]
        %v637 = vld [vmem:[%s117 + $0xf98] sm:$0xff]
        %v638 = vld [vmem:[%s117 + $0xfa0] sm:$0xff]
        %v639 = vld [vmem:[%s117 + $0xfa8] sm:$0xff]
        %v640 = vld [vmem:[%s117 + $0xfb0] sm:$0xff]
        %v641 = vld [vmem:[%s117 + $0xfb8] sm:$0xff]
        %v642 = vld [vmem:[%s117 + $0xfc0] sm:$0xff]
        %v643 = vld [vmem:[%s117 + $0xfc8] sm:$0xff]
        %v644 = vld [vmem:[%s117 + $0xfd0] sm:$0xff]
        %v645 = vld [vmem:[%s117 + $0xfd8] sm:$0xff]
        %v646 = vld [vmem:[%s117 + $0xfe0] sm:$0xff]
        %v647 = vld [vmem:[%s117 + $0xfe8] sm:$0xff]
        %v648 = vld [vmem:[%s117 + $0xff0] sm:$0xff]
        %v649 = vld [vmem:[%s117 + $0xff8] sm:$0xff]
        %v650 = vsub.f32 0.0, %v138
        %v651 = vsub.f32 0.0, %v139
        %v652 = vsub.f32 0.0, %v140
        %v653 = vsub.f32 0.0, %v141
        %v654 = vsub.f32 0.0, %v142
        %v655 = vsub.f32 0.0, %v143
        %v656 = vsub.f32 0.0, %v144
        %v657 = vsub.f32 0.0, %v145
        %v658 = vsub.f32 0.0, %v146
        %v659 = vsub.f32 0.0, %v147
        %v660 = vsub.f32 0.0, %v148
        %v661 = vsub.f32 0.0, %v149
        %v662 = vsub.f32 0.0, %v150
        %v663 = vsub.f32 0.0, %v151
        %v664 = vsub.f32 0.0, %v152
        %v665 = vsub.f32 0.0, %v153
        %v666 = vsub.f32 0.0, %v154
        %v667 = vsub.f32 0.0, %v155
        %v668 = vsub.f32 0.0, %v156
        %v669 = vsub.f32 0.0, %v157
        %v670 = vsub.f32 0.0, %v158
        %v671 = vsub.f32 0.0, %v159
        %v672 = vsub.f32 0.0, %v160
        %v673 = vsub.f32 0.0, %v161
        %v674 = vsub.f32 0.0, %v162
        %v675 = vsub.f32 0.0, %v163
        %v676 = vsub.f32 0.0, %v164
        %v677 = vsub.f32 0.0, %v165
        %v678 = vsub.f32 0.0, %v166
        %v679 = vsub.f32 0.0, %v167
        %v680 = vsub.f32 0.0, %v168
        %v681 = vsub.f32 0.0, %v169
        %v682 = vsub.f32 0.0, %v170
        %v683 = vsub.f32 0.0, %v171
        %v684 = vsub.f32 0.0, %v172
        %v685 = vsub.f32 0.0, %v173
        %v686 = vsub.f32 0.0, %v174
        %v687 = vsub.f32 0.0, %v175
        %v688 = vsub.f32 0.0, %v176
        %v689 = vsub.f32 0.0, %v177
        %v690 = vsub.f32 0.0, %v178
        %v691 = vsub.f32 0.0, %v179
        %v692 = vsub.f32 0.0, %v180
        %v693 = vsub.f32 0.0, %v181
        %v694 = vsub.f32 0.0, %v182
        %v695 = vsub.f32 0.0, %v183
        %v696 = vsub.f32 0.0, %v184
        %v697 = vsub.f32 0.0, %v185
        %v698 = vsub.f32 0.0, %v186
        %v699 = vsub.f32 0.0, %v187
        %v700 = vsub.f32 0.0, %v188
        %v701 = vsub.f32 0.0, %v189
        %v702 = vsub.f32 0.0, %v190
        %v703 = vsub.f32 0.0, %v191
        %v704 = vsub.f32 0.0, %v192
        %v705 = vsub.f32 0.0, %v193
        %v706 = vsub.f32 0.0, %v194
        %v707 = vsub.f32 0.0, %v195
        %v708 = vsub.f32 0.0, %v196
        %v709 = vsub.f32 0.0, %v197
        %v710 = vsub.f32 0.0, %v198
        %v711 = vsub.f32 0.0, %v199
        %v712 = vsub.f32 0.0, %v200
        %v713 = vsub.f32 0.0, %v201
        %v714 = vsub.f32 0.0, %v202
        %v715 = vsub.f32 0.0, %v203
        %v716 = vsub.f32 0.0, %v204
        %v717 = vsub.f32 0.0, %v205
        %v718 = vsub.f32 0.0, %v206
        %v719 = vsub.f32 0.0, %v207
        %v720 = vsub.f32 0.0, %v208
        %v721 = vsub.f32 0.0, %v209
        %v722 = vsub.f32 0.0, %v210
        %v723 = vsub.f32 0.0, %v211
        %v724 = vsub.f32 0.0, %v212
        %v725 = vsub.f32 0.0, %v213
        %v726 = vsub.f32 0.0, %v214
        %v727 = vsub.f32 0.0, %v215
        %v728 = vsub.f32 0.0, %v216
        %v729 = vsub.f32 0.0, %v217
        %v730 = vsub.f32 0.0, %v218
        %v731 = vsub.f32 0.0, %v219
        %v732 = vsub.f32 0.0, %v220
        %v733 = vsub.f32 0.0, %v221
        %v734 = vsub.f32 0.0, %v222
        %v735 = vsub.f32 0.0, %v223
        %v736 = vsub.f32 0.0, %v224
        %v737 = vsub.f32 0.0, %v225
        %v738 = vsub.f32 0.0, %v226
        %v739 = vsub.f32 0.0, %v227
        %v740 = vsub.f32 0.0, %v228
        %v741 = vsub.f32 0.0, %v229
        %v742 = vsub.f32 0.0, %v230
        %v743 = vsub.f32 0.0, %v231
        %v744 = vsub.f32 0.0, %v232
        %v745 = vsub.f32 0.0, %v233
        %v746 = vsub.f32 0.0, %v234
        %v747 = vsub.f32 0.0, %v235
        %v748 = vsub.f32 0.0, %v236
        %v749 = vsub.f32 0.0, %v237
        %v750 = vsub.f32 0.0, %v238
        %v751 = vsub.f32 0.0, %v239
        %v752 = vsub.f32 0.0, %v240
        %v753 = vsub.f32 0.0, %v241
        %v754 = vsub.f32 0.0, %v242
        %v755 = vsub.f32 0.0, %v243
        %v756 = vsub.f32 0.0, %v244
        %v757 = vsub.f32 0.0, %v245
        %v758 = vsub.f32 0.0, %v246
        %v759 = vsub.f32 0.0, %v247
        %v760 = vsub.f32 0.0, %v248
        %v761 = vsub.f32 0.0, %v249
        %v762 = vsub.f32 0.0, %v250
        %v763 = vsub.f32 0.0, %v251
        %v764 = vsub.f32 0.0, %v252
        %v765 = vsub.f32 0.0, %v253
        %v766 = vsub.f32 0.0, %v254
        %v767 = vsub.f32 0.0, %v255
        %v768 = vsub.f32 0.0, %v256
        %v769 = vsub.f32 0.0, %v257
        %v770 = vsub.f32 0.0, %v258
        %v771 = vsub.f32 0.0, %v259
        %v772 = vsub.f32 0.0, %v260
        %v773 = vsub.f32 0.0, %v261
        %v774 = vsub.f32 0.0, %v262
        %v775 = vsub.f32 0.0, %v263
        %v776 = vsub.f32 0.0, %v264
        %v777 = vsub.f32 0.0, %v265
        %v778 = vsub.f32 0.0, %v266
        %v779 = vsub.f32 0.0, %v267
        %v780 = vsub.f32 0.0, %v268
        %v781 = vsub.f32 0.0, %v269
        %v782 = vsub.f32 0.0, %v270
        %v783 = vsub.f32 0.0, %v271
        %v784 = vsub.f32 0.0, %v272
        %v785 = vsub.f32 0.0, %v273
        %v786 = vsub.f32 0.0, %v274
        %v787 = vsub.f32 0.0, %v275
        %v788 = vsub.f32 0.0, %v276
        %v789 = vsub.f32 0.0, %v277
        %v790 = vsub.f32 0.0, %v278
        %v791 = vsub.f32 0.0, %v279
        %v792 = vsub.f32 0.0, %v280
        %v793 = vsub.f32 0.0, %v281
        %v794 = vsub.f32 0.0, %v282
        %v795 = vsub.f32 0.0, %v283
        %v796 = vsub.f32 0.0, %v284
        %v797 = vsub.f32 0.0, %v285
        %v798 = vsub.f32 0.0, %v286
        %v799 = vsub.f32 0.0, %v287
        %v800 = vsub.f32 0.0, %v288
        %v801 = vsub.f32 0.0, %v289
        %v802 = vsub.f32 0.0, %v290
        %v803 = vsub.f32 0.0, %v291
        %v804 = vsub.f32 0.0, %v292
        %v805 = vsub.f32 0.0, %v293
        %v806 = vsub.f32 0.0, %v294
        %v807 = vsub.f32 0.0, %v295
        %v808 = vsub.f32 0.0, %v296
        %v809 = vsub.f32 0.0, %v297
        %v810 = vsub.f32 0.0, %v298
        %v811 = vsub.f32 0.0, %v299
        %v812 = vsub.f32 0.0, %v300
        %v813 = vsub.f32 0.0, %v301
        %v814 = vsub.f32 0.0, %v302
        %v815 = vsub.f32 0.0, %v303
        %v816 = vsub.f32 0.0, %v304
        %v817 = vsub.f32 0.0, %v305
        %v818 = vsub.f32 0.0, %v306
        %v819 = vsub.f32 0.0, %v307
        %v820 = vsub.f32 0.0, %v308
        %v821 = vsub.f32 0.0, %v309
        %v822 = vsub.f32 0.0, %v310
        %v823 = vsub.f32 0.0, %v311
        %v824 = vsub.f32 0.0, %v312
        %v825 = vsub.f32 0.0, %v313
        %v826 = vsub.f32 0.0, %v314
        %v827 = vsub.f32 0.0, %v315
        %v828 = vsub.f32 0.0, %v316
        %v829 = vsub.f32 0.0, %v317
        %v830 = vsub.f32 0.0, %v318
        %v831 = vsub.f32 0.0, %v319
        %v832 = vsub.f32 0.0, %v320
        %v833 = vsub.f32 0.0, %v321
        %v834 = vsub.f32 0.0, %v322
        %v835 = vsub.f32 0.0, %v323
        %v836 = vsub.f32 0.0, %v324
        %v837 = vsub.f32 0.0, %v325
        %v838 = vsub.f32 0.0, %v326
        %v839 = vsub.f32 0.0, %v327
        %v840 = vsub.f32 0.0, %v328
        %v841 = vsub.f32 0.0, %v329
        %v842 = vsub.f32 0.0, %v330
        %v843 = vsub.f32 0.0, %v331
        %v844 = vsub.f32 0.0, %v332
        %v845 = vsub.f32 0.0, %v333
        %v846 = vsub.f32 0.0, %v334
        %v847 = vsub.f32 0.0, %v335
        %v848 = vsub.f32 0.0, %v336
        %v849 = vsub.f32 0.0, %v337
        %v850 = vsub.f32 0.0, %v338
        %v851 = vsub.f32 0.0, %v339
        %v852 = vsub.f32 0.0, %v340
        %v853 = vsub.f32 0.0, %v341
        %v854 = vsub.f32 0.0, %v342
        %v855 = vsub.f32 0.0, %v343
        %v856 = vsub.f32 0.0, %v344
        %v857 = vsub.f32 0.0, %v345
        %v858 = vsub.f32 0.0, %v346
        %v859 = vsub.f32 0.0, %v347
        %v860 = vsub.f32 0.0, %v348
        %v861 = vsub.f32 0.0, %v349
        %v862 = vsub.f32 0.0, %v350
        %v863 = vsub.f32 0.0, %v351
        %v864 = vsub.f32 0.0, %v352
        %v865 = vsub.f32 0.0, %v353
        %v866 = vsub.f32 0.0, %v354
        %v867 = vsub.f32 0.0, %v355
        %v868 = vsub.f32 0.0, %v356
        %v869 = vsub.f32 0.0, %v357
        %v870 = vsub.f32 0.0, %v358
        %v871 = vsub.f32 0.0, %v359
        %v872 = vsub.f32 0.0, %v360
        %v873 = vsub.f32 0.0, %v361
        %v874 = vsub.f32 0.0, %v362
        %v875 = vsub.f32 0.0, %v363
        %v876 = vsub.f32 0.0, %v364
        %v877 = vsub.f32 0.0, %v365
        %v878 = vsub.f32 0.0, %v366
        %v879 = vsub.f32 0.0, %v367
        %v880 = vsub.f32 0.0, %v368
        %v881 = vsub.f32 0.0, %v369
        %v882 = vsub.f32 0.0, %v370
        %v883 = vsub.f32 0.0, %v371
        %v884 = vsub.f32 0.0, %v372
        %v885 = vsub.f32 0.0, %v373
        %v886 = vsub.f32 0.0, %v374
        %v887 = vsub.f32 0.0, %v375
        %v888 = vsub.f32 0.0, %v376
        %v889 = vsub.f32 0.0, %v377
        %v890 = vsub.f32 0.0, %v378
        %v891 = vsub.f32 0.0, %v379
        %v892 = vsub.f32 0.0, %v380
        %v893 = vsub.f32 0.0, %v381
        %v894 = vsub.f32 0.0, %v382
        %v895 = vsub.f32 0.0, %v383
        %v896 = vsub.f32 0.0, %v384
        %v897 = vsub.f32 0.0, %v385
        %v898 = vsub.f32 0.0, %v386
        %v899 = vsub.f32 0.0, %v387
        %v900 = vsub.f32 0.0, %v388
        %v901 = vsub.f32 0.0, %v389
        %v902 = vsub.f32 0.0, %v390
        %v903 = vsub.f32 0.0, %v391
        %v904 = vsub.f32 0.0, %v392
        %v905 = vsub.f32 0.0, %v393
        %v906 = vsub.f32 0.0, %v394
        %v907 = vsub.f32 0.0, %v395
        %v908 = vsub.f32 0.0, %v396
        %v909 = vsub.f32 0.0, %v397
        %v910 = vsub.f32 0.0, %v398
        %v911 = vsub.f32 0.0, %v399
        %v912 = vsub.f32 0.0, %v400
        %v913 = vsub.f32 0.0, %v401
        %v914 = vsub.f32 0.0, %v402
        %v915 = vsub.f32 0.0, %v403
        %v916 = vsub.f32 0.0, %v404
        %v917 = vsub.f32 0.0, %v405
        %v918 = vsub.f32 0.0, %v406
        %v919 = vsub.f32 0.0, %v407
        %v920 = vsub.f32 0.0, %v408
        %v921 = vsub.f32 0.0, %v409
        %v922 = vsub.f32 0.0, %v410
        %v923 = vsub.f32 0.0, %v411
        %v924 = vsub.f32 0.0, %v412
        %v925 = vsub.f32 0.0, %v413
        %v926 = vsub.f32 0.0, %v414
        %v927 = vsub.f32 0.0, %v415
        %v928 = vsub.f32 0.0, %v416
        %v929 = vsub.f32 0.0, %v417
        %v930 = vsub.f32 0.0, %v418
        %v931 = vsub.f32 0.0, %v419
        %v932 = vsub.f32 0.0, %v420
        %v933 = vsub.f32 0.0, %v421
        %v934 = vsub.f32 0.0, %v422
        %v935 = vsub.f32 0.0, %v423
        %v936 = vsub.f32 0.0, %v424
        %v937 = vsub.f32 0.0, %v425
        %v938 = vsub.f32 0.0, %v426
        %v939 = vsub.f32 0.0, %v427
        %v940 = vsub.f32 0.0, %v428
        %v941 = vsub.f32 0.0, %v429
        %v942 = vsub.f32 0.0, %v430
        %v943 = vsub.f32 0.0, %v431
        %v944 = vsub.f32 0.0, %v432
        %v945 = vsub.f32 0.0, %v433
        %v946 = vsub.f32 0.0, %v434
        %v947 = vsub.f32 0.0, %v435
        %v948 = vsub.f32 0.0, %v436
        %v949 = vsub.f32 0.0, %v437
        %v950 = vsub.f32 0.0, %v438
        %v951 = vsub.f32 0.0, %v439
        %v952 = vsub.f32 0.0, %v440
        %v953 = vsub.f32 0.0, %v441
        %v954 = vsub.f32 0.0, %v442
        %v955 = vsub.f32 0.0, %v443
        %v956 = vsub.f32 0.0, %v444
        %v957 = vsub.f32 0.0, %v445
        %v958 = vsub.f32 0.0, %v446
        %v959 = vsub.f32 0.0, %v447
        %v960 = vsub.f32 0.0, %v448
        %v961 = vsub.f32 0.0, %v449
        %v962 = vsub.f32 0.0, %v450
        %v963 = vsub.f32 0.0, %v451
        %v964 = vsub.f32 0.0, %v452
        %v965 = vsub.f32 0.0, %v453
        %v966 = vsub.f32 0.0, %v454
        %v967 = vsub.f32 0.0, %v455
        %v968 = vsub.f32 0.0, %v456
        %v969 = vsub.f32 0.0, %v457
        %v970 = vsub.f32 0.0, %v458
        %v971 = vsub.f32 0.0, %v459
        %v972 = vsub.f32 0.0, %v460
        %v973 = vsub.f32 0.0, %v461
        %v974 = vsub.f32 0.0, %v462
        %v975 = vsub.f32 0.0, %v463
        %v976 = vsub.f32 0.0, %v464
        %v977 = vsub.f32 0.0, %v465
        %v978 = vsub.f32 0.0, %v466
        %v979 = vsub.f32 0.0, %v467
        %v980 = vsub.f32 0.0, %v468
        %v981 = vsub.f32 0.0, %v469
        %v982 = vsub.f32 0.0, %v470
        %v983 = vsub.f32 0.0, %v471
        %v984 = vsub.f32 0.0, %v472
        %v985 = vsub.f32 0.0, %v473
        %v986 = vsub.f32 0.0, %v474
        %v987 = vsub.f32 0.0, %v475
        %v988 = vsub.f32 0.0, %v476
        %v989 = vsub.f32 0.0, %v477
        %v990 = vsub.f32 0.0, %v478
        %v991 = vsub.f32 0.0, %v479
        %v992 = vsub.f32 0.0, %v480
        %v993 = vsub.f32 0.0, %v481
        %v994 = vsub.f32 0.0, %v482
        %v995 = vsub.f32 0.0, %v483
        %v996 = vsub.f32 0.0, %v484
        %v997 = vsub.f32 0.0, %v485
        %v998 = vsub.f32 0.0, %v486
        %v999 = vsub.f32 0.0, %v487
        %v1000 = vsub.f32 0.0, %v488
        %v1001 = vsub.f32 0.0, %v489
        %v1002 = vsub.f32 0.0, %v490
        %v1003 = vsub.f32 0.0, %v491
        %v1004 = vsub.f32 0.0, %v492
        %v1005 = vsub.f32 0.0, %v493
        %v1006 = vsub.f32 0.0, %v494
        %v1007 = vsub.f32 0.0, %v495
        %v1008 = vsub.f32 0.0, %v496
        %v1009 = vsub.f32 0.0, %v497
        %v1010 = vsub.f32 0.0, %v498
        %v1011 = vsub.f32 0.0, %v499
        %v1012 = vsub.f32 0.0, %v500
        %v1013 = vsub.f32 0.0, %v501
        %v1014 = vsub.f32 0.0, %v502
        %v1015 = vsub.f32 0.0, %v503
        %v1016 = vsub.f32 0.0, %v504
        %v1017 = vsub.f32 0.0, %v505
        %v1018 = vsub.f32 0.0, %v506
        %v1019 = vsub.f32 0.0, %v507
        %v1020 = vsub.f32 0.0, %v508
        %v1021 = vsub.f32 0.0, %v509
        %v1022 = vsub.f32 0.0, %v510
        %v1023 = vsub.f32 0.0, %v511
        %v1024 = vsub.f32 0.0, %v512
        %v1025 = vsub.f32 0.0, %v513
        %v1026 = vsub.f32 0.0, %v514
        %v1027 = vsub.f32 0.0, %v515
        %v1028 = vsub.f32 0.0, %v516
        %v1029 = vsub.f32 0.0, %v517
        %v1030 = vsub.f32 0.0, %v518
        %v1031 = vsub.f32 0.0, %v519
        %v1032 = vsub.f32 0.0, %v520
        %v1033 = vsub.f32 0.0, %v521
        %v1034 = vsub.f32 0.0, %v522
        %v1035 = vsub.f32 0.0, %v523
        %v1036 = vsub.f32 0.0, %v524
        %v1037 = vsub.f32 0.0, %v525
        %v1038 = vsub.f32 0.0, %v526
        %v1039 = vsub.f32 0.0, %v527
        %v1040 = vsub.f32 0.0, %v528
        %v1041 = vsub.f32 0.0, %v529
        %v1042 = vsub.f32 0.0, %v530
        %v1043 = vsub.f32 0.0, %v531
        %v1044 = vsub.f32 0.0, %v532
        %v1045 = vsub.f32 0.0, %v533
        %v1046 = vsub.f32 0.0, %v534
        %v1047 = vsub.f32 0.0, %v535
        %v1048 = vsub.f32 0.0, %v536
        %v1049 = vsub.f32 0.0, %v537
        %v1050 = vsub.f32 0.0, %v538
        %v1051 = vsub.f32 0.0, %v539
        %v1052 = vsub.f32 0.0, %v540
        %v1053 = vsub.f32 0.0, %v541
        %v1054 = vsub.f32 0.0, %v542
        %v1055 = vsub.f32 0.0, %v543
        %v1056 = vsub.f32 0.0, %v544
        %v1057 = vsub.f32 0.0, %v545
        %v1058 = vsub.f32 0.0, %v546
        %v1059 = vsub.f32 0.0, %v547
        %v1060 = vsub.f32 0.0, %v548
        %v1061 = vsub.f32 0.0, %v549
        %v1062 = vsub.f32 0.0, %v550
        %v1063 = vsub.f32 0.0, %v551
        %v1064 = vsub.f32 0.0, %v552
        %v1065 = vsub.f32 0.0, %v553
        %v1066 = vsub.f32 0.0, %v554
        %v1067 = vsub.f32 0.0, %v555
        %v1068 = vsub.f32 0.0, %v556
        %v1069 = vsub.f32 0.0, %v557
        %v1070 = vsub.f32 0.0, %v558
        %v1071 = vsub.f32 0.0, %v559
        %v1072 = vsub.f32 0.0, %v560
        %v1073 = vsub.f32 0.0, %v561
        %v1074 = vsub.f32 0.0, %v562
        %v1075 = vsub.f32 0.0, %v563
        %v1076 = vsub.f32 0.0, %v564
        %v1077 = vsub.f32 0.0, %v565
        %v1078 = vsub.f32 0.0, %v566
        %v1079 = vsub.f32 0.0, %v567
        %v1080 = vsub.f32 0.0, %v568
        %v1081 = vsub.f32 0.0, %v569
        %v1082 = vsub.f32 0.0, %v570
        %v1083 = vsub.f32 0.0, %v571
        %v1084 = vsub.f32 0.0, %v572
        %v1085 = vsub.f32 0.0, %v573
        %v1086 = vsub.f32 0.0, %v574
        %v1087 = vsub.f32 0.0, %v575
        %v1088 = vsub.f32 0.0, %v576
        %v1089 = vsub.f32 0.0, %v577
        %v1090 = vsub.f32 0.0, %v578
        %v1091 = vsub.f32 0.0, %v579
        %v1092 = vsub.f32 0.0, %v580
        %v1093 = vsub.f32 0.0, %v581
        %v1094 = vsub.f32 0.0, %v582
        %v1095 = vsub.f32 0.0, %v583
        %v1096 = vsub.f32 0.0, %v584
        %v1097 = vsub.f32 0.0, %v585
        %v1098 = vsub.f32 0.0, %v586
        %v1099 = vsub.f32 0.0, %v587
        %v1100 = vsub.f32 0.0, %v588
        %v1101 = vsub.f32 0.0, %v589
        %v1102 = vsub.f32 0.0, %v590
        %v1103 = vsub.f32 0.0, %v591
        %v1104 = vsub.f32 0.0, %v592
        %v1105 = vsub.f32 0.0, %v593
        %v1106 = vsub.f32 0.0, %v594
        %v1107 = vsub.f32 0.0, %v595
        %v1108 = vsub.f32 0.0, %v596
        %v1109 = vsub.f32 0.0, %v597
        %v1110 = vsub.f32 0.0, %v598
        %v1111 = vsub.f32 0.0, %v599
        %v1112 = vsub.f32 0.0, %v600
        %v1113 = vsub.f32 0.0, %v601
        %v1114 = vsub.f32 0.0, %v602
        %v1115 = vsub.f32 0.0, %v603
        %v1116 = vsub.f32 0.0, %v604
        %v1117 = vsub.f32 0.0, %v605
        %v1118 = vsub.f32 0.0, %v606
        %v1119 = vsub.f32 0.0, %v607
        %v1120 = vsub.f32 0.0, %v608
        %v1121 = vsub.f32 0.0, %v609
        %v1122 = vsub.f32 0.0, %v610
        %v1123 = vsub.f32 0.0, %v611
        %v1124 = vsub.f32 0.0, %v612
        %v1125 = vsub.f32 0.0, %v613
        %v1126 = vsub.f32 0.0, %v614
        %v1127 = vsub.f32 0.0, %v615
        %v1128 = vsub.f32 0.0, %v616
        %v1129 = vsub.f32 0.0, %v617
        %v1130 = vsub.f32 0.0, %v618
        %v1131 = vsub.f32 0.0, %v619
        %v1132 = vsub.f32 0.0, %v620
        %v1133 = vsub.f32 0.0, %v621
        %v1134 = vsub.f32 0.0, %v622
        %v1135 = vsub.f32 0.0, %v623
        %v1136 = vsub.f32 0.0, %v624
        %v1137 = vsub.f32 0.0, %v625
        %v1138 = vsub.f32 0.0, %v626
        %v1139 = vsub.f32 0.0, %v627
        %v1140 = vsub.f32 0.0, %v628
        %v1141 = vsub.f32 0.0, %v629
        %v1142 = vsub.f32 0.0, %v630
        %v1143 = vsub.f32 0.0, %v631
        %v1144 = vsub.f32 0.0, %v632
        %v1145 = vsub.f32 0.0, %v633
        %v1146 = vsub.f32 0.0, %v634
        %v1147 = vsub.f32 0.0, %v635
        %v1148 = vsub.f32 0.0, %v636
        %v1149 = vsub.f32 0.0, %v637
        %v1150 = vsub.f32 0.0, %v638
        %v1151 = vsub.f32 0.0, %v639
        %v1152 = vsub.f32 0.0, %v640
        %v1153 = vsub.f32 0.0, %v641
        %v1154 = vsub.f32 0.0, %v642
        %v1155 = vsub.f32 0.0, %v643
        %v1156 = vsub.f32 0.0, %v644
        %v1157 = vsub.f32 0.0, %v645
        %v1158 = vsub.f32 0.0, %v646
        %v1159 = vsub.f32 0.0, %v647
        %v1160 = vsub.f32 0.0, %v648
        %v1161 = vsub.f32 0.0, %v649
        %v1162 = vmul.f32 %v650, 1.442695
        %v1163 = vpow.pop %v1162
        %v1164 = vmul.f32 %v651, 1.442695
        %v1165 = vpow.pop %v1164
        %v1166 = vmul.f32 %v652, 1.442695
        %v1167 = vpow.pop %v1166
        %v1168 = vmul.f32 %v653, 1.442695
        %v1169 = vpow.pop %v1168
        %v1170 = vmul.f32 %v654, 1.442695
        %v1171 = vpow.pop %v1170
        %v1172 = vmul.f32 %v655, 1.442695
        %v1173 = vpow.pop %v1172
        %v1174 = vmul.f32 %v656, 1.442695
        %v1175 = vpow.pop %v1174
        %v1176 = vmul.f32 %v657, 1.442695
        %v1177 = vpow.pop %v1176
        %v1178 = vmul.f32 %v658, 1.442695
        %v1179 = vpow.pop %v1178
        %v1180 = vmul.f32 %v659, 1.442695
        %v1181 = vpow.pop %v1180
        %v1182 = vmul.f32 %v660, 1.442695
        %v1183 = vpow.pop %v1182
        %v1184 = vmul.f32 %v661, 1.442695
        %v1185 = vpow.pop %v1184
        %v1186 = vmul.f32 %v662, 1.442695
        %v1187 = vpow.pop %v1186
        %v1188 = vmul.f32 %v663, 1.442695
        %v1189 = vpow.pop %v1188
        %v1190 = vmul.f32 %v664, 1.442695
        %v1191 = vpow.pop %v1190
        %v1192 = vmul.f32 %v665, 1.442695
        %v1193 = vpow.pop %v1192
        %v1194 = vmul.f32 %v666, 1.442695
        %v1195 = vpow.pop %v1194
        %v1196 = vmul.f32 %v667, 1.442695
        %v1197 = vpow.pop %v1196
        %v1198 = vmul.f32 %v668, 1.442695
        %v1199 = vpow.pop %v1198
        %v1200 = vmul.f32 %v669, 1.442695
        %v1201 = vpow.pop %v1200
        %v1202 = vmul.f32 %v670, 1.442695
        %v1203 = vpow.pop %v1202
        %v1204 = vmul.f32 %v671, 1.442695
        %v1205 = vpow.pop %v1204
        %v1206 = vmul.f32 %v672, 1.442695
        %v1207 = vpow.pop %v1206
        %v1208 = vmul.f32 %v673, 1.442695
        %v1209 = vpow.pop %v1208
        %v1210 = vmul.f32 %v674, 1.442695
        %v1211 = vpow.pop %v1210
        %v1212 = vmul.f32 %v675, 1.442695
        %v1213 = vpow.pop %v1212
        %v1214 = vmul.f32 %v676, 1.442695
        %v1215 = vpow.pop %v1214
        %v1216 = vmul.f32 %v677, 1.442695
        %v1217 = vpow.pop %v1216
        %v1218 = vmul.f32 %v678, 1.442695
        %v1219 = vpow.pop %v1218
        %v1220 = vmul.f32 %v679, 1.442695
        %v1221 = vpow.pop %v1220
        %v1222 = vmul.f32 %v680, 1.442695
        %v1223 = vpow.pop %v1222
        %v1224 = vmul.f32 %v681, 1.442695
        %v1225 = vpow.pop %v1224
        %v1226 = vmul.f32 %v682, 1.442695
        %v1227 = vpow.pop %v1226
        %v1228 = vmul.f32 %v683, 1.442695
        %v1229 = vpow.pop %v1228
        %v1230 = vmul.f32 %v684, 1.442695
        %v1231 = vpow.pop %v1230
        %v1232 = vmul.f32 %v685, 1.442695
        %v1233 = vpow.pop %v1232
        %v1234 = vmul.f32 %v686, 1.442695
        %v1235 = vpow.pop %v1234
        %v1236 = vmul.f32 %v687, 1.442695
        %v1237 = vpow.pop %v1236
        %v1238 = vmul.f32 %v688, 1.442695
        %v1239 = vpow.pop %v1238
        %v1240 = vmul.f32 %v689, 1.442695
        %v1241 = vpow.pop %v1240
        %v1242 = vmul.f32 %v690, 1.442695
        %v1243 = vpow.pop %v1242
        %v1244 = vmul.f32 %v691, 1.442695
        %v1245 = vpow.pop %v1244
        %v1246 = vmul.f32 %v692, 1.442695
        %v1247 = vpow.pop %v1246
        %v1248 = vmul.f32 %v693, 1.442695
        %v1249 = vpow.pop %v1248
        %v1250 = vmul.f32 %v694, 1.442695
        %v1251 = vpow.pop %v1250
        %v1252 = vmul.f32 %v695, 1.442695
        %v1253 = vpow.pop %v1252
        %v1254 = vmul.f32 %v696, 1.442695
        %v1255 = vpow.pop %v1254
        %v1256 = vmul.f32 %v697, 1.442695
        %v1257 = vpow.pop %v1256
        %v1258 = vmul.f32 %v698, 1.442695
        %v1259 = vpow.pop %v1258
        %v1260 = vmul.f32 %v699, 1.442695
        %v1261 = vpow.pop %v1260
        %v1262 = vmul.f32 %v700, 1.442695
        %v1263 = vpow.pop %v1262
        %v1264 = vmul.f32 %v701, 1.442695
        %v1265 = vpow.pop %v1264
        %v1266 = vmul.f32 %v702, 1.442695
        %v1267 = vpow.pop %v1266
        %v1268 = vmul.f32 %v703, 1.442695
        %v1269 = vpow.pop %v1268
        %v1270 = vmul.f32 %v704, 1.442695
        %v1271 = vpow.pop %v1270
        %v1272 = vmul.f32 %v705, 1.442695
        %v1273 = vpow.pop %v1272
        %v1274 = vmul.f32 %v706, 1.442695
        %v1275 = vpow.pop %v1274
        %v1276 = vmul.f32 %v707, 1.442695
        %v1277 = vpow.pop %v1276
        %v1278 = vmul.f32 %v708, 1.442695
        %v1279 = vpow.pop %v1278
        %v1280 = vmul.f32 %v709, 1.442695
        %v1281 = vpow.pop %v1280
        %v1282 = vmul.f32 %v710, 1.442695
        %v1283 = vpow.pop %v1282
        %v1284 = vmul.f32 %v711, 1.442695
        %v1285 = vpow.pop %v1284
        %v1286 = vmul.f32 %v712, 1.442695
        %v1287 = vpow.pop %v1286
        %v1288 = vmul.f32 %v713, 1.442695
        %v1289 = vpow.pop %v1288
        %v1290 = vmul.f32 %v714, 1.442695
        %v1291 = vpow.pop %v1290
        %v1292 = vmul.f32 %v715, 1.442695
        %v1293 = vpow.pop %v1292
        %v1294 = vmul.f32 %v716, 1.442695
        %v1295 = vpow.pop %v1294
        %v1296 = vmul.f32 %v717, 1.442695
        %v1297 = vpow.pop %v1296
        %v1298 = vmul.f32 %v718, 1.442695
        %v1299 = vpow.pop %v1298
        %v1300 = vmul.f32 %v719, 1.442695
        %v1301 = vpow.pop %v1300
        %v1302 = vmul.f32 %v720, 1.442695
        %v1303 = vpow.pop %v1302
        %v1304 = vmul.f32 %v721, 1.442695
        %v1305 = vpow.pop %v1304
        %v1306 = vmul.f32 %v722, 1.442695
        %v1307 = vpow.pop %v1306
        %v1308 = vmul.f32 %v723, 1.442695
        %v1309 = vpow.pop %v1308
        %v1310 = vmul.f32 %v724, 1.442695
        %v1311 = vpow.pop %v1310
        %v1312 = vmul.f32 %v725, 1.442695
        %v1313 = vpow.pop %v1312
        %v1314 = vmul.f32 %v726, 1.442695
        %v1315 = vpow.pop %v1314
        %v1316 = vmul.f32 %v727, 1.442695
        %v1317 = vpow.pop %v1316
        %v1318 = vmul.f32 %v728, 1.442695
        %v1319 = vpow.pop %v1318
        %v1320 = vmul.f32 %v729, 1.442695
        %v1321 = vpow.pop %v1320
        %v1322 = vmul.f32 %v730, 1.442695
        %v1323 = vpow.pop %v1322
        %v1324 = vmul.f32 %v731, 1.442695
        %v1325 = vpow.pop %v1324
        %v1326 = vmul.f32 %v732, 1.442695
        %v1327 = vpow.pop %v1326
        %v1328 = vmul.f32 %v733, 1.442695
        %v1329 = vpow.pop %v1328
        %v1330 = vmul.f32 %v734, 1.442695
        %v1331 = vpow.pop %v1330
        %v1332 = vmul.f32 %v735, 1.442695
        %v1333 = vpow.pop %v1332
        %v1334 = vmul.f32 %v736, 1.442695
        %v1335 = vpow.pop %v1334
        %v1336 = vmul.f32 %v737, 1.442695
        %v1337 = vpow.pop %v1336
        %v1338 = vmul.f32 %v738, 1.442695
        %v1339 = vpow.pop %v1338
        %v1340 = vmul.f32 %v739, 1.442695
        %v1341 = vpow.pop %v1340
        %v1342 = vmul.f32 %v740, 1.442695
        %v1343 = vpow.pop %v1342
        %v1344 = vmul.f32 %v741, 1.442695
        %v1345 = vpow.pop %v1344
        %v1346 = vmul.f32 %v742, 1.442695
        %v1347 = vpow.pop %v1346
        %v1348 = vmul.f32 %v743, 1.442695
        %v1349 = vpow.pop %v1348
        %v1350 = vmul.f32 %v744, 1.442695
        %v1351 = vpow.pop %v1350
        %v1352 = vmul.f32 %v745, 1.442695
        %v1353 = vpow.pop %v1352
        %v1354 = vmul.f32 %v746, 1.442695
        %v1355 = vpow.pop %v1354
        %v1356 = vmul.f32 %v747, 1.442695
        %v1357 = vpow.pop %v1356
        %v1358 = vmul.f32 %v748, 1.442695
        %v1359 = vpow.pop %v1358
        %v1360 = vmul.f32 %v749, 1.442695
        %v1361 = vpow.pop %v1360
        %v1362 = vmul.f32 %v750, 1.442695
        %v1363 = vpow.pop %v1362
        %v1364 = vmul.f32 %v751, 1.442695
        %v1365 = vpow.pop %v1364
        %v1366 = vmul.f32 %v752, 1.442695
        %v1367 = vpow.pop %v1366
        %v1368 = vmul.f32 %v753, 1.442695
        %v1369 = vpow.pop %v1368
        %v1370 = vmul.f32 %v754, 1.442695
        %v1371 = vpow.pop %v1370
        %v1372 = vmul.f32 %v755, 1.442695
        %v1373 = vpow.pop %v1372
        %v1374 = vmul.f32 %v756, 1.442695
        %v1375 = vpow.pop %v1374
        %v1376 = vmul.f32 %v757, 1.442695
        %v1377 = vpow.pop %v1376
        %v1378 = vmul.f32 %v758, 1.442695
        %v1379 = vpow.pop %v1378
        %v1380 = vmul.f32 %v759, 1.442695
        %v1381 = vpow.pop %v1380
        %v1382 = vmul.f32 %v760, 1.442695
        %v1383 = vpow.pop %v1382
        %v1384 = vmul.f32 %v761, 1.442695
        %v1385 = vpow.pop %v1384
        %v1386 = vmul.f32 %v762, 1.442695
        %v1387 = vpow.pop %v1386
        %v1388 = vmul.f32 %v763, 1.442695
        %v1389 = vpow.pop %v1388
        %v1390 = vmul.f32 %v764, 1.442695
        %v1391 = vpow.pop %v1390
        %v1392 = vmul.f32 %v765, 1.442695
        %v1393 = vpow.pop %v1392
        %v1394 = vmul.f32 %v766, 1.442695
        %v1395 = vpow.pop %v1394
        %v1396 = vmul.f32 %v767, 1.442695
        %v1397 = vpow.pop %v1396
        %v1398 = vmul.f32 %v768, 1.442695
        %v1399 = vpow.pop %v1398
        %v1400 = vmul.f32 %v769, 1.442695
        %v1401 = vpow.pop %v1400
        %v1402 = vmul.f32 %v770, 1.442695
        %v1403 = vpow.pop %v1402
        %v1404 = vmul.f32 %v771, 1.442695
        %v1405 = vpow.pop %v1404
        %v1406 = vmul.f32 %v772, 1.442695
        %v1407 = vpow.pop %v1406
        %v1408 = vmul.f32 %v773, 1.442695
        %v1409 = vpow.pop %v1408
        %v1410 = vmul.f32 %v774, 1.442695
        %v1411 = vpow.pop %v1410
        %v1412 = vmul.f32 %v775, 1.442695
        %v1413 = vpow.pop %v1412
        %v1414 = vmul.f32 %v776, 1.442695
        %v1415 = vpow.pop %v1414
        %v1416 = vmul.f32 %v777, 1.442695
        %v1417 = vpow.pop %v1416
        %v1418 = vmul.f32 %v778, 1.442695
        %v1419 = vpow.pop %v1418
        %v1420 = vmul.f32 %v779, 1.442695
        %v1421 = vpow.pop %v1420
        %v1422 = vmul.f32 %v780, 1.442695
        %v1423 = vpow.pop %v1422
        %v1424 = vmul.f32 %v781, 1.442695
        %v1425 = vpow.pop %v1424
        %v1426 = vmul.f32 %v782, 1.442695
        %v1427 = vpow.pop %v1426
        %v1428 = vmul.f32 %v783, 1.442695
        %v1429 = vpow.pop %v1428
        %v1430 = vmul.f32 %v784, 1.442695
        %v1431 = vpow.pop %v1430
        %v1432 = vmul.f32 %v785, 1.442695
        %v1433 = vpow.pop %v1432
        %v1434 = vmul.f32 %v786, 1.442695
        %v1435 = vpow.pop %v1434
        %v1436 = vmul.f32 %v787, 1.442695
        %v1437 = vpow.pop %v1436
        %v1438 = vmul.f32 %v788, 1.442695
        %v1439 = vpow.pop %v1438
        %v1440 = vmul.f32 %v789, 1.442695
        %v1441 = vpow.pop %v1440
        %v1442 = vmul.f32 %v790, 1.442695
        %v1443 = vpow.pop %v1442
        %v1444 = vmul.f32 %v791, 1.442695
        %v1445 = vpow.pop %v1444
        %v1446 = vmul.f32 %v792, 1.442695
        %v1447 = vpow.pop %v1446
        %v1448 = vmul.f32 %v793, 1.442695
        %v1449 = vpow.pop %v1448
        %v1450 = vmul.f32 %v794, 1.442695
        %v1451 = vpow.pop %v1450
        %v1452 = vmul.f32 %v795, 1.442695
        %v1453 = vpow.pop %v1452
        %v1454 = vmul.f32 %v796, 1.442695
        %v1455 = vpow.pop %v1454
        %v1456 = vmul.f32 %v797, 1.442695
        %v1457 = vpow.pop %v1456
        %v1458 = vmul.f32 %v798, 1.442695
        %v1459 = vpow.pop %v1458
        %v1460 = vmul.f32 %v799, 1.442695
        %v1461 = vpow.pop %v1460
        %v1462 = vmul.f32 %v800, 1.442695
        %v1463 = vpow.pop %v1462
        %v1464 = vmul.f32 %v801, 1.442695
        %v1465 = vpow.pop %v1464
        %v1466 = vmul.f32 %v802, 1.442695
        %v1467 = vpow.pop %v1466
        %v1468 = vmul.f32 %v803, 1.442695
        %v1469 = vpow.pop %v1468
        %v1470 = vmul.f32 %v804, 1.442695
        %v1471 = vpow.pop %v1470
        %v1472 = vmul.f32 %v805, 1.442695
        %v1473 = vpow.pop %v1472
        %v1474 = vmul.f32 %v806, 1.442695
        %v1475 = vpow.pop %v1474
        %v1476 = vmul.f32 %v807, 1.442695
        %v1477 = vpow.pop %v1476
        %v1478 = vmul.f32 %v808, 1.442695
        %v1479 = vpow.pop %v1478
        %v1480 = vmul.f32 %v809, 1.442695
        %v1481 = vpow.pop %v1480
        %v1482 = vmul.f32 %v810, 1.442695
        %v1483 = vpow.pop %v1482
        %v1484 = vmul.f32 %v811, 1.442695
        %v1485 = vpow.pop %v1484
        %v1486 = vmul.f32 %v812, 1.442695
        %v1487 = vpow.pop %v1486
        %v1488 = vmul.f32 %v813, 1.442695
        %v1489 = vpow.pop %v1488
        %v1490 = vmul.f32 %v814, 1.442695
        %v1491 = vpow.pop %v1490
        %v1492 = vmul.f32 %v815, 1.442695
        %v1493 = vpow.pop %v1492
        %v1494 = vmul.f32 %v816, 1.442695
        %v1495 = vpow.pop %v1494
        %v1496 = vmul.f32 %v817, 1.442695
        %v1497 = vpow.pop %v1496
        %v1498 = vmul.f32 %v818, 1.442695
        %v1499 = vpow.pop %v1498
        %v1500 = vmul.f32 %v819, 1.442695
        %v1501 = vpow.pop %v1500
        %v1502 = vmul.f32 %v820, 1.442695
        %v1503 = vpow.pop %v1502
        %v1504 = vmul.f32 %v821, 1.442695
        %v1505 = vpow.pop %v1504
        %v1506 = vmul.f32 %v822, 1.442695
        %v1507 = vpow.pop %v1506
        %v1508 = vmul.f32 %v823, 1.442695
        %v1509 = vpow.pop %v1508
        %v1510 = vmul.f32 %v824, 1.442695
        %v1511 = vpow.pop %v1510
        %v1512 = vmul.f32 %v825, 1.442695
        %v1513 = vpow.pop %v1512
        %v1514 = vmul.f32 %v826, 1.442695
        %v1515 = vpow.pop %v1514
        %v1516 = vmul.f32 %v827, 1.442695
        %v1517 = vpow.pop %v1516
        %v1518 = vmul.f32 %v828, 1.442695
        %v1519 = vpow.pop %v1518
        %v1520 = vmul.f32 %v829, 1.442695
        %v1521 = vpow.pop %v1520
        %v1522 = vmul.f32 %v830, 1.442695
        %v1523 = vpow.pop %v1522
        %v1524 = vmul.f32 %v831, 1.442695
        %v1525 = vpow.pop %v1524
        %v1526 = vmul.f32 %v832, 1.442695
        %v1527 = vpow.pop %v1526
        %v1528 = vmul.f32 %v833, 1.442695
        %v1529 = vpow.pop %v1528
        %v1530 = vmul.f32 %v834, 1.442695
        %v1531 = vpow.pop %v1530
        %v1532 = vmul.f32 %v835, 1.442695
        %v1533 = vpow.pop %v1532
        %v1534 = vmul.f32 %v836, 1.442695
        %v1535 = vpow.pop %v1534
        %v1536 = vmul.f32 %v837, 1.442695
        %v1537 = vpow.pop %v1536
        %v1538 = vmul.f32 %v838, 1.442695
        %v1539 = vpow.pop %v1538
        %v1540 = vmul.f32 %v839, 1.442695
        %v1541 = vpow.pop %v1540
        %v1542 = vmul.f32 %v840, 1.442695
        %v1543 = vpow.pop %v1542
        %v1544 = vmul.f32 %v841, 1.442695
        %v1545 = vpow.pop %v1544
        %v1546 = vmul.f32 %v842, 1.442695
        %v1547 = vpow.pop %v1546
        %v1548 = vmul.f32 %v843, 1.442695
        %v1549 = vpow.pop %v1548
        %v1550 = vmul.f32 %v844, 1.442695
        %v1551 = vpow.pop %v1550
        %v1552 = vmul.f32 %v845, 1.442695
        %v1553 = vpow.pop %v1552
        %v1554 = vmul.f32 %v846, 1.442695
        %v1555 = vpow.pop %v1554
        %v1556 = vmul.f32 %v847, 1.442695
        %v1557 = vpow.pop %v1556
        %v1558 = vmul.f32 %v848, 1.442695
        %v1559 = vpow.pop %v1558
        %v1560 = vmul.f32 %v849, 1.442695
        %v1561 = vpow.pop %v1560
        %v1562 = vmul.f32 %v850, 1.442695
        %v1563 = vpow.pop %v1562
        %v1564 = vmul.f32 %v851, 1.442695
        %v1565 = vpow.pop %v1564
        %v1566 = vmul.f32 %v852, 1.442695
        %v1567 = vpow.pop %v1566
        %v1568 = vmul.f32 %v853, 1.442695
        %v1569 = vpow.pop %v1568
        %v1570 = vmul.f32 %v854, 1.442695
        %v1571 = vpow.pop %v1570
        %v1572 = vmul.f32 %v855, 1.442695
        %v1573 = vpow.pop %v1572
        %v1574 = vmul.f32 %v856, 1.442695
        %v1575 = vpow.pop %v1574
        %v1576 = vmul.f32 %v857, 1.442695
        %v1577 = vpow.pop %v1576
        %v1578 = vmul.f32 %v858, 1.442695
        %v1579 = vpow.pop %v1578
        %v1580 = vmul.f32 %v859, 1.442695
        %v1581 = vpow.pop %v1580
        %v1582 = vmul.f32 %v860, 1.442695
        %v1583 = vpow.pop %v1582
        %v1584 = vmul.f32 %v861, 1.442695
        %v1585 = vpow.pop %v1584
        %v1586 = vmul.f32 %v862, 1.442695
        %v1587 = vpow.pop %v1586
        %v1588 = vmul.f32 %v863, 1.442695
        %v1589 = vpow.pop %v1588
        %v1590 = vmul.f32 %v864, 1.442695
        %v1591 = vpow.pop %v1590
        %v1592 = vmul.f32 %v865, 1.442695
        %v1593 = vpow.pop %v1592
        %v1594 = vmul.f32 %v866, 1.442695
        %v1595 = vpow.pop %v1594
        %v1596 = vmul.f32 %v867, 1.442695
        %v1597 = vpow.pop %v1596
        %v1598 = vmul.f32 %v868, 1.442695
        %v1599 = vpow.pop %v1598
        %v1600 = vmul.f32 %v869, 1.442695
        %v1601 = vpow.pop %v1600
        %v1602 = vmul.f32 %v870, 1.442695
        %v1603 = vpow.pop %v1602
        %v1604 = vmul.f32 %v871, 1.442695
        %v1605 = vpow.pop %v1604
        %v1606 = vmul.f32 %v872, 1.442695
        %v1607 = vpow.pop %v1606
        %v1608 = vmul.f32 %v873, 1.442695
        %v1609 = vpow.pop %v1608
        %v1610 = vmul.f32 %v874, 1.442695
        %v1611 = vpow.pop %v1610
        %v1612 = vmul.f32 %v875, 1.442695
        %v1613 = vpow.pop %v1612
        %v1614 = vmul.f32 %v876, 1.442695
        %v1615 = vpow.pop %v1614
        %v1616 = vmul.f32 %v877, 1.442695
        %v1617 = vpow.pop %v1616
        %v1618 = vmul.f32 %v878, 1.442695
        %v1619 = vpow.pop %v1618
        %v1620 = vmul.f32 %v879, 1.442695
        %v1621 = vpow.pop %v1620
        %v1622 = vmul.f32 %v880, 1.442695
        %v1623 = vpow.pop %v1622
        %v1624 = vmul.f32 %v881, 1.442695
        %v1625 = vpow.pop %v1624
        %v1626 = vmul.f32 %v882, 1.442695
        %v1627 = vpow.pop %v1626
        %v1628 = vmul.f32 %v883, 1.442695
        %v1629 = vpow.pop %v1628
        %v1630 = vmul.f32 %v884, 1.442695
        %v1631 = vpow.pop %v1630
        %v1632 = vmul.f32 %v885, 1.442695
        %v1633 = vpow.pop %v1632
        %v1634 = vmul.f32 %v886, 1.442695
        %v1635 = vpow.pop %v1634
        %v1636 = vmul.f32 %v887, 1.442695
        %v1637 = vpow.pop %v1636
        %v1638 = vmul.f32 %v888, 1.442695
        %v1639 = vpow.pop %v1638
        %v1640 = vmul.f32 %v889, 1.442695
        %v1641 = vpow.pop %v1640
        %v1642 = vmul.f32 %v890, 1.442695
        %v1643 = vpow.pop %v1642
        %v1644 = vmul.f32 %v891, 1.442695
        %v1645 = vpow.pop %v1644
        %v1646 = vmul.f32 %v892, 1.442695
        %v1647 = vpow.pop %v1646
        %v1648 = vmul.f32 %v893, 1.442695
        %v1649 = vpow.pop %v1648
        %v1650 = vmul.f32 %v894, 1.442695
        %v1651 = vpow.pop %v1650
        %v1652 = vmul.f32 %v895, 1.442695
        %v1653 = vpow.pop %v1652
        %v1654 = vmul.f32 %v896, 1.442695
        %v1655 = vpow.pop %v1654
        %v1656 = vmul.f32 %v897, 1.442695
        %v1657 = vpow.pop %v1656
        %v1658 = vmul.f32 %v898, 1.442695
        %v1659 = vpow.pop %v1658
        %v1660 = vmul.f32 %v899, 1.442695
        %v1661 = vpow.pop %v1660
        %v1662 = vmul.f32 %v900, 1.442695
        %v1663 = vpow.pop %v1662
        %v1664 = vmul.f32 %v901, 1.442695
        %v1665 = vpow.pop %v1664
        %v1666 = vmul.f32 %v902, 1.442695
        %v1667 = vpow.pop %v1666
        %v1668 = vmul.f32 %v903, 1.442695
        %v1669 = vpow.pop %v1668
        %v1670 = vmul.f32 %v904, 1.442695
        %v1671 = vpow.pop %v1670
        %v1672 = vmul.f32 %v905, 1.442695
        %v1673 = vpow.pop %v1672
        %v1674 = vmul.f32 %v906, 1.442695
        %v1675 = vpow.pop %v1674
        %v1676 = vmul.f32 %v907, 1.442695
        %v1677 = vpow.pop %v1676
        %v1678 = vmul.f32 %v908, 1.442695
        %v1679 = vpow.pop %v1678
        %v1680 = vmul.f32 %v909, 1.442695
        %v1681 = vpow.pop %v1680
        %v1682 = vmul.f32 %v910, 1.442695
        %v1683 = vpow.pop %v1682
        %v1684 = vmul.f32 %v911, 1.442695
        %v1685 = vpow.pop %v1684
        %v1686 = vmul.f32 %v912, 1.442695
        %v1687 = vpow.pop %v1686
        %v1688 = vmul.f32 %v913, 1.442695
        %v1689 = vpow.pop %v1688
        %v1690 = vmul.f32 %v914, 1.442695
        %v1691 = vpow.pop %v1690
        %v1692 = vmul.f32 %v915, 1.442695
        %v1693 = vpow.pop %v1692
        %v1694 = vmul.f32 %v916, 1.442695
        %v1695 = vpow.pop %v1694
        %v1696 = vmul.f32 %v917, 1.442695
        %v1697 = vpow.pop %v1696
        %v1698 = vmul.f32 %v918, 1.442695
        %v1699 = vpow.pop %v1698
        %v1700 = vmul.f32 %v919, 1.442695
        %v1701 = vpow.pop %v1700
        %v1702 = vmul.f32 %v920, 1.442695
        %v1703 = vpow.pop %v1702
        %v1704 = vmul.f32 %v921, 1.442695
        %v1705 = vpow.pop %v1704
        %v1706 = vmul.f32 %v922, 1.442695
        %v1707 = vpow.pop %v1706
        %v1708 = vmul.f32 %v923, 1.442695
        %v1709 = vpow.pop %v1708
        %v1710 = vmul.f32 %v924, 1.442695
        %v1711 = vpow.pop %v1710
        %v1712 = vmul.f32 %v925, 1.442695
        %v1713 = vpow.pop %v1712
        %v1714 = vmul.f32 %v926, 1.442695
        %v1715 = vpow.pop %v1714
        %v1716 = vmul.f32 %v927, 1.442695
        %v1717 = vpow.pop %v1716
        %v1718 = vmul.f32 %v928, 1.442695
        %v1719 = vpow.pop %v1718
        %v1720 = vmul.f32 %v929, 1.442695
        %v1721 = vpow.pop %v1720
        %v1722 = vmul.f32 %v930, 1.442695
        %v1723 = vpow.pop %v1722
        %v1724 = vmul.f32 %v931, 1.442695
        %v1725 = vpow.pop %v1724
        %v1726 = vmul.f32 %v932, 1.442695
        %v1727 = vpow.pop %v1726
        %v1728 = vmul.f32 %v933, 1.442695
        %v1729 = vpow.pop %v1728
        %v1730 = vmul.f32 %v934, 1.442695
        %v1731 = vpow.pop %v1730
        %v1732 = vmul.f32 %v935, 1.442695
        %v1733 = vpow.pop %v1732
        %v1734 = vmul.f32 %v936, 1.442695
        %v1735 = vpow.pop %v1734
        %v1736 = vmul.f32 %v937, 1.442695
        %v1737 = vpow.pop %v1736
        %v1738 = vmul.f32 %v938, 1.442695
        %v1739 = vpow.pop %v1738
        %v1740 = vmul.f32 %v939, 1.442695
        %v1741 = vpow.pop %v1740
        %v1742 = vmul.f32 %v940, 1.442695
        %v1743 = vpow.pop %v1742
        %v1744 = vmul.f32 %v941, 1.442695
        %v1745 = vpow.pop %v1744
        %v1746 = vmul.f32 %v942, 1.442695
        %v1747 = vpow.pop %v1746
        %v1748 = vmul.f32 %v943, 1.442695
        %v1749 = vpow.pop %v1748
        %v1750 = vmul.f32 %v944, 1.442695
        %v1751 = vpow.pop %v1750
        %v1752 = vmul.f32 %v945, 1.442695
        %v1753 = vpow.pop %v1752
        %v1754 = vmul.f32 %v946, 1.442695
        %v1755 = vpow.pop %v1754
        %v1756 = vmul.f32 %v947, 1.442695
        %v1757 = vpow.pop %v1756
        %v1758 = vmul.f32 %v948, 1.442695
        %v1759 = vpow.pop %v1758
        %v1760 = vmul.f32 %v949, 1.442695
        %v1761 = vpow.pop %v1760
        %v1762 = vmul.f32 %v950, 1.442695
        %v1763 = vpow.pop %v1762
        %v1764 = vmul.f32 %v951, 1.442695
        %v1765 = vpow.pop %v1764
        %v1766 = vmul.f32 %v952, 1.442695
        %v1767 = vpow.pop %v1766
        %v1768 = vmul.f32 %v953, 1.442695
        %v1769 = vpow.pop %v1768
        %v1770 = vmul.f32 %v954, 1.442695
        %v1771 = vpow.pop %v1770
        %v1772 = vmul.f32 %v955, 1.442695
        %v1773 = vpow.pop %v1772
        %v1774 = vmul.f32 %v956, 1.442695
        %v1775 = vpow.pop %v1774
        %v1776 = vmul.f32 %v957, 1.442695
        %v1777 = vpow.pop %v1776
        %v1778 = vmul.f32 %v958, 1.442695
        %v1779 = vpow.pop %v1778
        %v1780 = vmul.f32 %v959, 1.442695
        %v1781 = vpow.pop %v1780
        %v1782 = vmul.f32 %v960, 1.442695
        %v1783 = vpow.pop %v1782
        %v1784 = vmul.f32 %v961, 1.442695
        %v1785 = vpow.pop %v1784
        %v1786 = vmul.f32 %v962, 1.442695
        %v1787 = vpow.pop %v1786
        %v1788 = vmul.f32 %v963, 1.442695
        %v1789 = vpow.pop %v1788
        %v1790 = vmul.f32 %v964, 1.442695
        %v1791 = vpow.pop %v1790
        %v1792 = vmul.f32 %v965, 1.442695
        %v1793 = vpow.pop %v1792
        %v1794 = vmul.f32 %v966, 1.442695
        %v1795 = vpow.pop %v1794
        %v1796 = vmul.f32 %v967, 1.442695
        %v1797 = vpow.pop %v1796
        %v1798 = vmul.f32 %v968, 1.442695
        %v1799 = vpow.pop %v1798
        %v1800 = vmul.f32 %v969, 1.442695
        %v1801 = vpow.pop %v1800
        %v1802 = vmul.f32 %v970, 1.442695
        %v1803 = vpow.pop %v1802
        %v1804 = vmul.f32 %v971, 1.442695
        %v1805 = vpow.pop %v1804
        %v1806 = vmul.f32 %v972, 1.442695
        %v1807 = vpow.pop %v1806
        %v1808 = vmul.f32 %v973, 1.442695
        %v1809 = vpow.pop %v1808
        %v1810 = vmul.f32 %v974, 1.442695
        %v1811 = vpow.pop %v1810
        %v1812 = vmul.f32 %v975, 1.442695
        %v1813 = vpow.pop %v1812
        %v1814 = vmul.f32 %v976, 1.442695
        %v1815 = vpow.pop %v1814
        %v1816 = vmul.f32 %v977, 1.442695
        %v1817 = vpow.pop %v1816
        %v1818 = vmul.f32 %v978, 1.442695
        %v1819 = vpow.pop %v1818
        %v1820 = vmul.f32 %v979, 1.442695
        %v1821 = vpow.pop %v1820
        %v1822 = vmul.f32 %v980, 1.442695
        %v1823 = vpow.pop %v1822
        %v1824 = vmul.f32 %v981, 1.442695
        %v1825 = vpow.pop %v1824
        %v1826 = vmul.f32 %v982, 1.442695
        %v1827 = vpow.pop %v1826
        %v1828 = vmul.f32 %v983, 1.442695
        %v1829 = vpow.pop %v1828
        %v1830 = vmul.f32 %v984, 1.442695
        %v1831 = vpow.pop %v1830
        %v1832 = vmul.f32 %v985, 1.442695
        %v1833 = vpow.pop %v1832
        %v1834 = vmul.f32 %v986, 1.442695
        %v1835 = vpow.pop %v1834
        %v1836 = vmul.f32 %v987, 1.442695
        %v1837 = vpow.pop %v1836
        %v1838 = vmul.f32 %v988, 1.442695
        %v1839 = vpow.pop %v1838
        %v1840 = vmul.f32 %v989, 1.442695
        %v1841 = vpow.pop %v1840
        %v1842 = vmul.f32 %v990, 1.442695
        %v1843 = vpow.pop %v1842
        %v1844 = vmul.f32 %v991, 1.442695
        %v1845 = vpow.pop %v1844
        %v1846 = vmul.f32 %v992, 1.442695
        %v1847 = vpow.pop %v1846
        %v1848 = vmul.f32 %v993, 1.442695
        %v1849 = vpow.pop %v1848
        %v1850 = vmul.f32 %v994, 1.442695
        %v1851 = vpow.pop %v1850
        %v1852 = vmul.f32 %v995, 1.442695
        %v1853 = vpow.pop %v1852
        %v1854 = vmul.f32 %v996, 1.442695
        %v1855 = vpow.pop %v1854
        %v1856 = vmul.f32 %v997, 1.442695
        %v1857 = vpow.pop %v1856
        %v1858 = vmul.f32 %v998, 1.442695
        %v1859 = vpow.pop %v1858
        %v1860 = vmul.f32 %v999, 1.442695
        %v1861 = vpow.pop %v1860
        %v1862 = vmul.f32 %v1000, 1.442695
        %v1863 = vpow.pop %v1862
        %v1864 = vmul.f32 %v1001, 1.442695
        %v1865 = vpow.pop %v1864
        %v1866 = vmul.f32 %v1002, 1.442695
        %v1867 = vpow.pop %v1866
        %v1868 = vmul.f32 %v1003, 1.442695
        %v1869 = vpow.pop %v1868
        %v1870 = vmul.f32 %v1004, 1.442695
        %v1871 = vpow.pop %v1870
        %v1872 = vmul.f32 %v1005, 1.442695
        %v1873 = vpow.pop %v1872
        %v1874 = vmul.f32 %v1006, 1.442695
        %v1875 = vpow.pop %v1874
        %v1876 = vmul.f32 %v1007, 1.442695
        %v1877 = vpow.pop %v1876
        %v1878 = vmul.f32 %v1008, 1.442695
        %v1879 = vpow.pop %v1878
        %v1880 = vmul.f32 %v1009, 1.442695
        %v1881 = vpow.pop %v1880
        %v1882 = vmul.f32 %v1010, 1.442695
        %v1883 = vpow.pop %v1882
        %v1884 = vmul.f32 %v1011, 1.442695
        %v1885 = vpow.pop %v1884
        %v1886 = vmul.f32 %v1012, 1.442695
        %v1887 = vpow.pop %v1886
        %v1888 = vmul.f32 %v1013, 1.442695
        %v1889 = vpow.pop %v1888
        %v1890 = vmul.f32 %v1014, 1.442695
        %v1891 = vpow.pop %v1890
        %v1892 = vmul.f32 %v1015, 1.442695
        %v1893 = vpow.pop %v1892
        %v1894 = vmul.f32 %v1016, 1.442695
        %v1895 = vpow.pop %v1894
        %v1896 = vmul.f32 %v1017, 1.442695
        %v1897 = vpow.pop %v1896
        %v1898 = vmul.f32 %v1018, 1.442695
        %v1899 = vpow.pop %v1898
        %v1900 = vmul.f32 %v1019, 1.442695
        %v1901 = vpow.pop %v1900
        %v1902 = vmul.f32 %v1020, 1.442695
        %v1903 = vpow.pop %v1902
        %v1904 = vmul.f32 %v1021, 1.442695
        %v1905 = vpow.pop %v1904
        %v1906 = vmul.f32 %v1022, 1.442695
        %v1907 = vpow.pop %v1906
        %v1908 = vmul.f32 %v1023, 1.442695
        %v1909 = vpow.pop %v1908
        %v1910 = vmul.f32 %v1024, 1.442695
        %v1911 = vpow.pop %v1910
        %v1912 = vmul.f32 %v1025, 1.442695
        %v1913 = vpow.pop %v1912
        %v1914 = vmul.f32 %v1026, 1.442695
        %v1915 = vpow.pop %v1914
        %v1916 = vmul.f32 %v1027, 1.442695
        %v1917 = vpow.pop %v1916
        %v1918 = vmul.f32 %v1028, 1.442695
        %v1919 = vpow.pop %v1918
        %v1920 = vmul.f32 %v1029, 1.442695
        %v1921 = vpow.pop %v1920
        %v1922 = vmul.f32 %v1030, 1.442695
        %v1923 = vpow.pop %v1922
        %v1924 = vmul.f32 %v1031, 1.442695
        %v1925 = vpow.pop %v1924
        %v1926 = vmul.f32 %v1032, 1.442695
        %v1927 = vpow.pop %v1926
        %v1928 = vmul.f32 %v1033, 1.442695
        %v1929 = vpow.pop %v1928
        %v1930 = vmul.f32 %v1034, 1.442695
        %v1931 = vpow.pop %v1930
        %v1932 = vmul.f32 %v1035, 1.442695
        %v1933 = vpow.pop %v1932
        %v1934 = vmul.f32 %v1036, 1.442695
        %v1935 = vpow.pop %v1934
        %v1936 = vmul.f32 %v1037, 1.442695
        %v1937 = vpow.pop %v1936
        %v1938 = vmul.f32 %v1038, 1.442695
        %v1939 = vpow.pop %v1938
        %v1940 = vmul.f32 %v1039, 1.442695
        %v1941 = vpow.pop %v1940
        %v1942 = vmul.f32 %v1040, 1.442695
        %v1943 = vpow.pop %v1942
        %v1944 = vmul.f32 %v1041, 1.442695
        %v1945 = vpow.pop %v1944
        %v1946 = vmul.f32 %v1042, 1.442695
        %v1947 = vpow.pop %v1946
        %v1948 = vmul.f32 %v1043, 1.442695
        %v1949 = vpow.pop %v1948
        %v1950 = vmul.f32 %v1044, 1.442695
        %v1951 = vpow.pop %v1950
        %v1952 = vmul.f32 %v1045, 1.442695
        %v1953 = vpow.pop %v1952
        %v1954 = vmul.f32 %v1046, 1.442695
        %v1955 = vpow.pop %v1954
        %v1956 = vmul.f32 %v1047, 1.442695
        %v1957 = vpow.pop %v1956
        %v1958 = vmul.f32 %v1048, 1.442695
        %v1959 = vpow.pop %v1958
        %v1960 = vmul.f32 %v1049, 1.442695
        %v1961 = vpow.pop %v1960
        %v1962 = vmul.f32 %v1050, 1.442695
        %v1963 = vpow.pop %v1962
        %v1964 = vmul.f32 %v1051, 1.442695
        %v1965 = vpow.pop %v1964
        %v1966 = vmul.f32 %v1052, 1.442695
        %v1967 = vpow.pop %v1966
        %v1968 = vmul.f32 %v1053, 1.442695
        %v1969 = vpow.pop %v1968
        %v1970 = vmul.f32 %v1054, 1.442695
        %v1971 = vpow.pop %v1970
        %v1972 = vmul.f32 %v1055, 1.442695
        %v1973 = vpow.pop %v1972
        %v1974 = vmul.f32 %v1056, 1.442695
        %v1975 = vpow.pop %v1974
        %v1976 = vmul.f32 %v1057, 1.442695
        %v1977 = vpow.pop %v1976
        %v1978 = vmul.f32 %v1058, 1.442695
        %v1979 = vpow.pop %v1978
        %v1980 = vmul.f32 %v1059, 1.442695
        %v1981 = vpow.pop %v1980
        %v1982 = vmul.f32 %v1060, 1.442695
        %v1983 = vpow.pop %v1982
        %v1984 = vmul.f32 %v1061, 1.442695
        %v1985 = vpow.pop %v1984
        %v1986 = vmul.f32 %v1062, 1.442695
        %v1987 = vpow.pop %v1986
        %v1988 = vmul.f32 %v1063, 1.442695
        %v1989 = vpow.pop %v1988
        %v1990 = vmul.f32 %v1064, 1.442695
        %v1991 = vpow.pop %v1990
        %v1992 = vmul.f32 %v1065, 1.442695
        %v1993 = vpow.pop %v1992
        %v1994 = vmul.f32 %v1066, 1.442695
        %v1995 = vpow.pop %v1994
        %v1996 = vmul.f32 %v1067, 1.442695
        %v1997 = vpow.pop %v1996
        %v1998 = vmul.f32 %v1068, 1.442695
        %v1999 = vpow.pop %v1998
        %v2000 = vmul.f32 %v1069, 1.442695
        %v2001 = vpow.pop %v2000
        %v2002 = vmul.f32 %v1070, 1.442695
        %v2003 = vpow.pop %v2002
        %v2004 = vmul.f32 %v1071, 1.442695
        %v2005 = vpow.pop %v2004
        %v2006 = vmul.f32 %v1072, 1.442695
        %v2007 = vpow.pop %v2006
        %v2008 = vmul.f32 %v1073, 1.442695
        %v2009 = vpow.pop %v2008
        %v2010 = vmul.f32 %v1074, 1.442695
        %v2011 = vpow.pop %v2010
        %v2012 = vmul.f32 %v1075, 1.442695
        %v2013 = vpow.pop %v2012
        %v2014 = vmul.f32 %v1076, 1.442695
        %v2015 = vpow.pop %v2014
        %v2016 = vmul.f32 %v1077, 1.442695
        %v2017 = vpow.pop %v2016
        %v2018 = vmul.f32 %v1078, 1.442695
        %v2019 = vpow.pop %v2018
        %v2020 = vmul.f32 %v1079, 1.442695
        %v2021 = vpow.pop %v2020
        %v2022 = vmul.f32 %v1080, 1.442695
        %v2023 = vpow.pop %v2022
        %v2024 = vmul.f32 %v1081, 1.442695
        %v2025 = vpow.pop %v2024
        %v2026 = vmul.f32 %v1082, 1.442695
        %v2027 = vpow.pop %v2026
        %v2028 = vmul.f32 %v1083, 1.442695
        %v2029 = vpow.pop %v2028
        %v2030 = vmul.f32 %v1084, 1.442695
        %v2031 = vpow.pop %v2030
        %v2032 = vmul.f32 %v1085, 1.442695
        %v2033 = vpow.pop %v2032
        %v2034 = vmul.f32 %v1086, 1.442695
        %v2035 = vpow.pop %v2034
        %v2036 = vmul.f32 %v1087, 1.442695
        %v2037 = vpow.pop %v2036
        %v2038 = vmul.f32 %v1088, 1.442695
        %v2039 = vpow.pop %v2038
        %v2040 = vmul.f32 %v1089, 1.442695
        %v2041 = vpow.pop %v2040
        %v2042 = vmul.f32 %v1090, 1.442695
        %v2043 = vpow.pop %v2042
        %v2044 = vmul.f32 %v1091, 1.442695
        %v2045 = vpow.pop %v2044
        %v2046 = vmul.f32 %v1092, 1.442695
        %v2047 = vpow.pop %v2046
        %v2048 = vmul.f32 %v1093, 1.442695
        %v2049 = vpow.pop %v2048
        %v2050 = vmul.f32 %v1094, 1.442695
        %v2051 = vpow.pop %v2050
        %v2052 = vmul.f32 %v1095, 1.442695
        %v2053 = vpow.pop %v2052
        %v2054 = vmul.f32 %v1096, 1.442695
        %v2055 = vpow.pop %v2054
        %v2056 = vmul.f32 %v1097, 1.442695
        %v2057 = vpow.pop %v2056
        %v2058 = vmul.f32 %v1098, 1.442695
        %v2059 = vpow.pop %v2058
        %v2060 = vmul.f32 %v1099, 1.442695
        %v2061 = vpow.pop %v2060
        %v2062 = vmul.f32 %v1100, 1.442695
        %v2063 = vpow.pop %v2062
        %v2064 = vmul.f32 %v1101, 1.442695
        %v2065 = vpow.pop %v2064
        %v2066 = vmul.f32 %v1102, 1.442695
        %v2067 = vpow.pop %v2066
        %v2068 = vmul.f32 %v1103, 1.442695
        %v2069 = vpow.pop %v2068
        %v2070 = vmul.f32 %v1104, 1.442695
        %v2071 = vpow.pop %v2070
        %v2072 = vmul.f32 %v1105, 1.442695
        %v2073 = vpow.pop %v2072
        %v2074 = vmul.f32 %v1106, 1.442695
        %v2075 = vpow.pop %v2074
        %v2076 = vmul.f32 %v1107, 1.442695
        %v2077 = vpow.pop %v2076
        %v2078 = vmul.f32 %v1108, 1.442695
        %v2079 = vpow.pop %v2078
        %v2080 = vmul.f32 %v1109, 1.442695
        %v2081 = vpow.pop %v2080
        %v2082 = vmul.f32 %v1110, 1.442695
        %v2083 = vpow.pop %v2082
        %v2084 = vmul.f32 %v1111, 1.442695
        %v2085 = vpow.pop %v2084
        %v2086 = vmul.f32 %v1112, 1.442695
        %v2087 = vpow.pop %v2086
        %v2088 = vmul.f32 %v1113, 1.442695
        %v2089 = vpow.pop %v2088
        %v2090 = vmul.f32 %v1114, 1.442695
        %v2091 = vpow.pop %v2090
        %v2092 = vmul.f32 %v1115, 1.442695
        %v2093 = vpow.pop %v2092
        %v2094 = vmul.f32 %v1116, 1.442695
        %v2095 = vpow.pop %v2094
        %v2096 = vmul.f32 %v1117, 1.442695
        %v2097 = vpow.pop %v2096
        %v2098 = vmul.f32 %v1118, 1.442695
        %v2099 = vpow.pop %v2098
        %v2100 = vmul.f32 %v1119, 1.442695
        %v2101 = vpow.pop %v2100
        %v2102 = vmul.f32 %v1120, 1.442695
        %v2103 = vpow.pop %v2102
        %v2104 = vmul.f32 %v1121, 1.442695
        %v2105 = vpow.pop %v2104
        %v2106 = vmul.f32 %v1122, 1.442695
        %v2107 = vpow.pop %v2106
        %v2108 = vmul.f32 %v1123, 1.442695
        %v2109 = vpow.pop %v2108
        %v2110 = vmul.f32 %v1124, 1.442695
        %v2111 = vpow.pop %v2110
        %v2112 = vmul.f32 %v1125, 1.442695
        %v2113 = vpow.pop %v2112
        %v2114 = vmul.f32 %v1126, 1.442695
        %v2115 = vpow.pop %v2114
        %v2116 = vmul.f32 %v1127, 1.442695
        %v2117 = vpow.pop %v2116
        %v2118 = vmul.f32 %v1128, 1.442695
        %v2119 = vpow.pop %v2118
        %v2120 = vmul.f32 %v1129, 1.442695
        %v2121 = vpow.pop %v2120
        %v2122 = vmul.f32 %v1130, 1.442695
        %v2123 = vpow.pop %v2122
        %v2124 = vmul.f32 %v1131, 1.442695
        %v2125 = vpow.pop %v2124
        %v2126 = vmul.f32 %v1132, 1.442695
        %v2127 = vpow.pop %v2126
        %v2128 = vmul.f32 %v1133, 1.442695
        %v2129 = vpow.pop %v2128
        %v2130 = vmul.f32 %v1134, 1.442695
        %v2131 = vpow.pop %v2130
        %v2132 = vmul.f32 %v1135, 1.442695
        %v2133 = vpow.pop %v2132
        %v2134 = vmul.f32 %v1136, 1.442695
        %v2135 = vpow.pop %v2134
        %v2136 = vmul.f32 %v1137, 1.442695
        %v2137 = vpow.pop %v2136
        %v2138 = vmul.f32 %v1138, 1.442695
        %v2139 = vpow.pop %v2138
        %v2140 = vmul.f32 %v1139, 1.442695
        %v2141 = vpow.pop %v2140
        %v2142 = vmul.f32 %v1140, 1.442695
        %v2143 = vpow.pop %v2142
        %v2144 = vmul.f32 %v1141, 1.442695
        %v2145 = vpow.pop %v2144
        %v2146 = vmul.f32 %v1142, 1.442695
        %v2147 = vpow.pop %v2146
        %v2148 = vmul.f32 %v1143, 1.442695
        %v2149 = vpow.pop %v2148
        %v2150 = vmul.f32 %v1144, 1.442695
        %v2151 = vpow.pop %v2150
        %v2152 = vmul.f32 %v1145, 1.442695
        %v2153 = vpow.pop %v2152
        %v2154 = vmul.f32 %v1146, 1.442695
        %v2155 = vpow.pop %v2154
        %v2156 = vmul.f32 %v1147, 1.442695
        %v2157 = vpow.pop %v2156
        %v2158 = vmul.f32 %v1148, 1.442695
        %v2159 = vpow.pop %v2158
        %v2160 = vmul.f32 %v1149, 1.442695
        %v2161 = vpow.pop %v2160
        %v2162 = vmul.f32 %v1150, 1.442695
        %v2163 = vpow.pop %v2162
        %v2164 = vmul.f32 %v1151, 1.442695
        %v2165 = vpow.pop %v2164
        %v2166 = vmul.f32 %v1152, 1.442695
        %v2167 = vpow.pop %v2166
        %v2168 = vmul.f32 %v1153, 1.442695
        %v2169 = vpow.pop %v2168
        %v2170 = vmul.f32 %v1154, 1.442695
        %v2171 = vpow.pop %v2170
        %v2172 = vmul.f32 %v1155, 1.442695
        %v2173 = vpow.pop %v2172
        %v2174 = vmul.f32 %v1156, 1.442695
        %v2175 = vpow.pop %v2174
        %v2176 = vmul.f32 %v1157, 1.442695
        %v2177 = vpow.pop %v2176
        %v2178 = vmul.f32 %v1158, 1.442695
        %v2179 = vpow.pop %v2178
        %v2180 = vmul.f32 %v1159, 1.442695
        %v2181 = vpow.pop %v2180
        %v2182 = vmul.f32 %v1160, 1.442695
        %v2183 = vpow.pop %v2182
        %v2184 = vmul.f32 %v1161, 1.442695
        %v2185 = vpow.pop %v2184
        %v2186 = vadd.f32 %v1163, 1.0
        %v2187 = vadd.f32 %v1165, 1.0
        %v2188 = vadd.f32 %v1167, 1.0
        %v2189 = vadd.f32 %v1169, 1.0
        %v2190 = vadd.f32 %v1171, 1.0
        %v2191 = vadd.f32 %v1173, 1.0
        %v2192 = vadd.f32 %v1175, 1.0
        %v2193 = vadd.f32 %v1177, 1.0
        %v2194 = vadd.f32 %v1179, 1.0
        %v2195 = vadd.f32 %v1181, 1.0
        %v2196 = vadd.f32 %v1183, 1.0
        %v2197 = vadd.f32 %v1185, 1.0
        %v2198 = vadd.f32 %v1187, 1.0
        %v2199 = vadd.f32 %v1189, 1.0
        %v2200 = vadd.f32 %v1191, 1.0
        %v2201 = vadd.f32 %v1193, 1.0
        %v2202 = vadd.f32 %v1195, 1.0
        %v2203 = vadd.f32 %v1197, 1.0
        %v2204 = vadd.f32 %v1199, 1.0
        %v2205 = vadd.f32 %v1201, 1.0
        %v2206 = vadd.f32 %v1203, 1.0
        %v2207 = vadd.f32 %v1205, 1.0
        %v2208 = vadd.f32 %v1207, 1.0
        %v2209 = vadd.f32 %v1209, 1.0
        %v2210 = vadd.f32 %v1211, 1.0
        %v2211 = vadd.f32 %v1213, 1.0
        %v2212 = vadd.f32 %v1215, 1.0
        %v2213 = vadd.f32 %v1217, 1.0
        %v2214 = vadd.f32 %v1219, 1.0
        %v2215 = vadd.f32 %v1221, 1.0
        %v2216 = vadd.f32 %v1223, 1.0
        %v2217 = vadd.f32 %v1225, 1.0
        %v2218 = vadd.f32 %v1227, 1.0
        %v2219 = vadd.f32 %v1229, 1.0
        %v2220 = vadd.f32 %v1231, 1.0
        %v2221 = vadd.f32 %v1233, 1.0
        %v2222 = vadd.f32 %v1235, 1.0
        %v2223 = vadd.f32 %v1237, 1.0
        %v2224 = vadd.f32 %v1239, 1.0
        %v2225 = vadd.f32 %v1241, 1.0
        %v2226 = vadd.f32 %v1243, 1.0
        %v2227 = vadd.f32 %v1245, 1.0
        %v2228 = vadd.f32 %v1247, 1.0
        %v2229 = vadd.f32 %v1249, 1.0
        %v2230 = vadd.f32 %v1251, 1.0
        %v2231 = vadd.f32 %v1253, 1.0
        %v2232 = vadd.f32 %v1255, 1.0
        %v2233 = vadd.f32 %v1257, 1.0
        %v2234 = vadd.f32 %v1259, 1.0
        %v2235 = vadd.f32 %v1261, 1.0
        %v2236 = vadd.f32 %v1263, 1.0
        %v2237 = vadd.f32 %v1265, 1.0
        %v2238 = vadd.f32 %v1267, 1.0
        %v2239 = vadd.f32 %v1269, 1.0
        %v2240 = vadd.f32 %v1271, 1.0
        %v2241 = vadd.f32 %v1273, 1.0
        %v2242 = vadd.f32 %v1275, 1.0
        %v2243 = vadd.f32 %v1277, 1.0
        %v2244 = vadd.f32 %v1279, 1.0
        %v2245 = vadd.f32 %v1281, 1.0
        %v2246 = vadd.f32 %v1283, 1.0
        %v2247 = vadd.f32 %v1285, 1.0
        %v2248 = vadd.f32 %v1287, 1.0
        %v2249 = vadd.f32 %v1289, 1.0
        %v2250 = vadd.f32 %v1291, 1.0
        %v2251 = vadd.f32 %v1293, 1.0
        %v2252 = vadd.f32 %v1295, 1.0
        %v2253 = vadd.f32 %v1297, 1.0
        %v2254 = vadd.f32 %v1299, 1.0
        %v2255 = vadd.f32 %v1301, 1.0
        %v2256 = vadd.f32 %v1303, 1.0
        %v2257 = vadd.f32 %v1305, 1.0
        %v2258 = vadd.f32 %v1307, 1.0
        %v2259 = vadd.f32 %v1309, 1.0
        %v2260 = vadd.f32 %v1311, 1.0
        %v2261 = vadd.f32 %v1313, 1.0
        %v2262 = vadd.f32 %v1315, 1.0
        %v2263 = vadd.f32 %v1317, 1.0
        %v2264 = vadd.f32 %v1319, 1.0
        %v2265 = vadd.f32 %v1321, 1.0
        %v2266 = vadd.f32 %v1323, 1.0
        %v2267 = vadd.f32 %v1325, 1.0
        %v2268 = vadd.f32 %v1327, 1.0
        %v2269 = vadd.f32 %v1329, 1.0
        %v2270 = vadd.f32 %v1331, 1.0
        %v2271 = vadd.f32 %v1333, 1.0
        %v2272 = vadd.f32 %v1335, 1.0
        %v2273 = vadd.f32 %v1337, 1.0
        %v2274 = vadd.f32 %v1339, 1.0
        %v2275 = vadd.f32 %v1341, 1.0
        %v2276 = vadd.f32 %v1343, 1.0
        %v2277 = vadd.f32 %v1345, 1.0
        %v2278 = vadd.f32 %v1347, 1.0
        %v2279 = vadd.f32 %v1349, 1.0
        %v2280 = vadd.f32 %v1351, 1.0
        %v2281 = vadd.f32 %v1353, 1.0
        %v2282 = vadd.f32 %v1355, 1.0
        %v2283 = vadd.f32 %v1357, 1.0
        %v2284 = vadd.f32 %v1359, 1.0
        %v2285 = vadd.f32 %v1361, 1.0
        %v2286 = vadd.f32 %v1363, 1.0
        %v2287 = vadd.f32 %v1365, 1.0
        %v2288 = vadd.f32 %v1367, 1.0
        %v2289 = vadd.f32 %v1369, 1.0
        %v2290 = vadd.f32 %v1371, 1.0
        %v2291 = vadd.f32 %v1373, 1.0
        %v2292 = vadd.f32 %v1375, 1.0
        %v2293 = vadd.f32 %v1377, 1.0
        %v2294 = vadd.f32 %v1379, 1.0
        %v2295 = vadd.f32 %v1381, 1.0
        %v2296 = vadd.f32 %v1383, 1.0
        %v2297 = vadd.f32 %v1385, 1.0
        %v2298 = vadd.f32 %v1387, 1.0
        %v2299 = vadd.f32 %v1389, 1.0
        %v2300 = vadd.f32 %v1391, 1.0
        %v2301 = vadd.f32 %v1393, 1.0
        %v2302 = vadd.f32 %v1395, 1.0
        %v2303 = vadd.f32 %v1397, 1.0
        %v2304 = vadd.f32 %v1399, 1.0
        %v2305 = vadd.f32 %v1401, 1.0
        %v2306 = vadd.f32 %v1403, 1.0
        %v2307 = vadd.f32 %v1405, 1.0
        %v2308 = vadd.f32 %v1407, 1.0
        %v2309 = vadd.f32 %v1409, 1.0
        %v2310 = vadd.f32 %v1411, 1.0
        %v2311 = vadd.f32 %v1413, 1.0
        %v2312 = vadd.f32 %v1415, 1.0
        %v2313 = vadd.f32 %v1417, 1.0
        %v2314 = vadd.f32 %v1419, 1.0
        %v2315 = vadd.f32 %v1421, 1.0
        %v2316 = vadd.f32 %v1423, 1.0
        %v2317 = vadd.f32 %v1425, 1.0
        %v2318 = vadd.f32 %v1427, 1.0
        %v2319 = vadd.f32 %v1429, 1.0
        %v2320 = vadd.f32 %v1431, 1.0
        %v2321 = vadd.f32 %v1433, 1.0
        %v2322 = vadd.f32 %v1435, 1.0
        %v2323 = vadd.f32 %v1437, 1.0
        %v2324 = vadd.f32 %v1439, 1.0
        %v2325 = vadd.f32 %v1441, 1.0
        %v2326 = vadd.f32 %v1443, 1.0
        %v2327 = vadd.f32 %v1445, 1.0
        %v2328 = vadd.f32 %v1447, 1.0
        %v2329 = vadd.f32 %v1449, 1.0
        %v2330 = vadd.f32 %v1451, 1.0
        %v2331 = vadd.f32 %v1453, 1.0
        %v2332 = vadd.f32 %v1455, 1.0
        %v2333 = vadd.f32 %v1457, 1.0
        %v2334 = vadd.f32 %v1459, 1.0
        %v2335 = vadd.f32 %v1461, 1.0
        %v2336 = vadd.f32 %v1463, 1.0
        %v2337 = vadd.f32 %v1465, 1.0
        %v2338 = vadd.f32 %v1467, 1.0
        %v2339 = vadd.f32 %v1469, 1.0
        %v2340 = vadd.f32 %v1471, 1.0
        %v2341 = vadd.f32 %v1473, 1.0
        %v2342 = vadd.f32 %v1475, 1.0
        %v2343 = vadd.f32 %v1477, 1.0
        %v2344 = vadd.f32 %v1479, 1.0
        %v2345 = vadd.f32 %v1481, 1.0
        %v2346 = vadd.f32 %v1483, 1.0
        %v2347 = vadd.f32 %v1485, 1.0
        %v2348 = vadd.f32 %v1487, 1.0
        %v2349 = vadd.f32 %v1489, 1.0
        %v2350 = vadd.f32 %v1491, 1.0
        %v2351 = vadd.f32 %v1493, 1.0
        %v2352 = vadd.f32 %v1495, 1.0
        %v2353 = vadd.f32 %v1497, 1.0
        %v2354 = vadd.f32 %v1499, 1.0
        %v2355 = vadd.f32 %v1501, 1.0
        %v2356 = vadd.f32 %v1503, 1.0
        %v2357 = vadd.f32 %v1505, 1.0
        %v2358 = vadd.f32 %v1507, 1.0
        %v2359 = vadd.f32 %v1509, 1.0
        %v2360 = vadd.f32 %v1511, 1.0
        %v2361 = vadd.f32 %v1513, 1.0
        %v2362 = vadd.f32 %v1515, 1.0
        %v2363 = vadd.f32 %v1517, 1.0
        %v2364 = vadd.f32 %v1519, 1.0
        %v2365 = vadd.f32 %v1521, 1.0
        %v2366 = vadd.f32 %v1523, 1.0
        %v2367 = vadd.f32 %v1525, 1.0
        %v2368 = vadd.f32 %v1527, 1.0
        %v2369 = vadd.f32 %v1529, 1.0
        %v2370 = vadd.f32 %v1531, 1.0
        %v2371 = vadd.f32 %v1533, 1.0
        %v2372 = vadd.f32 %v1535, 1.0
        %v2373 = vadd.f32 %v1537, 1.0
        %v2374 = vadd.f32 %v1539, 1.0
        %v2375 = vadd.f32 %v1541, 1.0
        %v2376 = vadd.f32 %v1543, 1.0
        %v2377 = vadd.f32 %v1545, 1.0
        %v2378 = vadd.f32 %v1547, 1.0
        %v2379 = vadd.f32 %v1549, 1.0
        %v2380 = vadd.f32 %v1551, 1.0
        %v2381 = vadd.f32 %v1553, 1.0
        %v2382 = vadd.f32 %v1555, 1.0
        %v2383 = vadd.f32 %v1557, 1.0
        %v2384 = vadd.f32 %v1559, 1.0
        %v2385 = vadd.f32 %v1561, 1.0
        %v2386 = vadd.f32 %v1563, 1.0
        %v2387 = vadd.f32 %v1565, 1.0
        %v2388 = vadd.f32 %v1567, 1.0
        %v2389 = vadd.f32 %v1569, 1.0
        %v2390 = vadd.f32 %v1571, 1.0
        %v2391 = vadd.f32 %v1573, 1.0
        %v2392 = vadd.f32 %v1575, 1.0
        %v2393 = vadd.f32 %v1577, 1.0
        %v2394 = vadd.f32 %v1579, 1.0
        %v2395 = vadd.f32 %v1581, 1.0
        %v2396 = vadd.f32 %v1583, 1.0
        %v2397 = vadd.f32 %v1585, 1.0
        %v2398 = vadd.f32 %v1587, 1.0
        %v2399 = vadd.f32 %v1589, 1.0
        %v2400 = vadd.f32 %v1591, 1.0
        %v2401 = vadd.f32 %v1593, 1.0
        %v2402 = vadd.f32 %v1595, 1.0
        %v2403 = vadd.f32 %v1597, 1.0
        %v2404 = vadd.f32 %v1599, 1.0
        %v2405 = vadd.f32 %v1601, 1.0
        %v2406 = vadd.f32 %v1603, 1.0
        %v2407 = vadd.f32 %v1605, 1.0
        %v2408 = vadd.f32 %v1607, 1.0
        %v2409 = vadd.f32 %v1609, 1.0
        %v2410 = vadd.f32 %v1611, 1.0
        %v2411 = vadd.f32 %v1613, 1.0
        %v2412 = vadd.f32 %v1615, 1.0
        %v2413 = vadd.f32 %v1617, 1.0
        %v2414 = vadd.f32 %v1619, 1.0
        %v2415 = vadd.f32 %v1621, 1.0
        %v2416 = vadd.f32 %v1623, 1.0
        %v2417 = vadd.f32 %v1625, 1.0
        %v2418 = vadd.f32 %v1627, 1.0
        %v2419 = vadd.f32 %v1629, 1.0
        %v2420 = vadd.f32 %v1631, 1.0
        %v2421 = vadd.f32 %v1633, 1.0
        %v2422 = vadd.f32 %v1635, 1.0
        %v2423 = vadd.f32 %v1637, 1.0
        %v2424 = vadd.f32 %v1639, 1.0
        %v2425 = vadd.f32 %v1641, 1.0
        %v2426 = vadd.f32 %v1643, 1.0
        %v2427 = vadd.f32 %v1645, 1.0
        %v2428 = vadd.f32 %v1647, 1.0
        %v2429 = vadd.f32 %v1649, 1.0
        %v2430 = vadd.f32 %v1651, 1.0
        %v2431 = vadd.f32 %v1653, 1.0
        %v2432 = vadd.f32 %v1655, 1.0
        %v2433 = vadd.f32 %v1657, 1.0
        %v2434 = vadd.f32 %v1659, 1.0
        %v2435 = vadd.f32 %v1661, 1.0
        %v2436 = vadd.f32 %v1663, 1.0
        %v2437 = vadd.f32 %v1665, 1.0
        %v2438 = vadd.f32 %v1667, 1.0
        %v2439 = vadd.f32 %v1669, 1.0
        %v2440 = vadd.f32 %v1671, 1.0
        %v2441 = vadd.f32 %v1673, 1.0
        %v2442 = vadd.f32 %v1675, 1.0
        %v2443 = vadd.f32 %v1677, 1.0
        %v2444 = vadd.f32 %v1679, 1.0
        %v2445 = vadd.f32 %v1681, 1.0
        %v2446 = vadd.f32 %v1683, 1.0
        %v2447 = vadd.f32 %v1685, 1.0
        %v2448 = vadd.f32 %v1687, 1.0
        %v2449 = vadd.f32 %v1689, 1.0
        %v2450 = vadd.f32 %v1691, 1.0
        %v2451 = vadd.f32 %v1693, 1.0
        %v2452 = vadd.f32 %v1695, 1.0
        %v2453 = vadd.f32 %v1697, 1.0
        %v2454 = vadd.f32 %v1699, 1.0
        %v2455 = vadd.f32 %v1701, 1.0
        %v2456 = vadd.f32 %v1703, 1.0
        %v2457 = vadd.f32 %v1705, 1.0
        %v2458 = vadd.f32 %v1707, 1.0
        %v2459 = vadd.f32 %v1709, 1.0
        %v2460 = vadd.f32 %v1711, 1.0
        %v2461 = vadd.f32 %v1713, 1.0
        %v2462 = vadd.f32 %v1715, 1.0
        %v2463 = vadd.f32 %v1717, 1.0
        %v2464 = vadd.f32 %v1719, 1.0
        %v2465 = vadd.f32 %v1721, 1.0
        %v2466 = vadd.f32 %v1723, 1.0
        %v2467 = vadd.f32 %v1725, 1.0
        %v2468 = vadd.f32 %v1727, 1.0
        %v2469 = vadd.f32 %v1729, 1.0
        %v2470 = vadd.f32 %v1731, 1.0
        %v2471 = vadd.f32 %v1733, 1.0
        %v2472 = vadd.f32 %v1735, 1.0
        %v2473 = vadd.f32 %v1737, 1.0
        %v2474 = vadd.f32 %v1739, 1.0
        %v2475 = vadd.f32 %v1741, 1.0
        %v2476 = vadd.f32 %v1743, 1.0
        %v2477 = vadd.f32 %v1745, 1.0
        %v2478 = vadd.f32 %v1747, 1.0
        %v2479 = vadd.f32 %v1749, 1.0
        %v2480 = vadd.f32 %v1751, 1.0
        %v2481 = vadd.f32 %v1753, 1.0
        %v2482 = vadd.f32 %v1755, 1.0
        %v2483 = vadd.f32 %v1757, 1.0
        %v2484 = vadd.f32 %v1759, 1.0
        %v2485 = vadd.f32 %v1761, 1.0
        %v2486 = vadd.f32 %v1763, 1.0
        %v2487 = vadd.f32 %v1765, 1.0
        %v2488 = vadd.f32 %v1767, 1.0
        %v2489 = vadd.f32 %v1769, 1.0
        %v2490 = vadd.f32 %v1771, 1.0
        %v2491 = vadd.f32 %v1773, 1.0
        %v2492 = vadd.f32 %v1775, 1.0
        %v2493 = vadd.f32 %v1777, 1.0
        %v2494 = vadd.f32 %v1779, 1.0
        %v2495 = vadd.f32 %v1781, 1.0
        %v2496 = vadd.f32 %v1783, 1.0
        %v2497 = vadd.f32 %v1785, 1.0
        %v2498 = vadd.f32 %v1787, 1.0
        %v2499 = vadd.f32 %v1789, 1.0
        %v2500 = vadd.f32 %v1791, 1.0
        %v2501 = vadd.f32 %v1793, 1.0
        %v2502 = vadd.f32 %v1795, 1.0
        %v2503 = vadd.f32 %v1797, 1.0
        %v2504 = vadd.f32 %v1799, 1.0
        %v2505 = vadd.f32 %v1801, 1.0
        %v2506 = vadd.f32 %v1803, 1.0
        %v2507 = vadd.f32 %v1805, 1.0
        %v2508 = vadd.f32 %v1807, 1.0
        %v2509 = vadd.f32 %v1809, 1.0
        %v2510 = vadd.f32 %v1811, 1.0
        %v2511 = vadd.f32 %v1813, 1.0
        %v2512 = vadd.f32 %v1815, 1.0
        %v2513 = vadd.f32 %v1817, 1.0
        %v2514 = vadd.f32 %v1819, 1.0
        %v2515 = vadd.f32 %v1821, 1.0
        %v2516 = vadd.f32 %v1823, 1.0
        %v2517 = vadd.f32 %v1825, 1.0
        %v2518 = vadd.f32 %v1827, 1.0
        %v2519 = vadd.f32 %v1829, 1.0
        %v2520 = vadd.f32 %v1831, 1.0
        %v2521 = vadd.f32 %v1833, 1.0
        %v2522 = vadd.f32 %v1835, 1.0
        %v2523 = vadd.f32 %v1837, 1.0
        %v2524 = vadd.f32 %v1839, 1.0
        %v2525 = vadd.f32 %v1841, 1.0
        %v2526 = vadd.f32 %v1843, 1.0
        %v2527 = vadd.f32 %v1845, 1.0
        %v2528 = vadd.f32 %v1847, 1.0
        %v2529 = vadd.f32 %v1849, 1.0
        %v2530 = vadd.f32 %v1851, 1.0
        %v2531 = vadd.f32 %v1853, 1.0
        %v2532 = vadd.f32 %v1855, 1.0
        %v2533 = vadd.f32 %v1857, 1.0
        %v2534 = vadd.f32 %v1859, 1.0
        %v2535 = vadd.f32 %v1861, 1.0
        %v2536 = vadd.f32 %v1863, 1.0
        %v2537 = vadd.f32 %v1865, 1.0
        %v2538 = vadd.f32 %v1867, 1.0
        %v2539 = vadd.f32 %v1869, 1.0
        %v2540 = vadd.f32 %v1871, 1.0
        %v2541 = vadd.f32 %v1873, 1.0
        %v2542 = vadd.f32 %v1875, 1.0
        %v2543 = vadd.f32 %v1877, 1.0
        %v2544 = vadd.f32 %v1879, 1.0
        %v2545 = vadd.f32 %v1881, 1.0
        %v2546 = vadd.f32 %v1883, 1.0
        %v2547 = vadd.f32 %v1885, 1.0
        %v2548 = vadd.f32 %v1887, 1.0
        %v2549 = vadd.f32 %v1889, 1.0
        %v2550 = vadd.f32 %v1891, 1.0
        %v2551 = vadd.f32 %v1893, 1.0
        %v2552 = vadd.f32 %v1895, 1.0
        %v2553 = vadd.f32 %v1897, 1.0
        %v2554 = vadd.f32 %v1899, 1.0
        %v2555 = vadd.f32 %v1901, 1.0
        %v2556 = vadd.f32 %v1903, 1.0
        %v2557 = vadd.f32 %v1905, 1.0
        %v2558 = vadd.f32 %v1907, 1.0
        %v2559 = vadd.f32 %v1909, 1.0
        %v2560 = vadd.f32 %v1911, 1.0
        %v2561 = vadd.f32 %v1913, 1.0
        %v2562 = vadd.f32 %v1915, 1.0
        %v2563 = vadd.f32 %v1917, 1.0
        %v2564 = vadd.f32 %v1919, 1.0
        %v2565 = vadd.f32 %v1921, 1.0
        %v2566 = vadd.f32 %v1923, 1.0
        %v2567 = vadd.f32 %v1925, 1.0
        %v2568 = vadd.f32 %v1927, 1.0
        %v2569 = vadd.f32 %v1929, 1.0
        %v2570 = vadd.f32 %v1931, 1.0
        %v2571 = vadd.f32 %v1933, 1.0
        %v2572 = vadd.f32 %v1935, 1.0
        %v2573 = vadd.f32 %v1937, 1.0
        %v2574 = vadd.f32 %v1939, 1.0
        %v2575 = vadd.f32 %v1941, 1.0
        %v2576 = vadd.f32 %v1943, 1.0
        %v2577 = vadd.f32 %v1945, 1.0
        %v2578 = vadd.f32 %v1947, 1.0
        %v2579 = vadd.f32 %v1949, 1.0
        %v2580 = vadd.f32 %v1951, 1.0
        %v2581 = vadd.f32 %v1953, 1.0
        %v2582 = vadd.f32 %v1955, 1.0
        %v2583 = vadd.f32 %v1957, 1.0
        %v2584 = vadd.f32 %v1959, 1.0
        %v2585 = vadd.f32 %v1961, 1.0
        %v2586 = vadd.f32 %v1963, 1.0
        %v2587 = vadd.f32 %v1965, 1.0
        %v2588 = vadd.f32 %v1967, 1.0
        %v2589 = vadd.f32 %v1969, 1.0
        %v2590 = vadd.f32 %v1971, 1.0
        %v2591 = vadd.f32 %v1973, 1.0
        %v2592 = vadd.f32 %v1975, 1.0
        %v2593 = vadd.f32 %v1977, 1.0
        %v2594 = vadd.f32 %v1979, 1.0
        %v2595 = vadd.f32 %v1981, 1.0
        %v2596 = vadd.f32 %v1983, 1.0
        %v2597 = vadd.f32 %v1985, 1.0
        %v2598 = vadd.f32 %v1987, 1.0
        %v2599 = vadd.f32 %v1989, 1.0
        %v2600 = vadd.f32 %v1991, 1.0
        %v2601 = vadd.f32 %v1993, 1.0
        %v2602 = vadd.f32 %v1995, 1.0
        %v2603 = vadd.f32 %v1997, 1.0
        %v2604 = vadd.f32 %v1999, 1.0
        %v2605 = vadd.f32 %v2001, 1.0
        %v2606 = vadd.f32 %v2003, 1.0
        %v2607 = vadd.f32 %v2005, 1.0
        %v2608 = vadd.f32 %v2007, 1.0
        %v2609 = vadd.f32 %v2009, 1.0
        %v2610 = vadd.f32 %v2011, 1.0
        %v2611 = vadd.f32 %v2013, 1.0
        %v2612 = vadd.f32 %v2015, 1.0
        %v2613 = vadd.f32 %v2017, 1.0
        %v2614 = vadd.f32 %v2019, 1.0
        %v2615 = vadd.f32 %v2021, 1.0
        %v2616 = vadd.f32 %v2023, 1.0
        %v2617 = vadd.f32 %v2025, 1.0
        %v2618 = vadd.f32 %v2027, 1.0
        %v2619 = vadd.f32 %v2029, 1.0
        %v2620 = vadd.f32 %v2031, 1.0
        %v2621 = vadd.f32 %v2033, 1.0
        %v2622 = vadd.f32 %v2035, 1.0
        %v2623 = vadd.f32 %v2037, 1.0
        %v2624 = vadd.f32 %v2039, 1.0
        %v2625 = vadd.f32 %v2041, 1.0
        %v2626 = vadd.f32 %v2043, 1.0
        %v2627 = vadd.f32 %v2045, 1.0
        %v2628 = vadd.f32 %v2047, 1.0
        %v2629 = vadd.f32 %v2049, 1.0
        %v2630 = vadd.f32 %v2051, 1.0
        %v2631 = vadd.f32 %v2053, 1.0
        %v2632 = vadd.f32 %v2055, 1.0
        %v2633 = vadd.f32 %v2057, 1.0
        %v2634 = vadd.f32 %v2059, 1.0
        %v2635 = vadd.f32 %v2061, 1.0
        %v2636 = vadd.f32 %v2063, 1.0
        %v2637 = vadd.f32 %v2065, 1.0
        %v2638 = vadd.f32 %v2067, 1.0
        %v2639 = vadd.f32 %v2069, 1.0
        %v2640 = vadd.f32 %v2071, 1.0
        %v2641 = vadd.f32 %v2073, 1.0
        %v2642 = vadd.f32 %v2075, 1.0
        %v2643 = vadd.f32 %v2077, 1.0
        %v2644 = vadd.f32 %v2079, 1.0
        %v2645 = vadd.f32 %v2081, 1.0
        %v2646 = vadd.f32 %v2083, 1.0
        %v2647 = vadd.f32 %v2085, 1.0
        %v2648 = vadd.f32 %v2087, 1.0
        %v2649 = vadd.f32 %v2089, 1.0
        %v2650 = vadd.f32 %v2091, 1.0
        %v2651 = vadd.f32 %v2093, 1.0
        %v2652 = vadd.f32 %v2095, 1.0
        %v2653 = vadd.f32 %v2097, 1.0
        %v2654 = vadd.f32 %v2099, 1.0
        %v2655 = vadd.f32 %v2101, 1.0
        %v2656 = vadd.f32 %v2103, 1.0
        %v2657 = vadd.f32 %v2105, 1.0
        %v2658 = vadd.f32 %v2107, 1.0
        %v2659 = vadd.f32 %v2109, 1.0
        %v2660 = vadd.f32 %v2111, 1.0
        %v2661 = vadd.f32 %v2113, 1.0
        %v2662 = vadd.f32 %v2115, 1.0
        %v2663 = vadd.f32 %v2117, 1.0
        %v2664 = vadd.f32 %v2119, 1.0
        %v2665 = vadd.f32 %v2121, 1.0
        %v2666 = vadd.f32 %v2123, 1.0
        %v2667 = vadd.f32 %v2125, 1.0
        %v2668 = vadd.f32 %v2127, 1.0
        %v2669 = vadd.f32 %v2129, 1.0
        %v2670 = vadd.f32 %v2131, 1.0
        %v2671 = vadd.f32 %v2133, 1.0
        %v2672 = vadd.f32 %v2135, 1.0
        %v2673 = vadd.f32 %v2137, 1.0
        %v2674 = vadd.f32 %v2139, 1.0
        %v2675 = vadd.f32 %v2141, 1.0
        %v2676 = vadd.f32 %v2143, 1.0
        %v2677 = vadd.f32 %v2145, 1.0
        %v2678 = vadd.f32 %v2147, 1.0
        %v2679 = vadd.f32 %v2149, 1.0
        %v2680 = vadd.f32 %v2151, 1.0
        %v2681 = vadd.f32 %v2153, 1.0
        %v2682 = vadd.f32 %v2155, 1.0
        %v2683 = vadd.f32 %v2157, 1.0
        %v2684 = vadd.f32 %v2159, 1.0
        %v2685 = vadd.f32 %v2161, 1.0
        %v2686 = vadd.f32 %v2163, 1.0
        %v2687 = vadd.f32 %v2165, 1.0
        %v2688 = vadd.f32 %v2167, 1.0
        %v2689 = vadd.f32 %v2169, 1.0
        %v2690 = vadd.f32 %v2171, 1.0
        %v2691 = vadd.f32 %v2173, 1.0
        %v2692 = vadd.f32 %v2175, 1.0
        %v2693 = vadd.f32 %v2177, 1.0
        %v2694 = vadd.f32 %v2179, 1.0
        %v2695 = vadd.f32 %v2181, 1.0
        %v2696 = vadd.f32 %v2183, 1.0
        %v2697 = vadd.f32 %v2185, 1.0
        %v2698 = vrcp.pop %v2186
        %v2699 = vmul.f32 1.0, %v2698
        %v2700 = vrcp.pop %v2187
        %v2701 = vmul.f32 1.0, %v2700
        %v2702 = vrcp.pop %v2188
        %v2703 = vmul.f32 1.0, %v2702
        %v2704 = vrcp.pop %v2189
        %v2705 = vmul.f32 1.0, %v2704
        %v2706 = vrcp.pop %v2190
        %v2707 = vmul.f32 1.0, %v2706
        %v2708 = vrcp.pop %v2191
        %v2709 = vmul.f32 1.0, %v2708
        %v2710 = vrcp.pop %v2192
        %v2711 = vmul.f32 1.0, %v2710
        %v2712 = vrcp.pop %v2193
        %v2713 = vmul.f32 1.0, %v2712
        %v2714 = vrcp.pop %v2194
        %v2715 = vmul.f32 1.0, %v2714
        %v2716 = vrcp.pop %v2195
        %v2717 = vmul.f32 1.0, %v2716
        %v2718 = vrcp.pop %v2196
        %v2719 = vmul.f32 1.0, %v2718
        %v2720 = vrcp.pop %v2197
        %v2721 = vmul.f32 1.0, %v2720
        %v2722 = vrcp.pop %v2198
        %v2723 = vmul.f32 1.0, %v2722
        %v2724 = vrcp.pop %v2199
        %v2725 = vmul.f32 1.0, %v2724
        %v2726 = vrcp.pop %v2200
        %v2727 = vmul.f32 1.0, %v2726
        %v2728 = vrcp.pop %v2201
        %v2729 = vmul.f32 1.0, %v2728
        %v2730 = vrcp.pop %v2202
        %v2731 = vmul.f32 1.0, %v2730
        %v2732 = vrcp.pop %v2203
        %v2733 = vmul.f32 1.0, %v2732
        %v2734 = vrcp.pop %v2204
        %v2735 = vmul.f32 1.0, %v2734
        %v2736 = vrcp.pop %v2205
        %v2737 = vmul.f32 1.0, %v2736
        %v2738 = vrcp.pop %v2206
        %v2739 = vmul.f32 1.0, %v2738
        %v2740 = vrcp.pop %v2207
        %v2741 = vmul.f32 1.0, %v2740
        %v2742 = vrcp.pop %v2208
        %v2743 = vmul.f32 1.0, %v2742
        %v2744 = vrcp.pop %v2209
        %v2745 = vmul.f32 1.0, %v2744
        %v2746 = vrcp.pop %v2210
        %v2747 = vmul.f32 1.0, %v2746
        %v2748 = vrcp.pop %v2211
        %v2749 = vmul.f32 1.0, %v2748
        %v2750 = vrcp.pop %v2212
        %v2751 = vmul.f32 1.0, %v2750
        %v2752 = vrcp.pop %v2213
        %v2753 = vmul.f32 1.0, %v2752
        %v2754 = vrcp.pop %v2214
        %v2755 = vmul.f32 1.0, %v2754
        %v2756 = vrcp.pop %v2215
        %v2757 = vmul.f32 1.0, %v2756
        %v2758 = vrcp.pop %v2216
        %v2759 = vmul.f32 1.0, %v2758
        %v2760 = vrcp.pop %v2217
        %v2761 = vmul.f32 1.0, %v2760
        %v2762 = vrcp.pop %v2218
        %v2763 = vmul.f32 1.0, %v2762
        %v2764 = vrcp.pop %v2219
        %v2765 = vmul.f32 1.0, %v2764
        %v2766 = vrcp.pop %v2220
        %v2767 = vmul.f32 1.0, %v2766
        %v2768 = vrcp.pop %v2221
        %v2769 = vmul.f32 1.0, %v2768
        %v2770 = vrcp.pop %v2222
        %v2771 = vmul.f32 1.0, %v2770
        %v2772 = vrcp.pop %v2223
        %v2773 = vmul.f32 1.0, %v2772
        %v2774 = vrcp.pop %v2224
        %v2775 = vmul.f32 1.0, %v2774
        %v2776 = vrcp.pop %v2225
        %v2777 = vmul.f32 1.0, %v2776
        %v2778 = vrcp.pop %v2226
        %v2779 = vmul.f32 1.0, %v2778
        %v2780 = vrcp.pop %v2227
        %v2781 = vmul.f32 1.0, %v2780
        %v2782 = vrcp.pop %v2228
        %v2783 = vmul.f32 1.0, %v2782
        %v2784 = vrcp.pop %v2229
        %v2785 = vmul.f32 1.0, %v2784
        %v2786 = vrcp.pop %v2230
        %v2787 = vmul.f32 1.0, %v2786
        %v2788 = vrcp.pop %v2231
        %v2789 = vmul.f32 1.0, %v2788
        %v2790 = vrcp.pop %v2232
        %v2791 = vmul.f32 1.0, %v2790
        %v2792 = vrcp.pop %v2233
        %v2793 = vmul.f32 1.0, %v2792
        %v2794 = vrcp.pop %v2234
        %v2795 = vmul.f32 1.0, %v2794
        %v2796 = vrcp.pop %v2235
        %v2797 = vmul.f32 1.0, %v2796
        %v2798 = vrcp.pop %v2236
        %v2799 = vmul.f32 1.0, %v2798
        %v2800 = vrcp.pop %v2237
        %v2801 = vmul.f32 1.0, %v2800
        %v2802 = vrcp.pop %v2238
        %v2803 = vmul.f32 1.0, %v2802
        %v2804 = vrcp.pop %v2239
        %v2805 = vmul.f32 1.0, %v2804
        %v2806 = vrcp.pop %v2240
        %v2807 = vmul.f32 1.0, %v2806
        %v2808 = vrcp.pop %v2241
        %v2809 = vmul.f32 1.0, %v2808
        %v2810 = vrcp.pop %v2242
        %v2811 = vmul.f32 1.0, %v2810
        %v2812 = vrcp.pop %v2243
        %v2813 = vmul.f32 1.0, %v2812
        %v2814 = vrcp.pop %v2244
        %v2815 = vmul.f32 1.0, %v2814
        %v2816 = vrcp.pop %v2245
        %v2817 = vmul.f32 1.0, %v2816
        %v2818 = vrcp.pop %v2246
        %v2819 = vmul.f32 1.0, %v2818
        %v2820 = vrcp.pop %v2247
        %v2821 = vmul.f32 1.0, %v2820
        %v2822 = vrcp.pop %v2248
        %v2823 = vmul.f32 1.0, %v2822
        %v2824 = vrcp.pop %v2249
        %v2825 = vmul.f32 1.0, %v2824
        %v2826 = vrcp.pop %v2250
        %v2827 = vmul.f32 1.0, %v2826
        %v2828 = vrcp.pop %v2251
        %v2829 = vmul.f32 1.0, %v2828
        %v2830 = vrcp.pop %v2252
        %v2831 = vmul.f32 1.0, %v2830
        %v2832 = vrcp.pop %v2253
        %v2833 = vmul.f32 1.0, %v2832
        %v2834 = vrcp.pop %v2254
        %v2835 = vmul.f32 1.0, %v2834
        %v2836 = vrcp.pop %v2255
        %v2837 = vmul.f32 1.0, %v2836
        %v2838 = vrcp.pop %v2256
        %v2839 = vmul.f32 1.0, %v2838
        %v2840 = vrcp.pop %v2257
        %v2841 = vmul.f32 1.0, %v2840
        %v2842 = vrcp.pop %v2258
        %v2843 = vmul.f32 1.0, %v2842
        %v2844 = vrcp.pop %v2259
        %v2845 = vmul.f32 1.0, %v2844
        %v2846 = vrcp.pop %v2260
        %v2847 = vmul.f32 1.0, %v2846
        %v2848 = vrcp.pop %v2261
        %v2849 = vmul.f32 1.0, %v2848
        %v2850 = vrcp.pop %v2262
        %v2851 = vmul.f32 1.0, %v2850
        %v2852 = vrcp.pop %v2263
        %v2853 = vmul.f32 1.0, %v2852
        %v2854 = vrcp.pop %v2264
        %v2855 = vmul.f32 1.0, %v2854
        %v2856 = vrcp.pop %v2265
        %v2857 = vmul.f32 1.0, %v2856
        %v2858 = vrcp.pop %v2266
        %v2859 = vmul.f32 1.0, %v2858
        %v2860 = vrcp.pop %v2267
        %v2861 = vmul.f32 1.0, %v2860
        %v2862 = vrcp.pop %v2268
        %v2863 = vmul.f32 1.0, %v2862
        %v2864 = vrcp.pop %v2269
        %v2865 = vmul.f32 1.0, %v2864
        %v2866 = vrcp.pop %v2270
        %v2867 = vmul.f32 1.0, %v2866
        %v2868 = vrcp.pop %v2271
        %v2869 = vmul.f32 1.0, %v2868
        %v2870 = vrcp.pop %v2272
        %v2871 = vmul.f32 1.0, %v2870
        %v2872 = vrcp.pop %v2273
        %v2873 = vmul.f32 1.0, %v2872
        %v2874 = vrcp.pop %v2274
        %v2875 = vmul.f32 1.0, %v2874
        %v2876 = vrcp.pop %v2275
        %v2877 = vmul.f32 1.0, %v2876
        %v2878 = vrcp.pop %v2276
        %v2879 = vmul.f32 1.0, %v2878
        %v2880 = vrcp.pop %v2277
        %v2881 = vmul.f32 1.0, %v2880
        %v2882 = vrcp.pop %v2278
        %v2883 = vmul.f32 1.0, %v2882
        %v2884 = vrcp.pop %v2279
        %v2885 = vmul.f32 1.0, %v2884
        %v2886 = vrcp.pop %v2280
        %v2887 = vmul.f32 1.0, %v2886
        %v2888 = vrcp.pop %v2281
        %v2889 = vmul.f32 1.0, %v2888
        %v2890 = vrcp.pop %v2282
        %v2891 = vmul.f32 1.0, %v2890
        %v2892 = vrcp.pop %v2283
        %v2893 = vmul.f32 1.0, %v2892
        %v2894 = vrcp.pop %v2284
        %v2895 = vmul.f32 1.0, %v2894
        %v2896 = vrcp.pop %v2285
        %v2897 = vmul.f32 1.0, %v2896
        %v2898 = vrcp.pop %v2286
        %v2899 = vmul.f32 1.0, %v2898
        %v2900 = vrcp.pop %v2287
        %v2901 = vmul.f32 1.0, %v2900
        %v2902 = vrcp.pop %v2288
        %v2903 = vmul.f32 1.0, %v2902
        %v2904 = vrcp.pop %v2289
        %v2905 = vmul.f32 1.0, %v2904
        %v2906 = vrcp.pop %v2290
        %v2907 = vmul.f32 1.0, %v2906
        %v2908 = vrcp.pop %v2291
        %v2909 = vmul.f32 1.0, %v2908
        %v2910 = vrcp.pop %v2292
        %v2911 = vmul.f32 1.0, %v2910
        %v2912 = vrcp.pop %v2293
        %v2913 = vmul.f32 1.0, %v2912
        %v2914 = vrcp.pop %v2294
        %v2915 = vmul.f32 1.0, %v2914
        %v2916 = vrcp.pop %v2295
        %v2917 = vmul.f32 1.0, %v2916
        %v2918 = vrcp.pop %v2296
        %v2919 = vmul.f32 1.0, %v2918
        %v2920 = vrcp.pop %v2297
        %v2921 = vmul.f32 1.0, %v2920
        %v2922 = vrcp.pop %v2298
        %v2923 = vmul.f32 1.0, %v2922
        %v2924 = vrcp.pop %v2299
        %v2925 = vmul.f32 1.0, %v2924
        %v2926 = vrcp.pop %v2300
        %v2927 = vmul.f32 1.0, %v2926
        %v2928 = vrcp.pop %v2301
        %v2929 = vmul.f32 1.0, %v2928
        %v2930 = vrcp.pop %v2302
        %v2931 = vmul.f32 1.0, %v2930
        %v2932 = vrcp.pop %v2303
        %v2933 = vmul.f32 1.0, %v2932
        %v2934 = vrcp.pop %v2304
        %v2935 = vmul.f32 1.0, %v2934
        %v2936 = vrcp.pop %v2305
        %v2937 = vmul.f32 1.0, %v2936
        %v2938 = vrcp.pop %v2306
        %v2939 = vmul.f32 1.0, %v2938
        %v2940 = vrcp.pop %v2307
        %v2941 = vmul.f32 1.0, %v2940
        %v2942 = vrcp.pop %v2308
        %v2943 = vmul.f32 1.0, %v2942
        %v2944 = vrcp.pop %v2309
        %v2945 = vmul.f32 1.0, %v2944
        %v2946 = vrcp.pop %v2310
        %v2947 = vmul.f32 1.0, %v2946
        %v2948 = vrcp.pop %v2311
        %v2949 = vmul.f32 1.0, %v2948
        %v2950 = vrcp.pop %v2312
        %v2951 = vmul.f32 1.0, %v2950
        %v2952 = vrcp.pop %v2313
        %v2953 = vmul.f32 1.0, %v2952
        %v2954 = vrcp.pop %v2314
        %v2955 = vmul.f32 1.0, %v2954
        %v2956 = vrcp.pop %v2315
        %v2957 = vmul.f32 1.0, %v2956
        %v2958 = vrcp.pop %v2316
        %v2959 = vmul.f32 1.0, %v2958
        %v2960 = vrcp.pop %v2317
        %v2961 = vmul.f32 1.0, %v2960
        %v2962 = vrcp.pop %v2318
        %v2963 = vmul.f32 1.0, %v2962
        %v2964 = vrcp.pop %v2319
        %v2965 = vmul.f32 1.0, %v2964
        %v2966 = vrcp.pop %v2320
        %v2967 = vmul.f32 1.0, %v2966
        %v2968 = vrcp.pop %v2321
        %v2969 = vmul.f32 1.0, %v2968
        %v2970 = vrcp.pop %v2322
        %v2971 = vmul.f32 1.0, %v2970
        %v2972 = vrcp.pop %v2323
        %v2973 = vmul.f32 1.0, %v2972
        %v2974 = vrcp.pop %v2324
        %v2975 = vmul.f32 1.0, %v2974
        %v2976 = vrcp.pop %v2325
        %v2977 = vmul.f32 1.0, %v2976
        %v2978 = vrcp.pop %v2326
        %v2979 = vmul.f32 1.0, %v2978
        %v2980 = vrcp.pop %v2327
        %v2981 = vmul.f32 1.0, %v2980
        %v2982 = vrcp.pop %v2328
        %v2983 = vmul.f32 1.0, %v2982
        %v2984 = vrcp.pop %v2329
        %v2985 = vmul.f32 1.0, %v2984
        %v2986 = vrcp.pop %v2330
        %v2987 = vmul.f32 1.0, %v2986
        %v2988 = vrcp.pop %v2331
        %v2989 = vmul.f32 1.0, %v2988
        %v2990 = vrcp.pop %v2332
        %v2991 = vmul.f32 1.0, %v2990
        %v2992 = vrcp.pop %v2333
        %v2993 = vmul.f32 1.0, %v2992
        %v2994 = vrcp.pop %v2334
        %v2995 = vmul.f32 1.0, %v2994
        %v2996 = vrcp.pop %v2335
        %v2997 = vmul.f32 1.0, %v2996
        %v2998 = vrcp.pop %v2336
        %v2999 = vmul.f32 1.0, %v2998
        %v3000 = vrcp.pop %v2337
        %v3001 = vmul.f32 1.0, %v3000
        %v3002 = vrcp.pop %v2338
        %v3003 = vmul.f32 1.0, %v3002
        %v3004 = vrcp.pop %v2339
        %v3005 = vmul.f32 1.0, %v3004
        %v3006 = vrcp.pop %v2340
        %v3007 = vmul.f32 1.0, %v3006
        %v3008 = vrcp.pop %v2341
        %v3009 = vmul.f32 1.0, %v3008
        %v3010 = vrcp.pop %v2342
        %v3011 = vmul.f32 1.0, %v3010
        %v3012 = vrcp.pop %v2343
        %v3013 = vmul.f32 1.0, %v3012
        %v3014 = vrcp.pop %v2344
        %v3015 = vmul.f32 1.0, %v3014
        %v3016 = vrcp.pop %v2345
        %v3017 = vmul.f32 1.0, %v3016
        %v3018 = vrcp.pop %v2346
        %v3019 = vmul.f32 1.0, %v3018
        %v3020 = vrcp.pop %v2347
        %v3021 = vmul.f32 1.0, %v3020
        %v3022 = vrcp.pop %v2348
        %v3023 = vmul.f32 1.0, %v3022
        %v3024 = vrcp.pop %v2349
        %v3025 = vmul.f32 1.0, %v3024
        %v3026 = vrcp.pop %v2350
        %v3027 = vmul.f32 1.0, %v3026
        %v3028 = vrcp.pop %v2351
        %v3029 = vmul.f32 1.0, %v3028
        %v3030 = vrcp.pop %v2352
        %v3031 = vmul.f32 1.0, %v3030
        %v3032 = vrcp.pop %v2353
        %v3033 = vmul.f32 1.0, %v3032
        %v3034 = vrcp.pop %v2354
        %v3035 = vmul.f32 1.0, %v3034
        %v3036 = vrcp.pop %v2355
        %v3037 = vmul.f32 1.0, %v3036
        %v3038 = vrcp.pop %v2356
        %v3039 = vmul.f32 1.0, %v3038
        %v3040 = vrcp.pop %v2357
        %v3041 = vmul.f32 1.0, %v3040
        %v3042 = vrcp.pop %v2358
        %v3043 = vmul.f32 1.0, %v3042
        %v3044 = vrcp.pop %v2359
        %v3045 = vmul.f32 1.0, %v3044
        %v3046 = vrcp.pop %v2360
        %v3047 = vmul.f32 1.0, %v3046
        %v3048 = vrcp.pop %v2361
        %v3049 = vmul.f32 1.0, %v3048
        %v3050 = vrcp.pop %v2362
        %v3051 = vmul.f32 1.0, %v3050
        %v3052 = vrcp.pop %v2363
        %v3053 = vmul.f32 1.0, %v3052
        %v3054 = vrcp.pop %v2364
        %v3055 = vmul.f32 1.0, %v3054
        %v3056 = vrcp.pop %v2365
        %v3057 = vmul.f32 1.0, %v3056
        %v3058 = vrcp.pop %v2366
        %v3059 = vmul.f32 1.0, %v3058
        %v3060 = vrcp.pop %v2367
        %v3061 = vmul.f32 1.0, %v3060
        %v3062 = vrcp.pop %v2368
        %v3063 = vmul.f32 1.0, %v3062
        %v3064 = vrcp.pop %v2369
        %v3065 = vmul.f32 1.0, %v3064
        %v3066 = vrcp.pop %v2370
        %v3067 = vmul.f32 1.0, %v3066
        %v3068 = vrcp.pop %v2371
        %v3069 = vmul.f32 1.0, %v3068
        %v3070 = vrcp.pop %v2372
        %v3071 = vmul.f32 1.0, %v3070
        %v3072 = vrcp.pop %v2373
        %v3073 = vmul.f32 1.0, %v3072
        %v3074 = vrcp.pop %v2374
        %v3075 = vmul.f32 1.0, %v3074
        %v3076 = vrcp.pop %v2375
        %v3077 = vmul.f32 1.0, %v3076
        %v3078 = vrcp.pop %v2376
        %v3079 = vmul.f32 1.0, %v3078
        %v3080 = vrcp.pop %v2377
        %v3081 = vmul.f32 1.0, %v3080
        %v3082 = vrcp.pop %v2378
        %v3083 = vmul.f32 1.0, %v3082
        %v3084 = vrcp.pop %v2379
        %v3085 = vmul.f32 1.0, %v3084
        %v3086 = vrcp.pop %v2380
        %v3087 = vmul.f32 1.0, %v3086
        %v3088 = vrcp.pop %v2381
        %v3089 = vmul.f32 1.0, %v3088
        %v3090 = vrcp.pop %v2382
        %v3091 = vmul.f32 1.0, %v3090
        %v3092 = vrcp.pop %v2383
        %v3093 = vmul.f32 1.0, %v3092
        %v3094 = vrcp.pop %v2384
        %v3095 = vmul.f32 1.0, %v3094
        %v3096 = vrcp.pop %v2385
        %v3097 = vmul.f32 1.0, %v3096
        %v3098 = vrcp.pop %v2386
        %v3099 = vmul.f32 1.0, %v3098
        %v3100 = vrcp.pop %v2387
        %v3101 = vmul.f32 1.0, %v3100
        %v3102 = vrcp.pop %v2388
        %v3103 = vmul.f32 1.0, %v3102
        %v3104 = vrcp.pop %v2389
        %v3105 = vmul.f32 1.0, %v3104
        %v3106 = vrcp.pop %v2390
        %v3107 = vmul.f32 1.0, %v3106
        %v3108 = vrcp.pop %v2391
        %v3109 = vmul.f32 1.0, %v3108
        %v3110 = vrcp.pop %v2392
        %v3111 = vmul.f32 1.0, %v3110
        %v3112 = vrcp.pop %v2393
        %v3113 = vmul.f32 1.0, %v3112
        %v3114 = vrcp.pop %v2394
        %v3115 = vmul.f32 1.0, %v3114
        %v3116 = vrcp.pop %v2395
        %v3117 = vmul.f32 1.0, %v3116
        %v3118 = vrcp.pop %v2396
        %v3119 = vmul.f32 1.0, %v3118
        %v3120 = vrcp.pop %v2397
        %v3121 = vmul.f32 1.0, %v3120
        %v3122 = vrcp.pop %v2398
        %v3123 = vmul.f32 1.0, %v3122
        %v3124 = vrcp.pop %v2399
        %v3125 = vmul.f32 1.0, %v3124
        %v3126 = vrcp.pop %v2400
        %v3127 = vmul.f32 1.0, %v3126
        %v3128 = vrcp.pop %v2401
        %v3129 = vmul.f32 1.0, %v3128
        %v3130 = vrcp.pop %v2402
        %v3131 = vmul.f32 1.0, %v3130
        %v3132 = vrcp.pop %v2403
        %v3133 = vmul.f32 1.0, %v3132
        %v3134 = vrcp.pop %v2404
        %v3135 = vmul.f32 1.0, %v3134
        %v3136 = vrcp.pop %v2405
        %v3137 = vmul.f32 1.0, %v3136
        %v3138 = vrcp.pop %v2406
        %v3139 = vmul.f32 1.0, %v3138
        %v3140 = vrcp.pop %v2407
        %v3141 = vmul.f32 1.0, %v3140
        %v3142 = vrcp.pop %v2408
        %v3143 = vmul.f32 1.0, %v3142
        %v3144 = vrcp.pop %v2409
        %v3145 = vmul.f32 1.0, %v3144
        %v3146 = vrcp.pop %v2410
        %v3147 = vmul.f32 1.0, %v3146
        %v3148 = vrcp.pop %v2411
        %v3149 = vmul.f32 1.0, %v3148
        %v3150 = vrcp.pop %v2412
        %v3151 = vmul.f32 1.0, %v3150
        %v3152 = vrcp.pop %v2413
        %v3153 = vmul.f32 1.0, %v3152
        %v3154 = vrcp.pop %v2414
        %v3155 = vmul.f32 1.0, %v3154
        %v3156 = vrcp.pop %v2415
        %v3157 = vmul.f32 1.0, %v3156
        %v3158 = vrcp.pop %v2416
        %v3159 = vmul.f32 1.0, %v3158
        %v3160 = vrcp.pop %v2417
        %v3161 = vmul.f32 1.0, %v3160
        %v3162 = vrcp.pop %v2418
        %v3163 = vmul.f32 1.0, %v3162
        %v3164 = vrcp.pop %v2419
        %v3165 = vmul.f32 1.0, %v3164
        %v3166 = vrcp.pop %v2420
        %v3167 = vmul.f32 1.0, %v3166
        %v3168 = vrcp.pop %v2421
        %v3169 = vmul.f32 1.0, %v3168
        %v3170 = vrcp.pop %v2422
        %v3171 = vmul.f32 1.0, %v3170
        %v3172 = vrcp.pop %v2423
        %v3173 = vmul.f32 1.0, %v3172
        %v3174 = vrcp.pop %v2424
        %v3175 = vmul.f32 1.0, %v3174
        %v3176 = vrcp.pop %v2425
        %v3177 = vmul.f32 1.0, %v3176
        %v3178 = vrcp.pop %v2426
        %v3179 = vmul.f32 1.0, %v3178
        %v3180 = vrcp.pop %v2427
        %v3181 = vmul.f32 1.0, %v3180
        %v3182 = vrcp.pop %v2428
        %v3183 = vmul.f32 1.0, %v3182
        %v3184 = vrcp.pop %v2429
        %v3185 = vmul.f32 1.0, %v3184
        %v3186 = vrcp.pop %v2430
        %v3187 = vmul.f32 1.0, %v3186
        %v3188 = vrcp.pop %v2431
        %v3189 = vmul.f32 1.0, %v3188
        %v3190 = vrcp.pop %v2432
        %v3191 = vmul.f32 1.0, %v3190
        %v3192 = vrcp.pop %v2433
        %v3193 = vmul.f32 1.0, %v3192
        %v3194 = vrcp.pop %v2434
        %v3195 = vmul.f32 1.0, %v3194
        %v3196 = vrcp.pop %v2435
        %v3197 = vmul.f32 1.0, %v3196
        %v3198 = vrcp.pop %v2436
        %v3199 = vmul.f32 1.0, %v3198
        %v3200 = vrcp.pop %v2437
        %v3201 = vmul.f32 1.0, %v3200
        %v3202 = vrcp.pop %v2438
        %v3203 = vmul.f32 1.0, %v3202
        %v3204 = vrcp.pop %v2439
        %v3205 = vmul.f32 1.0, %v3204
        %v3206 = vrcp.pop %v2440
        %v3207 = vmul.f32 1.0, %v3206
        %v3208 = vrcp.pop %v2441
        %v3209 = vmul.f32 1.0, %v3208
        %v3210 = vrcp.pop %v2442
        %v3211 = vmul.f32 1.0, %v3210
        %v3212 = vrcp.pop %v2443
        %v3213 = vmul.f32 1.0, %v3212
        %v3214 = vrcp.pop %v2444
        %v3215 = vmul.f32 1.0, %v3214
        %v3216 = vrcp.pop %v2445
        %v3217 = vmul.f32 1.0, %v3216
        %v3218 = vrcp.pop %v2446
        %v3219 = vmul.f32 1.0, %v3218
        %v3220 = vrcp.pop %v2447
        %v3221 = vmul.f32 1.0, %v3220
        %v3222 = vrcp.pop %v2448
        %v3223 = vmul.f32 1.0, %v3222
        %v3224 = vrcp.pop %v2449
        %v3225 = vmul.f32 1.0, %v3224
        %v3226 = vrcp.pop %v2450
        %v3227 = vmul.f32 1.0, %v3226
        %v3228 = vrcp.pop %v2451
        %v3229 = vmul.f32 1.0, %v3228
        %v3230 = vrcp.pop %v2452
        %v3231 = vmul.f32 1.0, %v3230
        %v3232 = vrcp.pop %v2453
        %v3233 = vmul.f32 1.0, %v3232
        %v3234 = vrcp.pop %v2454
        %v3235 = vmul.f32 1.0, %v3234
        %v3236 = vrcp.pop %v2455
        %v3237 = vmul.f32 1.0, %v3236
        %v3238 = vrcp.pop %v2456
        %v3239 = vmul.f32 1.0, %v3238
        %v3240 = vrcp.pop %v2457
        %v3241 = vmul.f32 1.0, %v3240
        %v3242 = vrcp.pop %v2458
        %v3243 = vmul.f32 1.0, %v3242
        %v3244 = vrcp.pop %v2459
        %v3245 = vmul.f32 1.0, %v3244
        %v3246 = vrcp.pop %v2460
        %v3247 = vmul.f32 1.0, %v3246
        %v3248 = vrcp.pop %v2461
        %v3249 = vmul.f32 1.0, %v3248
        %v3250 = vrcp.pop %v2462
        %v3251 = vmul.f32 1.0, %v3250
        %v3252 = vrcp.pop %v2463
        %v3253 = vmul.f32 1.0, %v3252
        %v3254 = vrcp.pop %v2464
        %v3255 = vmul.f32 1.0, %v3254
        %v3256 = vrcp.pop %v2465
        %v3257 = vmul.f32 1.0, %v3256
        %v3258 = vrcp.pop %v2466
        %v3259 = vmul.f32 1.0, %v3258
        %v3260 = vrcp.pop %v2467
        %v3261 = vmul.f32 1.0, %v3260
        %v3262 = vrcp.pop %v2468
        %v3263 = vmul.f32 1.0, %v3262
        %v3264 = vrcp.pop %v2469
        %v3265 = vmul.f32 1.0, %v3264
        %v3266 = vrcp.pop %v2470
        %v3267 = vmul.f32 1.0, %v3266
        %v3268 = vrcp.pop %v2471
        %v3269 = vmul.f32 1.0, %v3268
        %v3270 = vrcp.pop %v2472
        %v3271 = vmul.f32 1.0, %v3270
        %v3272 = vrcp.pop %v2473
        %v3273 = vmul.f32 1.0, %v3272
        %v3274 = vrcp.pop %v2474
        %v3275 = vmul.f32 1.0, %v3274
        %v3276 = vrcp.pop %v2475
        %v3277 = vmul.f32 1.0, %v3276
        %v3278 = vrcp.pop %v2476
        %v3279 = vmul.f32 1.0, %v3278
        %v3280 = vrcp.pop %v2477
        %v3281 = vmul.f32 1.0, %v3280
        %v3282 = vrcp.pop %v2478
        %v3283 = vmul.f32 1.0, %v3282
        %v3284 = vrcp.pop %v2479
        %v3285 = vmul.f32 1.0, %v3284
        %v3286 = vrcp.pop %v2480
        %v3287 = vmul.f32 1.0, %v3286
        %v3288 = vrcp.pop %v2481
        %v3289 = vmul.f32 1.0, %v3288
        %v3290 = vrcp.pop %v2482
        %v3291 = vmul.f32 1.0, %v3290
        %v3292 = vrcp.pop %v2483
        %v3293 = vmul.f32 1.0, %v3292
        %v3294 = vrcp.pop %v2484
        %v3295 = vmul.f32 1.0, %v3294
        %v3296 = vrcp.pop %v2485
        %v3297 = vmul.f32 1.0, %v3296
        %v3298 = vrcp.pop %v2486
        %v3299 = vmul.f32 1.0, %v3298
        %v3300 = vrcp.pop %v2487
        %v3301 = vmul.f32 1.0, %v3300
        %v3302 = vrcp.pop %v2488
        %v3303 = vmul.f32 1.0, %v3302
        %v3304 = vrcp.pop %v2489
        %v3305 = vmul.f32 1.0, %v3304
        %v3306 = vrcp.pop %v2490
        %v3307 = vmul.f32 1.0, %v3306
        %v3308 = vrcp.pop %v2491
        %v3309 = vmul.f32 1.0, %v3308
        %v3310 = vrcp.pop %v2492
        %v3311 = vmul.f32 1.0, %v3310
        %v3312 = vrcp.pop %v2493
        %v3313 = vmul.f32 1.0, %v3312
        %v3314 = vrcp.pop %v2494
        %v3315 = vmul.f32 1.0, %v3314
        %v3316 = vrcp.pop %v2495
        %v3317 = vmul.f32 1.0, %v3316
        %v3318 = vrcp.pop %v2496
        %v3319 = vmul.f32 1.0, %v3318
        %v3320 = vrcp.pop %v2497
        %v3321 = vmul.f32 1.0, %v3320
        %v3322 = vrcp.pop %v2498
        %v3323 = vmul.f32 1.0, %v3322
        %v3324 = vrcp.pop %v2499
        %v3325 = vmul.f32 1.0, %v3324
        %v3326 = vrcp.pop %v2500
        %v3327 = vmul.f32 1.0, %v3326
        %v3328 = vrcp.pop %v2501
        %v3329 = vmul.f32 1.0, %v3328
        %v3330 = vrcp.pop %v2502
        %v3331 = vmul.f32 1.0, %v3330
        %v3332 = vrcp.pop %v2503
        %v3333 = vmul.f32 1.0, %v3332
        %v3334 = vrcp.pop %v2504
        %v3335 = vmul.f32 1.0, %v3334
        %v3336 = vrcp.pop %v2505
        %v3337 = vmul.f32 1.0, %v3336
        %v3338 = vrcp.pop %v2506
        %v3339 = vmul.f32 1.0, %v3338
        %v3340 = vrcp.pop %v2507
        %v3341 = vmul.f32 1.0, %v3340
        %v3342 = vrcp.pop %v2508
        %v3343 = vmul.f32 1.0, %v3342
        %v3344 = vrcp.pop %v2509
        %v3345 = vmul.f32 1.0, %v3344
        %v3346 = vrcp.pop %v2510
        %v3347 = vmul.f32 1.0, %v3346
        %v3348 = vrcp.pop %v2511
        %v3349 = vmul.f32 1.0, %v3348
        %v3350 = vrcp.pop %v2512
        %v3351 = vmul.f32 1.0, %v3350
        %v3352 = vrcp.pop %v2513
        %v3353 = vmul.f32 1.0, %v3352
        %v3354 = vrcp.pop %v2514
        %v3355 = vmul.f32 1.0, %v3354
        %v3356 = vrcp.pop %v2515
        %v3357 = vmul.f32 1.0, %v3356
        %v3358 = vrcp.pop %v2516
        %v3359 = vmul.f32 1.0, %v3358
        %v3360 = vrcp.pop %v2517
        %v3361 = vmul.f32 1.0, %v3360
        %v3362 = vrcp.pop %v2518
        %v3363 = vmul.f32 1.0, %v3362
        %v3364 = vrcp.pop %v2519
        %v3365 = vmul.f32 1.0, %v3364
        %v3366 = vrcp.pop %v2520
        %v3367 = vmul.f32 1.0, %v3366
        %v3368 = vrcp.pop %v2521
        %v3369 = vmul.f32 1.0, %v3368
        %v3370 = vrcp.pop %v2522
        %v3371 = vmul.f32 1.0, %v3370
        %v3372 = vrcp.pop %v2523
        %v3373 = vmul.f32 1.0, %v3372
        %v3374 = vrcp.pop %v2524
        %v3375 = vmul.f32 1.0, %v3374
        %v3376 = vrcp.pop %v2525
        %v3377 = vmul.f32 1.0, %v3376
        %v3378 = vrcp.pop %v2526
        %v3379 = vmul.f32 1.0, %v3378
        %v3380 = vrcp.pop %v2527
        %v3381 = vmul.f32 1.0, %v3380
        %v3382 = vrcp.pop %v2528
        %v3383 = vmul.f32 1.0, %v3382
        %v3384 = vrcp.pop %v2529
        %v3385 = vmul.f32 1.0, %v3384
        %v3386 = vrcp.pop %v2530
        %v3387 = vmul.f32 1.0, %v3386
        %v3388 = vrcp.pop %v2531
        %v3389 = vmul.f32 1.0, %v3388
        %v3390 = vrcp.pop %v2532
        %v3391 = vmul.f32 1.0, %v3390
        %v3392 = vrcp.pop %v2533
        %v3393 = vmul.f32 1.0, %v3392
        %v3394 = vrcp.pop %v2534
        %v3395 = vmul.f32 1.0, %v3394
        %v3396 = vrcp.pop %v2535
        %v3397 = vmul.f32 1.0, %v3396
        %v3398 = vrcp.pop %v2536
        %v3399 = vmul.f32 1.0, %v3398
        %v3400 = vrcp.pop %v2537
        %v3401 = vmul.f32 1.0, %v3400
        %v3402 = vrcp.pop %v2538
        %v3403 = vmul.f32 1.0, %v3402
        %v3404 = vrcp.pop %v2539
        %v3405 = vmul.f32 1.0, %v3404
        %v3406 = vrcp.pop %v2540
        %v3407 = vmul.f32 1.0, %v3406
        %v3408 = vrcp.pop %v2541
        %v3409 = vmul.f32 1.0, %v3408
        %v3410 = vrcp.pop %v2542
        %v3411 = vmul.f32 1.0, %v3410
        %v3412 = vrcp.pop %v2543
        %v3413 = vmul.f32 1.0, %v3412
        %v3414 = vrcp.pop %v2544
        %v3415 = vmul.f32 1.0, %v3414
        %v3416 = vrcp.pop %v2545
        %v3417 = vmul.f32 1.0, %v3416
        %v3418 = vrcp.pop %v2546
        %v3419 = vmul.f32 1.0, %v3418
        %v3420 = vrcp.pop %v2547
        %v3421 = vmul.f32 1.0, %v3420
        %v3422 = vrcp.pop %v2548
        %v3423 = vmul.f32 1.0, %v3422
        %v3424 = vrcp.pop %v2549
        %v3425 = vmul.f32 1.0, %v3424
        %v3426 = vrcp.pop %v2550
        %v3427 = vmul.f32 1.0, %v3426
        %v3428 = vrcp.pop %v2551
        %v3429 = vmul.f32 1.0, %v3428
        %v3430 = vrcp.pop %v2552
        %v3431 = vmul.f32 1.0, %v3430
        %v3432 = vrcp.pop %v2553
        %v3433 = vmul.f32 1.0, %v3432
        %v3434 = vrcp.pop %v2554
        %v3435 = vmul.f32 1.0, %v3434
        %v3436 = vrcp.pop %v2555
        %v3437 = vmul.f32 1.0, %v3436
        %v3438 = vrcp.pop %v2556
        %v3439 = vmul.f32 1.0, %v3438
        %v3440 = vrcp.pop %v2557
        %v3441 = vmul.f32 1.0, %v3440
        %v3442 = vrcp.pop %v2558
        %v3443 = vmul.f32 1.0, %v3442
        %v3444 = vrcp.pop %v2559
        %v3445 = vmul.f32 1.0, %v3444
        %v3446 = vrcp.pop %v2560
        %v3447 = vmul.f32 1.0, %v3446
        %v3448 = vrcp.pop %v2561
        %v3449 = vmul.f32 1.0, %v3448
        %v3450 = vrcp.pop %v2562
        %v3451 = vmul.f32 1.0, %v3450
        %v3452 = vrcp.pop %v2563
        %v3453 = vmul.f32 1.0, %v3452
        %v3454 = vrcp.pop %v2564
        %v3455 = vmul.f32 1.0, %v3454
        %v3456 = vrcp.pop %v2565
        %v3457 = vmul.f32 1.0, %v3456
        %v3458 = vrcp.pop %v2566
        %v3459 = vmul.f32 1.0, %v3458
        %v3460 = vrcp.pop %v2567
        %v3461 = vmul.f32 1.0, %v3460
        %v3462 = vrcp.pop %v2568
        %v3463 = vmul.f32 1.0, %v3462
        %v3464 = vrcp.pop %v2569
        %v3465 = vmul.f32 1.0, %v3464
        %v3466 = vrcp.pop %v2570
        %v3467 = vmul.f32 1.0, %v3466
        %v3468 = vrcp.pop %v2571
        %v3469 = vmul.f32 1.0, %v3468
        %v3470 = vrcp.pop %v2572
        %v3471 = vmul.f32 1.0, %v3470
        %v3472 = vrcp.pop %v2573
        %v3473 = vmul.f32 1.0, %v3472
        %v3474 = vrcp.pop %v2574
        %v3475 = vmul.f32 1.0, %v3474
        %v3476 = vrcp.pop %v2575
        %v3477 = vmul.f32 1.0, %v3476
        %v3478 = vrcp.pop %v2576
        %v3479 = vmul.f32 1.0, %v3478
        %v3480 = vrcp.pop %v2577
        %v3481 = vmul.f32 1.0, %v3480
        %v3482 = vrcp.pop %v2578
        %v3483 = vmul.f32 1.0, %v3482
        %v3484 = vrcp.pop %v2579
        %v3485 = vmul.f32 1.0, %v3484
        %v3486 = vrcp.pop %v2580
        %v3487 = vmul.f32 1.0, %v3486
        %v3488 = vrcp.pop %v2581
        %v3489 = vmul.f32 1.0, %v3488
        %v3490 = vrcp.pop %v2582
        %v3491 = vmul.f32 1.0, %v3490
        %v3492 = vrcp.pop %v2583
        %v3493 = vmul.f32 1.0, %v3492
        %v3494 = vrcp.pop %v2584
        %v3495 = vmul.f32 1.0, %v3494
        %v3496 = vrcp.pop %v2585
        %v3497 = vmul.f32 1.0, %v3496
        %v3498 = vrcp.pop %v2586
        %v3499 = vmul.f32 1.0, %v3498
        %v3500 = vrcp.pop %v2587
        %v3501 = vmul.f32 1.0, %v3500
        %v3502 = vrcp.pop %v2588
        %v3503 = vmul.f32 1.0, %v3502
        %v3504 = vrcp.pop %v2589
        %v3505 = vmul.f32 1.0, %v3504
        %v3506 = vrcp.pop %v2590
        %v3507 = vmul.f32 1.0, %v3506
        %v3508 = vrcp.pop %v2591
        %v3509 = vmul.f32 1.0, %v3508
        %v3510 = vrcp.pop %v2592
        %v3511 = vmul.f32 1.0, %v3510
        %v3512 = vrcp.pop %v2593
        %v3513 = vmul.f32 1.0, %v3512
        %v3514 = vrcp.pop %v2594
        %v3515 = vmul.f32 1.0, %v3514
        %v3516 = vrcp.pop %v2595
        %v3517 = vmul.f32 1.0, %v3516
        %v3518 = vrcp.pop %v2596
        %v3519 = vmul.f32 1.0, %v3518
        %v3520 = vrcp.pop %v2597
        %v3521 = vmul.f32 1.0, %v3520
        %v3522 = vrcp.pop %v2598
        %v3523 = vmul.f32 1.0, %v3522
        %v3524 = vrcp.pop %v2599
        %v3525 = vmul.f32 1.0, %v3524
        %v3526 = vrcp.pop %v2600
        %v3527 = vmul.f32 1.0, %v3526
        %v3528 = vrcp.pop %v2601
        %v3529 = vmul.f32 1.0, %v3528
        %v3530 = vrcp.pop %v2602
        %v3531 = vmul.f32 1.0, %v3530
        %v3532 = vrcp.pop %v2603
        %v3533 = vmul.f32 1.0, %v3532
        %v3534 = vrcp.pop %v2604
        %v3535 = vmul.f32 1.0, %v3534
        %v3536 = vrcp.pop %v2605
        %v3537 = vmul.f32 1.0, %v3536
        %v3538 = vrcp.pop %v2606
        %v3539 = vmul.f32 1.0, %v3538
        %v3540 = vrcp.pop %v2607
        %v3541 = vmul.f32 1.0, %v3540
        %v3542 = vrcp.pop %v2608
        %v3543 = vmul.f32 1.0, %v3542
        %v3544 = vrcp.pop %v2609
        %v3545 = vmul.f32 1.0, %v3544
        %v3546 = vrcp.pop %v2610
        %v3547 = vmul.f32 1.0, %v3546
        %v3548 = vrcp.pop %v2611
        %v3549 = vmul.f32 1.0, %v3548
        %v3550 = vrcp.pop %v2612
        %v3551 = vmul.f32 1.0, %v3550
        %v3552 = vrcp.pop %v2613
        %v3553 = vmul.f32 1.0, %v3552
        %v3554 = vrcp.pop %v2614
        %v3555 = vmul.f32 1.0, %v3554
        %v3556 = vrcp.pop %v2615
        %v3557 = vmul.f32 1.0, %v3556
        %v3558 = vrcp.pop %v2616
        %v3559 = vmul.f32 1.0, %v3558
        %v3560 = vrcp.pop %v2617
        %v3561 = vmul.f32 1.0, %v3560
        %v3562 = vrcp.pop %v2618
        %v3563 = vmul.f32 1.0, %v3562
        %v3564 = vrcp.pop %v2619
        %v3565 = vmul.f32 1.0, %v3564
        %v3566 = vrcp.pop %v2620
        %v3567 = vmul.f32 1.0, %v3566
        %v3568 = vrcp.pop %v2621
        %v3569 = vmul.f32 1.0, %v3568
        %v3570 = vrcp.pop %v2622
        %v3571 = vmul.f32 1.0, %v3570
        %v3572 = vrcp.pop %v2623
        %v3573 = vmul.f32 1.0, %v3572
        %v3574 = vrcp.pop %v2624
        %v3575 = vmul.f32 1.0, %v3574
        %v3576 = vrcp.pop %v2625
        %v3577 = vmul.f32 1.0, %v3576
        %v3578 = vrcp.pop %v2626
        %v3579 = vmul.f32 1.0, %v3578
        %v3580 = vrcp.pop %v2627
        %v3581 = vmul.f32 1.0, %v3580
        %v3582 = vrcp.pop %v2628
        %v3583 = vmul.f32 1.0, %v3582
        %v3584 = vrcp.pop %v2629
        %v3585 = vmul.f32 1.0, %v3584
        %v3586 = vrcp.pop %v2630
        %v3587 = vmul.f32 1.0, %v3586
        %v3588 = vrcp.pop %v2631
        %v3589 = vmul.f32 1.0, %v3588
        %v3590 = vrcp.pop %v2632
        %v3591 = vmul.f32 1.0, %v3590
        %v3592 = vrcp.pop %v2633
        %v3593 = vmul.f32 1.0, %v3592
        %v3594 = vrcp.pop %v2634
        %v3595 = vmul.f32 1.0, %v3594
        %v3596 = vrcp.pop %v2635
        %v3597 = vmul.f32 1.0, %v3596
        %v3598 = vrcp.pop %v2636
        %v3599 = vmul.f32 1.0, %v3598
        %v3600 = vrcp.pop %v2637
        %v3601 = vmul.f32 1.0, %v3600
        %v3602 = vrcp.pop %v2638
        %v3603 = vmul.f32 1.0, %v3602
        %v3604 = vrcp.pop %v2639
        %v3605 = vmul.f32 1.0, %v3604
        %v3606 = vrcp.pop %v2640
        %v3607 = vmul.f32 1.0, %v3606
        %v3608 = vrcp.pop %v2641
        %v3609 = vmul.f32 1.0, %v3608
        %v3610 = vrcp.pop %v2642
        %v3611 = vmul.f32 1.0, %v3610
        %v3612 = vrcp.pop %v2643
        %v3613 = vmul.f32 1.0, %v3612
        %v3614 = vrcp.pop %v2644
        %v3615 = vmul.f32 1.0, %v3614
        %v3616 = vrcp.pop %v2645
        %v3617 = vmul.f32 1.0, %v3616
        %v3618 = vrcp.pop %v2646
        %v3619 = vmul.f32 1.0, %v3618
        %v3620 = vrcp.pop %v2647
        %v3621 = vmul.f32 1.0, %v3620
        %v3622 = vrcp.pop %v2648
        %v3623 = vmul.f32 1.0, %v3622
        %v3624 = vrcp.pop %v2649
        %v3625 = vmul.f32 1.0, %v3624
        %v3626 = vrcp.pop %v2650
        %v3627 = vmul.f32 1.0, %v3626
        %v3628 = vrcp.pop %v2651
        %v3629 = vmul.f32 1.0, %v3628
        %v3630 = vrcp.pop %v2652
        %v3631 = vmul.f32 1.0, %v3630
        %v3632 = vrcp.pop %v2653
        %v3633 = vmul.f32 1.0, %v3632
        %v3634 = vrcp.pop %v2654
        %v3635 = vmul.f32 1.0, %v3634
        %v3636 = vrcp.pop %v2655
        %v3637 = vmul.f32 1.0, %v3636
        %v3638 = vrcp.pop %v2656
        %v3639 = vmul.f32 1.0, %v3638
        %v3640 = vrcp.pop %v2657
        %v3641 = vmul.f32 1.0, %v3640
        %v3642 = vrcp.pop %v2658
        %v3643 = vmul.f32 1.0, %v3642
        %v3644 = vrcp.pop %v2659
        %v3645 = vmul.f32 1.0, %v3644
        %v3646 = vrcp.pop %v2660
        %v3647 = vmul.f32 1.0, %v3646
        %v3648 = vrcp.pop %v2661
        %v3649 = vmul.f32 1.0, %v3648
        %v3650 = vrcp.pop %v2662
        %v3651 = vmul.f32 1.0, %v3650
        %v3652 = vrcp.pop %v2663
        %v3653 = vmul.f32 1.0, %v3652
        %v3654 = vrcp.pop %v2664
        %v3655 = vmul.f32 1.0, %v3654
        %v3656 = vrcp.pop %v2665
        %v3657 = vmul.f32 1.0, %v3656
        %v3658 = vrcp.pop %v2666
        %v3659 = vmul.f32 1.0, %v3658
        %v3660 = vrcp.pop %v2667
        %v3661 = vmul.f32 1.0, %v3660
        %v3662 = vrcp.pop %v2668
        %v3663 = vmul.f32 1.0, %v3662
        %v3664 = vrcp.pop %v2669
        %v3665 = vmul.f32 1.0, %v3664
        %v3666 = vrcp.pop %v2670
        %v3667 = vmul.f32 1.0, %v3666
        %v3668 = vrcp.pop %v2671
        %v3669 = vmul.f32 1.0, %v3668
        %v3670 = vrcp.pop %v2672
        %v3671 = vmul.f32 1.0, %v3670
        %v3672 = vrcp.pop %v2673
        %v3673 = vmul.f32 1.0, %v3672
        %v3674 = vrcp.pop %v2674
        %v3675 = vmul.f32 1.0, %v3674
        %v3676 = vrcp.pop %v2675
        %v3677 = vmul.f32 1.0, %v3676
        %v3678 = vrcp.pop %v2676
        %v3679 = vmul.f32 1.0, %v3678
        %v3680 = vrcp.pop %v2677
        %v3681 = vmul.f32 1.0, %v3680
        %v3682 = vrcp.pop %v2678
        %v3683 = vmul.f32 1.0, %v3682
        %v3684 = vrcp.pop %v2679
        %v3685 = vmul.f32 1.0, %v3684
        %v3686 = vrcp.pop %v2680
        %v3687 = vmul.f32 1.0, %v3686
        %v3688 = vrcp.pop %v2681
        %v3689 = vmul.f32 1.0, %v3688
        %v3690 = vrcp.pop %v2682
        %v3691 = vmul.f32 1.0, %v3690
        %v3692 = vrcp.pop %v2683
        %v3693 = vmul.f32 1.0, %v3692
        %v3694 = vrcp.pop %v2684
        %v3695 = vmul.f32 1.0, %v3694
        %v3696 = vrcp.pop %v2685
        %v3697 = vmul.f32 1.0, %v3696
        %v3698 = vrcp.pop %v2686
        %v3699 = vmul.f32 1.0, %v3698
        %v3700 = vrcp.pop %v2687
        %v3701 = vmul.f32 1.0, %v3700
        %v3702 = vrcp.pop %v2688
        %v3703 = vmul.f32 1.0, %v3702
        %v3704 = vrcp.pop %v2689
        %v3705 = vmul.f32 1.0, %v3704
        %v3706 = vrcp.pop %v2690
        %v3707 = vmul.f32 1.0, %v3706
        %v3708 = vrcp.pop %v2691
        %v3709 = vmul.f32 1.0, %v3708
        %v3710 = vrcp.pop %v2692
        %v3711 = vmul.f32 1.0, %v3710
        %v3712 = vrcp.pop %v2693
        %v3713 = vmul.f32 1.0, %v3712
        %v3714 = vrcp.pop %v2694
        %v3715 = vmul.f32 1.0, %v3714
        %v3716 = vrcp.pop %v2695
        %v3717 = vmul.f32 1.0, %v3716
        %v3718 = vrcp.pop %v2696
        %v3719 = vmul.f32 1.0, %v3718
        %v3720 = vrcp.pop %v2697
        %v3721 = vmul.f32 1.0, %v3720
        %v3722 = vmul.f32 %v138, %v2699
        %v3723 = vmul.f32 %v139, %v2701
        %v3724 = vmul.f32 %v140, %v2703
        %v3725 = vmul.f32 %v141, %v2705
        %v3726 = vmul.f32 %v142, %v2707
        %v3727 = vmul.f32 %v143, %v2709
        %v3728 = vmul.f32 %v144, %v2711
        %v3729 = vmul.f32 %v145, %v2713
        %v3730 = vmul.f32 %v146, %v2715
        %v3731 = vmul.f32 %v147, %v2717
        %v3732 = vmul.f32 %v148, %v2719
        %v3733 = vmul.f32 %v149, %v2721
        %v3734 = vmul.f32 %v150, %v2723
        %v3735 = vmul.f32 %v151, %v2725
        %v3736 = vmul.f32 %v152, %v2727
        %v3737 = vmul.f32 %v153, %v2729
        %v3738 = vmul.f32 %v154, %v2731
        %v3739 = vmul.f32 %v155, %v2733
        %v3740 = vmul.f32 %v156, %v2735
        %v3741 = vmul.f32 %v157, %v2737
        %v3742 = vmul.f32 %v158, %v2739
        %v3743 = vmul.f32 %v159, %v2741
        %v3744 = vmul.f32 %v160, %v2743
        %v3745 = vmul.f32 %v161, %v2745
        %v3746 = vmul.f32 %v162, %v2747
        %v3747 = vmul.f32 %v163, %v2749
        %v3748 = vmul.f32 %v164, %v2751
        %v3749 = vmul.f32 %v165, %v2753
        %v3750 = vmul.f32 %v166, %v2755
        %v3751 = vmul.f32 %v167, %v2757
        %v3752 = vmul.f32 %v168, %v2759
        %v3753 = vmul.f32 %v169, %v2761
        %v3754 = vmul.f32 %v170, %v2763
        %v3755 = vmul.f32 %v171, %v2765
        %v3756 = vmul.f32 %v172, %v2767
        %v3757 = vmul.f32 %v173, %v2769
        %v3758 = vmul.f32 %v174, %v2771
        %v3759 = vmul.f32 %v175, %v2773
        %v3760 = vmul.f32 %v176, %v2775
        %v3761 = vmul.f32 %v177, %v2777
        %v3762 = vmul.f32 %v178, %v2779
        %v3763 = vmul.f32 %v179, %v2781
        %v3764 = vmul.f32 %v180, %v2783
        %v3765 = vmul.f32 %v181, %v2785
        %v3766 = vmul.f32 %v182, %v2787
        %v3767 = vmul.f32 %v183, %v2789
        %v3768 = vmul.f32 %v184, %v2791
        %v3769 = vmul.f32 %v185, %v2793
        %v3770 = vmul.f32 %v186, %v2795
        %v3771 = vmul.f32 %v187, %v2797
        %v3772 = vmul.f32 %v188, %v2799
        %v3773 = vmul.f32 %v189, %v2801
        %v3774 = vmul.f32 %v190, %v2803
        %v3775 = vmul.f32 %v191, %v2805
        %v3776 = vmul.f32 %v192, %v2807
        %v3777 = vmul.f32 %v193, %v2809
        %v3778 = vmul.f32 %v194, %v2811
        %v3779 = vmul.f32 %v195, %v2813
        %v3780 = vmul.f32 %v196, %v2815
        %v3781 = vmul.f32 %v197, %v2817
        %v3782 = vmul.f32 %v198, %v2819
        %v3783 = vmul.f32 %v199, %v2821
        %v3784 = vmul.f32 %v200, %v2823
        %v3785 = vmul.f32 %v201, %v2825
        %v3786 = vmul.f32 %v202, %v2827
        %v3787 = vmul.f32 %v203, %v2829
        %v3788 = vmul.f32 %v204, %v2831
        %v3789 = vmul.f32 %v205, %v2833
        %v3790 = vmul.f32 %v206, %v2835
        %v3791 = vmul.f32 %v207, %v2837
        %v3792 = vmul.f32 %v208, %v2839
        %v3793 = vmul.f32 %v209, %v2841
        %v3794 = vmul.f32 %v210, %v2843
        %v3795 = vmul.f32 %v211, %v2845
        %v3796 = vmul.f32 %v212, %v2847
        %v3797 = vmul.f32 %v213, %v2849
        %v3798 = vmul.f32 %v214, %v2851
        %v3799 = vmul.f32 %v215, %v2853
        %v3800 = vmul.f32 %v216, %v2855
        %v3801 = vmul.f32 %v217, %v2857
        %v3802 = vmul.f32 %v218, %v2859
        %v3803 = vmul.f32 %v219, %v2861
        %v3804 = vmul.f32 %v220, %v2863
        %v3805 = vmul.f32 %v221, %v2865
        %v3806 = vmul.f32 %v222, %v2867
        %v3807 = vmul.f32 %v223, %v2869
        %v3808 = vmul.f32 %v224, %v2871
        %v3809 = vmul.f32 %v225, %v2873
        %v3810 = vmul.f32 %v226, %v2875
        %v3811 = vmul.f32 %v227, %v2877
        %v3812 = vmul.f32 %v228, %v2879
        %v3813 = vmul.f32 %v229, %v2881
        %v3814 = vmul.f32 %v230, %v2883
        %v3815 = vmul.f32 %v231, %v2885
        %v3816 = vmul.f32 %v232, %v2887
        %v3817 = vmul.f32 %v233, %v2889
        %v3818 = vmul.f32 %v234, %v2891
        %v3819 = vmul.f32 %v235, %v2893
        %v3820 = vmul.f32 %v236, %v2895
        %v3821 = vmul.f32 %v237, %v2897
        %v3822 = vmul.f32 %v238, %v2899
        %v3823 = vmul.f32 %v239, %v2901
        %v3824 = vmul.f32 %v240, %v2903
        %v3825 = vmul.f32 %v241, %v2905
        %v3826 = vmul.f32 %v242, %v2907
        %v3827 = vmul.f32 %v243, %v2909
        %v3828 = vmul.f32 %v244, %v2911
        %v3829 = vmul.f32 %v245, %v2913
        %v3830 = vmul.f32 %v246, %v2915
        %v3831 = vmul.f32 %v247, %v2917
        %v3832 = vmul.f32 %v248, %v2919
        %v3833 = vmul.f32 %v249, %v2921
        %v3834 = vmul.f32 %v250, %v2923
        %v3835 = vmul.f32 %v251, %v2925
        %v3836 = vmul.f32 %v252, %v2927
        %v3837 = vmul.f32 %v253, %v2929
        %v3838 = vmul.f32 %v254, %v2931
        %v3839 = vmul.f32 %v255, %v2933
        %v3840 = vmul.f32 %v256, %v2935
        %v3841 = vmul.f32 %v257, %v2937
        %v3842 = vmul.f32 %v258, %v2939
        %v3843 = vmul.f32 %v259, %v2941
        %v3844 = vmul.f32 %v260, %v2943
        %v3845 = vmul.f32 %v261, %v2945
        %v3846 = vmul.f32 %v262, %v2947
        %v3847 = vmul.f32 %v263, %v2949
        %v3848 = vmul.f32 %v264, %v2951
        %v3849 = vmul.f32 %v265, %v2953
        %v3850 = vmul.f32 %v266, %v2955
        %v3851 = vmul.f32 %v267, %v2957
        %v3852 = vmul.f32 %v268, %v2959
        %v3853 = vmul.f32 %v269, %v2961
        %v3854 = vmul.f32 %v270, %v2963
        %v3855 = vmul.f32 %v271, %v2965
        %v3856 = vmul.f32 %v272, %v2967
        %v3857 = vmul.f32 %v273, %v2969
        %v3858 = vmul.f32 %v274, %v2971
        %v3859 = vmul.f32 %v275, %v2973
        %v3860 = vmul.f32 %v276, %v2975
        %v3861 = vmul.f32 %v277, %v2977
        %v3862 = vmul.f32 %v278, %v2979
        %v3863 = vmul.f32 %v279, %v2981
        %v3864 = vmul.f32 %v280, %v2983
        %v3865 = vmul.f32 %v281, %v2985
        %v3866 = vmul.f32 %v282, %v2987
        %v3867 = vmul.f32 %v283, %v2989
        %v3868 = vmul.f32 %v284, %v2991
        %v3869 = vmul.f32 %v285, %v2993
        %v3870 = vmul.f32 %v286, %v2995
        %v3871 = vmul.f32 %v287, %v2997
        %v3872 = vmul.f32 %v288, %v2999
        %v3873 = vmul.f32 %v289, %v3001
        %v3874 = vmul.f32 %v290, %v3003
        %v3875 = vmul.f32 %v291, %v3005
        %v3876 = vmul.f32 %v292, %v3007
        %v3877 = vmul.f32 %v293, %v3009
        %v3878 = vmul.f32 %v294, %v3011
        %v3879 = vmul.f32 %v295, %v3013
        %v3880 = vmul.f32 %v296, %v3015
        %v3881 = vmul.f32 %v297, %v3017
        %v3882 = vmul.f32 %v298, %v3019
        %v3883 = vmul.f32 %v299, %v3021
        %v3884 = vmul.f32 %v300, %v3023
        %v3885 = vmul.f32 %v301, %v3025
        %v3886 = vmul.f32 %v302, %v3027
        %v3887 = vmul.f32 %v303, %v3029
        %v3888 = vmul.f32 %v304, %v3031
        %v3889 = vmul.f32 %v305, %v3033
        %v3890 = vmul.f32 %v306, %v3035
        %v3891 = vmul.f32 %v307, %v3037
        %v3892 = vmul.f32 %v308, %v3039
        %v3893 = vmul.f32 %v309, %v3041
        %v3894 = vmul.f32 %v310, %v3043
        %v3895 = vmul.f32 %v311, %v3045
        %v3896 = vmul.f32 %v312, %v3047
        %v3897 = vmul.f32 %v313, %v3049
        %v3898 = vmul.f32 %v314, %v3051
        %v3899 = vmul.f32 %v315, %v3053
        %v3900 = vmul.f32 %v316, %v3055
        %v3901 = vmul.f32 %v317, %v3057
        %v3902 = vmul.f32 %v318, %v3059
        %v3903 = vmul.f32 %v319, %v3061
        %v3904 = vmul.f32 %v320, %v3063
        %v3905 = vmul.f32 %v321, %v3065
        %v3906 = vmul.f32 %v322, %v3067
        %v3907 = vmul.f32 %v323, %v3069
        %v3908 = vmul.f32 %v324, %v3071
        %v3909 = vmul.f32 %v325, %v3073
        %v3910 = vmul.f32 %v326, %v3075
        %v3911 = vmul.f32 %v327, %v3077
        %v3912 = vmul.f32 %v328, %v3079
        %v3913 = vmul.f32 %v329, %v3081
        %v3914 = vmul.f32 %v330, %v3083
        %v3915 = vmul.f32 %v331, %v3085
        %v3916 = vmul.f32 %v332, %v3087
        %v3917 = vmul.f32 %v333, %v3089
        %v3918 = vmul.f32 %v334, %v3091
        %v3919 = vmul.f32 %v335, %v3093
        %v3920 = vmul.f32 %v336, %v3095
        %v3921 = vmul.f32 %v337, %v3097
        %v3922 = vmul.f32 %v338, %v3099
        %v3923 = vmul.f32 %v339, %v3101
        %v3924 = vmul.f32 %v340, %v3103
        %v3925 = vmul.f32 %v341, %v3105
        %v3926 = vmul.f32 %v342, %v3107
        %v3927 = vmul.f32 %v343, %v3109
        %v3928 = vmul.f32 %v344, %v3111
        %v3929 = vmul.f32 %v345, %v3113
        %v3930 = vmul.f32 %v346, %v3115
        %v3931 = vmul.f32 %v347, %v3117
        %v3932 = vmul.f32 %v348, %v3119
        %v3933 = vmul.f32 %v349, %v3121
        %v3934 = vmul.f32 %v350, %v3123
        %v3935 = vmul.f32 %v351, %v3125
        %v3936 = vmul.f32 %v352, %v3127
        %v3937 = vmul.f32 %v353, %v3129
        %v3938 = vmul.f32 %v354, %v3131
        %v3939 = vmul.f32 %v355, %v3133
        %v3940 = vmul.f32 %v356, %v3135
        %v3941 = vmul.f32 %v357, %v3137
        %v3942 = vmul.f32 %v358, %v3139
        %v3943 = vmul.f32 %v359, %v3141
        %v3944 = vmul.f32 %v360, %v3143
        %v3945 = vmul.f32 %v361, %v3145
        %v3946 = vmul.f32 %v362, %v3147
        %v3947 = vmul.f32 %v363, %v3149
        %v3948 = vmul.f32 %v364, %v3151
        %v3949 = vmul.f32 %v365, %v3153
        %v3950 = vmul.f32 %v366, %v3155
        %v3951 = vmul.f32 %v367, %v3157
        %v3952 = vmul.f32 %v368, %v3159
        %v3953 = vmul.f32 %v369, %v3161
        %v3954 = vmul.f32 %v370, %v3163
        %v3955 = vmul.f32 %v371, %v3165
        %v3956 = vmul.f32 %v372, %v3167
        %v3957 = vmul.f32 %v373, %v3169
        %v3958 = vmul.f32 %v374, %v3171
        %v3959 = vmul.f32 %v375, %v3173
        %v3960 = vmul.f32 %v376, %v3175
        %v3961 = vmul.f32 %v377, %v3177
        %v3962 = vmul.f32 %v378, %v3179
        %v3963 = vmul.f32 %v379, %v3181
        %v3964 = vmul.f32 %v380, %v3183
        %v3965 = vmul.f32 %v381, %v3185
        %v3966 = vmul.f32 %v382, %v3187
        %v3967 = vmul.f32 %v383, %v3189
        %v3968 = vmul.f32 %v384, %v3191
        %v3969 = vmul.f32 %v385, %v3193
        %v3970 = vmul.f32 %v386, %v3195
        %v3971 = vmul.f32 %v387, %v3197
        %v3972 = vmul.f32 %v388, %v3199
        %v3973 = vmul.f32 %v389, %v3201
        %v3974 = vmul.f32 %v390, %v3203
        %v3975 = vmul.f32 %v391, %v3205
        %v3976 = vmul.f32 %v392, %v3207
        %v3977 = vmul.f32 %v393, %v3209
        %v3978 = vmul.f32 %v394, %v3211
        %v3979 = vmul.f32 %v395, %v3213
        %v3980 = vmul.f32 %v396, %v3215
        %v3981 = vmul.f32 %v397, %v3217
        %v3982 = vmul.f32 %v398, %v3219
        %v3983 = vmul.f32 %v399, %v3221
        %v3984 = vmul.f32 %v400, %v3223
        %v3985 = vmul.f32 %v401, %v3225
        %v3986 = vmul.f32 %v402, %v3227
        %v3987 = vmul.f32 %v403, %v3229
        %v3988 = vmul.f32 %v404, %v3231
        %v3989 = vmul.f32 %v405, %v3233
        %v3990 = vmul.f32 %v406, %v3235
        %v3991 = vmul.f32 %v407, %v3237
        %v3992 = vmul.f32 %v408, %v3239
        %v3993 = vmul.f32 %v409, %v3241
        %v3994 = vmul.f32 %v410, %v3243
        %v3995 = vmul.f32 %v411, %v3245
        %v3996 = vmul.f32 %v412, %v3247
        %v3997 = vmul.f32 %v413, %v3249
        %v3998 = vmul.f32 %v414, %v3251
        %v3999 = vmul.f32 %v415, %v3253
        %v4000 = vmul.f32 %v416, %v3255
        %v4001 = vmul.f32 %v417, %v3257
        %v4002 = vmul.f32 %v418, %v3259
        %v4003 = vmul.f32 %v419, %v3261
        %v4004 = vmul.f32 %v420, %v3263
        %v4005 = vmul.f32 %v421, %v3265
        %v4006 = vmul.f32 %v422, %v3267
        %v4007 = vmul.f32 %v423, %v3269
        %v4008 = vmul.f32 %v424, %v3271
        %v4009 = vmul.f32 %v425, %v3273
        %v4010 = vmul.f32 %v426, %v3275
        %v4011 = vmul.f32 %v427, %v3277
        %v4012 = vmul.f32 %v428, %v3279
        %v4013 = vmul.f32 %v429, %v3281
        %v4014 = vmul.f32 %v430, %v3283
        %v4015 = vmul.f32 %v431, %v3285
        %v4016 = vmul.f32 %v432, %v3287
        %v4017 = vmul.f32 %v433, %v3289
        %v4018 = vmul.f32 %v434, %v3291
        %v4019 = vmul.f32 %v435, %v3293
        %v4020 = vmul.f32 %v436, %v3295
        %v4021 = vmul.f32 %v437, %v3297
        %v4022 = vmul.f32 %v438, %v3299
        %v4023 = vmul.f32 %v439, %v3301
        %v4024 = vmul.f32 %v440, %v3303
        %v4025 = vmul.f32 %v441, %v3305
        %v4026 = vmul.f32 %v442, %v3307
        %v4027 = vmul.f32 %v443, %v3309
        %v4028 = vmul.f32 %v444, %v3311
        %v4029 = vmul.f32 %v445, %v3313
        %v4030 = vmul.f32 %v446, %v3315
        %v4031 = vmul.f32 %v447, %v3317
        %v4032 = vmul.f32 %v448, %v3319
        %v4033 = vmul.f32 %v449, %v3321
        %v4034 = vmul.f32 %v450, %v3323
        %v4035 = vmul.f32 %v451, %v3325
        %v4036 = vmul.f32 %v452, %v3327
        %v4037 = vmul.f32 %v453, %v3329
        %v4038 = vmul.f32 %v454, %v3331
        %v4039 = vmul.f32 %v455, %v3333
        %v4040 = vmul.f32 %v456, %v3335
        %v4041 = vmul.f32 %v457, %v3337
        %v4042 = vmul.f32 %v458, %v3339
        %v4043 = vmul.f32 %v459, %v3341
        %v4044 = vmul.f32 %v460, %v3343
        %v4045 = vmul.f32 %v461, %v3345
        %v4046 = vmul.f32 %v462, %v3347
        %v4047 = vmul.f32 %v463, %v3349
        %v4048 = vmul.f32 %v464, %v3351
        %v4049 = vmul.f32 %v465, %v3353
        %v4050 = vmul.f32 %v466, %v3355
        %v4051 = vmul.f32 %v467, %v3357
        %v4052 = vmul.f32 %v468, %v3359
        %v4053 = vmul.f32 %v469, %v3361
        %v4054 = vmul.f32 %v470, %v3363
        %v4055 = vmul.f32 %v471, %v3365
        %v4056 = vmul.f32 %v472, %v3367
        %v4057 = vmul.f32 %v473, %v3369
        %v4058 = vmul.f32 %v474, %v3371
        %v4059 = vmul.f32 %v475, %v3373
        %v4060 = vmul.f32 %v476, %v3375
        %v4061 = vmul.f32 %v477, %v3377
        %v4062 = vmul.f32 %v478, %v3379
        %v4063 = vmul.f32 %v479, %v3381
        %v4064 = vmul.f32 %v480, %v3383
        %v4065 = vmul.f32 %v481, %v3385
        %v4066 = vmul.f32 %v482, %v3387
        %v4067 = vmul.f32 %v483, %v3389
        %v4068 = vmul.f32 %v484, %v3391
        %v4069 = vmul.f32 %v485, %v3393
        %v4070 = vmul.f32 %v486, %v3395
        %v4071 = vmul.f32 %v487, %v3397
        %v4072 = vmul.f32 %v488, %v3399
        %v4073 = vmul.f32 %v489, %v3401
        %v4074 = vmul.f32 %v490, %v3403
        %v4075 = vmul.f32 %v491, %v3405
        %v4076 = vmul.f32 %v492, %v3407
        %v4077 = vmul.f32 %v493, %v3409
        %v4078 = vmul.f32 %v494, %v3411
        %v4079 = vmul.f32 %v495, %v3413
        %v4080 = vmul.f32 %v496, %v3415
        %v4081 = vmul.f32 %v497, %v3417
        %v4082 = vmul.f32 %v498, %v3419
        %v4083 = vmul.f32 %v499, %v3421
        %v4084 = vmul.f32 %v500, %v3423
        %v4085 = vmul.f32 %v501, %v3425
        %v4086 = vmul.f32 %v502, %v3427
        %v4087 = vmul.f32 %v503, %v3429
        %v4088 = vmul.f32 %v504, %v3431
        %v4089 = vmul.f32 %v505, %v3433
        %v4090 = vmul.f32 %v506, %v3435
        %v4091 = vmul.f32 %v507, %v3437
        %v4092 = vmul.f32 %v508, %v3439
        %v4093 = vmul.f32 %v509, %v3441
        %v4094 = vmul.f32 %v510, %v3443
        %v4095 = vmul.f32 %v511, %v3445
        %v4096 = vmul.f32 %v512, %v3447
        %v4097 = vmul.f32 %v513, %v3449
        %v4098 = vmul.f32 %v514, %v3451
        %v4099 = vmul.f32 %v515, %v3453
        %v4100 = vmul.f32 %v516, %v3455
        %v4101 = vmul.f32 %v517, %v3457
        %v4102 = vmul.f32 %v518, %v3459
        %v4103 = vmul.f32 %v519, %v3461
        %v4104 = vmul.f32 %v520, %v3463
        %v4105 = vmul.f32 %v521, %v3465
        %v4106 = vmul.f32 %v522, %v3467
        %v4107 = vmul.f32 %v523, %v3469
        %v4108 = vmul.f32 %v524, %v3471
        %v4109 = vmul.f32 %v525, %v3473
        %v4110 = vmul.f32 %v526, %v3475
        %v4111 = vmul.f32 %v527, %v3477
        %v4112 = vmul.f32 %v528, %v3479
        %v4113 = vmul.f32 %v529, %v3481
        %v4114 = vmul.f32 %v530, %v3483
        %v4115 = vmul.f32 %v531, %v3485
        %v4116 = vmul.f32 %v532, %v3487
        %v4117 = vmul.f32 %v533, %v3489
        %v4118 = vmul.f32 %v534, %v3491
        %v4119 = vmul.f32 %v535, %v3493
        %v4120 = vmul.f32 %v536, %v3495
        %v4121 = vmul.f32 %v537, %v3497
        %v4122 = vmul.f32 %v538, %v3499
        %v4123 = vmul.f32 %v539, %v3501
        %v4124 = vmul.f32 %v540, %v3503
        %v4125 = vmul.f32 %v541, %v3505
        %v4126 = vmul.f32 %v542, %v3507
        %v4127 = vmul.f32 %v543, %v3509
        %v4128 = vmul.f32 %v544, %v3511
        %v4129 = vmul.f32 %v545, %v3513
        %v4130 = vmul.f32 %v546, %v3515
        %v4131 = vmul.f32 %v547, %v3517
        %v4132 = vmul.f32 %v548, %v3519
        %v4133 = vmul.f32 %v549, %v3521
        %v4134 = vmul.f32 %v550, %v3523
        %v4135 = vmul.f32 %v551, %v3525
        %v4136 = vmul.f32 %v552, %v3527
        %v4137 = vmul.f32 %v553, %v3529
        %v4138 = vmul.f32 %v554, %v3531
        %v4139 = vmul.f32 %v555, %v3533
        %v4140 = vmul.f32 %v556, %v3535
        %v4141 = vmul.f32 %v557, %v3537
        %v4142 = vmul.f32 %v558, %v3539
        %v4143 = vmul.f32 %v559, %v3541
        %v4144 = vmul.f32 %v560, %v3543
        %v4145 = vmul.f32 %v561, %v3545
        %v4146 = vmul.f32 %v562, %v3547
        %v4147 = vmul.f32 %v563, %v3549
        %v4148 = vmul.f32 %v564, %v3551
        %v4149 = vmul.f32 %v565, %v3553
        %v4150 = vmul.f32 %v566, %v3555
        %v4151 = vmul.f32 %v567, %v3557
        %v4152 = vmul.f32 %v568, %v3559
        %v4153 = vmul.f32 %v569, %v3561
        %v4154 = vmul.f32 %v570, %v3563
        %v4155 = vmul.f32 %v571, %v3565
        %v4156 = vmul.f32 %v572, %v3567
        %v4157 = vmul.f32 %v573, %v3569
        %v4158 = vmul.f32 %v574, %v3571
        %v4159 = vmul.f32 %v575, %v3573
        %v4160 = vmul.f32 %v576, %v3575
        %v4161 = vmul.f32 %v577, %v3577
        %v4162 = vmul.f32 %v578, %v3579
        %v4163 = vmul.f32 %v579, %v3581
        %v4164 = vmul.f32 %v580, %v3583
        %v4165 = vmul.f32 %v581, %v3585
        %v4166 = vmul.f32 %v582, %v3587
        %v4167 = vmul.f32 %v583, %v3589
        %v4168 = vmul.f32 %v584, %v3591
        %v4169 = vmul.f32 %v585, %v3593
        %v4170 = vmul.f32 %v586, %v3595
        %v4171 = vmul.f32 %v587, %v3597
        %v4172 = vmul.f32 %v588, %v3599
        %v4173 = vmul.f32 %v589, %v3601
        %v4174 = vmul.f32 %v590, %v3603
        %v4175 = vmul.f32 %v591, %v3605
        %v4176 = vmul.f32 %v592, %v3607
        %v4177 = vmul.f32 %v593, %v3609
        %v4178 = vmul.f32 %v594, %v3611
        %v4179 = vmul.f32 %v595, %v3613
        %v4180 = vmul.f32 %v596, %v3615
        %v4181 = vmul.f32 %v597, %v3617
        %v4182 = vmul.f32 %v598, %v3619
        %v4183 = vmul.f32 %v599, %v3621
        %v4184 = vmul.f32 %v600, %v3623
        %v4185 = vmul.f32 %v601, %v3625
        %v4186 = vmul.f32 %v602, %v3627
        %v4187 = vmul.f32 %v603, %v3629
        %v4188 = vmul.f32 %v604, %v3631
        %v4189 = vmul.f32 %v605, %v3633
        %v4190 = vmul.f32 %v606, %v3635
        %v4191 = vmul.f32 %v607, %v3637
        %v4192 = vmul.f32 %v608, %v3639
        %v4193 = vmul.f32 %v609, %v3641
        %v4194 = vmul.f32 %v610, %v3643
        %v4195 = vmul.f32 %v611, %v3645
        %v4196 = vmul.f32 %v612, %v3647
        %v4197 = vmul.f32 %v613, %v3649
        %v4198 = vmul.f32 %v614, %v3651
        %v4199 = vmul.f32 %v615, %v3653
        %v4200 = vmul.f32 %v616, %v3655
        %v4201 = vmul.f32 %v617, %v3657
        %v4202 = vmul.f32 %v618, %v3659
        %v4203 = vmul.f32 %v619, %v3661
        %v4204 = vmul.f32 %v620, %v3663
        %v4205 = vmul.f32 %v621, %v3665
        %v4206 = vmul.f32 %v622, %v3667
        %v4207 = vmul.f32 %v623, %v3669
        %v4208 = vmul.f32 %v624, %v3671
        %v4209 = vmul.f32 %v625, %v3673
        %v4210 = vmul.f32 %v626, %v3675
        %v4211 = vmul.f32 %v627, %v3677
        %v4212 = vmul.f32 %v628, %v3679
        %v4213 = vmul.f32 %v629, %v3681
        %v4214 = vmul.f32 %v630, %v3683
        %v4215 = vmul.f32 %v631, %v3685
        %v4216 = vmul.f32 %v632, %v3687
        %v4217 = vmul.f32 %v633, %v3689
        %v4218 = vmul.f32 %v634, %v3691
        %v4219 = vmul.f32 %v635, %v3693
        %v4220 = vmul.f32 %v636, %v3695
        %v4221 = vmul.f32 %v637, %v3697
        %v4222 = vmul.f32 %v638, %v3699
        %v4223 = vmul.f32 %v639, %v3701
        %v4224 = vmul.f32 %v640, %v3703
        %v4225 = vmul.f32 %v641, %v3705
        %v4226 = vmul.f32 %v642, %v3707
        %v4227 = vmul.f32 %v643, %v3709
        %v4228 = vmul.f32 %v644, %v3711
        %v4229 = vmul.f32 %v645, %v3713
        %v4230 = vmul.f32 %v646, %v3715
        %v4231 = vmul.f32 %v647, %v3717
        %v4232 = vmul.f32 %v648, %v3719
        %v4233 = vmul.f32 %v649, %v3721
        %4234 = vst [vmem:[%s135] sm:$0xff] %v3722
        %4235 = vst [vmem:[%s135 + $0x8] sm:$0xff] %v3723
        %4236 = vst [vmem:[%s135 + $0x10] sm:$0xff] %v3724
        %4237 = vst [vmem:[%s135 + $0x18] sm:$0xff] %v3725
        %4238 = vst [vmem:[%s135 + $0x20] sm:$0xff] %v3726
        %4239 = vst [vmem:[%s135 + $0x28] sm:$0xff] %v3727
        %4240 = vst [vmem:[%s135 + $0x30] sm:$0xff] %v3728
        %4241 = vst [vmem:[%s135 + $0x38] sm:$0xff] %v3729
        %4242 = vst [vmem:[%s135 + $0x40] sm:$0xff] %v3730
        %4243 = vst [vmem:[%s135 + $0x48] sm:$0xff] %v3731
        %4244 = vst [vmem:[%s135 + $0x50] sm:$0xff] %v3732
        %4245 = vst [vmem:[%s135 + $0x58] sm:$0xff] %v3733
        %4246 = vst [vmem:[%s135 + $0x60] sm:$0xff] %v3734
        %4247 = vst [vmem:[%s135 + $0x68] sm:$0xff] %v3735
        %4248 = vst [vmem:[%s135 + $0x70] sm:$0xff] %v3736
        %4249 = vst [vmem:[%s135 + $0x78] sm:$0xff] %v3737
        %4250 = vst [vmem:[%s135 + $0x80] sm:$0xff] %v3738
        %4251 = vst [vmem:[%s135 + $0x88] sm:$0xff] %v3739
        %4252 = vst [vmem:[%s135 + $0x90] sm:$0xff] %v3740
        %4253 = vst [vmem:[%s135 + $0x98] sm:$0xff] %v3741
        %4254 = vst [vmem:[%s135 + $0xa0] sm:$0xff] %v3742
        %4255 = vst [vmem:[%s135 + $0xa8] sm:$0xff] %v3743
        %4256 = vst [vmem:[%s135 + $0xb0] sm:$0xff] %v3744
        %4257 = vst [vmem:[%s135 + $0xb8] sm:$0xff] %v3745
        %4258 = vst [vmem:[%s135 + $0xc0] sm:$0xff] %v3746
        %4259 = vst [vmem:[%s135 + $0xc8] sm:$0xff] %v3747
        %4260 = vst [vmem:[%s135 + $0xd0] sm:$0xff] %v3748
        %4261 = vst [vmem:[%s135 + $0xd8] sm:$0xff] %v3749
        %4262 = vst [vmem:[%s135 + $0xe0] sm:$0xff] %v3750
        %4263 = vst [vmem:[%s135 + $0xe8] sm:$0xff] %v3751
        %4264 = vst [vmem:[%s135 + $0xf0] sm:$0xff] %v3752
        %4265 = vst [vmem:[%s135 + $0xf8] sm:$0xff] %v3753
        %4266 = vst [vmem:[%s135 + $0x100] sm:$0xff] %v3754
        %4267 = vst [vmem:[%s135 + $0x108] sm:$0xff] %v3755
        %4268 = vst [vmem:[%s135 + $0x110] sm:$0xff] %v3756
        %4269 = vst [vmem:[%s135 + $0x118] sm:$0xff] %v3757
        %4270 = vst [vmem:[%s135 + $0x120] sm:$0xff] %v3758
        %4271 = vst [vmem:[%s135 + $0x128] sm:$0xff] %v3759
        %4272 = vst [vmem:[%s135 + $0x130] sm:$0xff] %v3760
        %4273 = vst [vmem:[%s135 + $0x138] sm:$0xff] %v3761
        %4274 = vst [vmem:[%s135 + $0x140] sm:$0xff] %v3762
        %4275 = vst [vmem:[%s135 + $0x148] sm:$0xff] %v3763
        %4276 = vst [vmem:[%s135 + $0x150] sm:$0xff] %v3764
        %4277 = vst [vmem:[%s135 + $0x158] sm:$0xff] %v3765
        %4278 = vst [vmem:[%s135 + $0x160] sm:$0xff] %v3766
        %4279 = vst [vmem:[%s135 + $0x168] sm:$0xff] %v3767
        %4280 = vst [vmem:[%s135 + $0x170] sm:$0xff] %v3768
        %4281 = vst [vmem:[%s135 + $0x178] sm:$0xff] %v3769
        %4282 = vst [vmem:[%s135 + $0x180] sm:$0xff] %v3770
        %4283 = vst [vmem:[%s135 + $0x188] sm:$0xff] %v3771
        %4284 = vst [vmem:[%s135 + $0x190] sm:$0xff] %v3772
        %4285 = vst [vmem:[%s135 + $0x198] sm:$0xff] %v3773
        %4286 = vst [vmem:[%s135 + $0x1a0] sm:$0xff] %v3774
        %4287 = vst [vmem:[%s135 + $0x1a8] sm:$0xff] %v3775
        %4288 = vst [vmem:[%s135 + $0x1b0] sm:$0xff] %v3776
        %4289 = vst [vmem:[%s135 + $0x1b8] sm:$0xff] %v3777
        %4290 = vst [vmem:[%s135 + $0x1c0] sm:$0xff] %v3778
        %4291 = vst [vmem:[%s135 + $0x1c8] sm:$0xff] %v3779
        %4292 = vst [vmem:[%s135 + $0x1d0] sm:$0xff] %v3780
        %4293 = vst [vmem:[%s135 + $0x1d8] sm:$0xff] %v3781
        %4294 = vst [vmem:[%s135 + $0x1e0] sm:$0xff] %v3782
        %4295 = vst [vmem:[%s135 + $0x1e8] sm:$0xff] %v3783
        %4296 = vst [vmem:[%s135 + $0x1f0] sm:$0xff] %v3784
        %4297 = vst [vmem:[%s135 + $0x1f8] sm:$0xff] %v3785
        %4298 = vst [vmem:[%s135 + $0x200] sm:$0xff] %v3786
        %4299 = vst [vmem:[%s135 + $0x208] sm:$0xff] %v3787
        %4300 = vst [vmem:[%s135 + $0x210] sm:$0xff] %v3788
        %4301 = vst [vmem:[%s135 + $0x218] sm:$0xff] %v3789
        %4302 = vst [vmem:[%s135 + $0x220] sm:$0xff] %v3790
        %4303 = vst [vmem:[%s135 + $0x228] sm:$0xff] %v3791
        %4304 = vst [vmem:[%s135 + $0x230] sm:$0xff] %v3792
        %4305 = vst [vmem:[%s135 + $0x238] sm:$0xff] %v3793
        %4306 = vst [vmem:[%s135 + $0x240] sm:$0xff] %v3794
        %4307 = vst [vmem:[%s135 + $0x248] sm:$0xff] %v3795
        %4308 = vst [vmem:[%s135 + $0x250] sm:$0xff] %v3796
        %4309 = vst [vmem:[%s135 + $0x258] sm:$0xff] %v3797
        %4310 = vst [vmem:[%s135 + $0x260] sm:$0xff] %v3798
        %4311 = vst [vmem:[%s135 + $0x268] sm:$0xff] %v3799
        %4312 = vst [vmem:[%s135 + $0x270] sm:$0xff] %v3800
        %4313 = vst [vmem:[%s135 + $0x278] sm:$0xff] %v3801
        %4314 = vst [vmem:[%s135 + $0x280] sm:$0xff] %v3802
        %4315 = vst [vmem:[%s135 + $0x288] sm:$0xff] %v3803
        %4316 = vst [vmem:[%s135 + $0x290] sm:$0xff] %v3804
        %4317 = vst [vmem:[%s135 + $0x298] sm:$0xff] %v3805
        %4318 = vst [vmem:[%s135 + $0x2a0] sm:$0xff] %v3806
        %4319 = vst [vmem:[%s135 + $0x2a8] sm:$0xff] %v3807
        %4320 = vst [vmem:[%s135 + $0x2b0] sm:$0xff] %v3808
        %4321 = vst [vmem:[%s135 + $0x2b8] sm:$0xff] %v3809
        %4322 = vst [vmem:[%s135 + $0x2c0] sm:$0xff] %v3810
        %4323 = vst [vmem:[%s135 + $0x2c8] sm:$0xff] %v3811
        %4324 = vst [vmem:[%s135 + $0x2d0] sm:$0xff] %v3812
        %4325 = vst [vmem:[%s135 + $0x2d8] sm:$0xff] %v3813
        %4326 = vst [vmem:[%s135 + $0x2e0] sm:$0xff] %v3814
        %4327 = vst [vmem:[%s135 + $0x2e8] sm:$0xff] %v3815
        %4328 = vst [vmem:[%s135 + $0x2f0] sm:$0xff] %v3816
        %4329 = vst [vmem:[%s135 + $0x2f8] sm:$0xff] %v3817
        %4330 = vst [vmem:[%s135 + $0x300] sm:$0xff] %v3818
        %4331 = vst [vmem:[%s135 + $0x308] sm:$0xff] %v3819
        %4332 = vst [vmem:[%s135 + $0x310] sm:$0xff] %v3820
        %4333 = vst [vmem:[%s135 + $0x318] sm:$0xff] %v3821
        %4334 = vst [vmem:[%s135 + $0x320] sm:$0xff] %v3822
        %4335 = vst [vmem:[%s135 + $0x328] sm:$0xff] %v3823
        %4336 = vst [vmem:[%s135 + $0x330] sm:$0xff] %v3824
        %4337 = vst [vmem:[%s135 + $0x338] sm:$0xff] %v3825
        %4338 = vst [vmem:[%s135 + $0x340] sm:$0xff] %v3826
        %4339 = vst [vmem:[%s135 + $0x348] sm:$0xff] %v3827
        %4340 = vst [vmem:[%s135 + $0x350] sm:$0xff] %v3828
        %4341 = vst [vmem:[%s135 + $0x358] sm:$0xff] %v3829
        %4342 = vst [vmem:[%s135 + $0x360] sm:$0xff] %v3830
        %4343 = vst [vmem:[%s135 + $0x368] sm:$0xff] %v3831
        %4344 = vst [vmem:[%s135 + $0x370] sm:$0xff] %v3832
        %4345 = vst [vmem:[%s135 + $0x378] sm:$0xff] %v3833
        %4346 = vst [vmem:[%s135 + $0x380] sm:$0xff] %v3834
        %4347 = vst [vmem:[%s135 + $0x388] sm:$0xff] %v3835
        %4348 = vst [vmem:[%s135 + $0x390] sm:$0xff] %v3836
        %4349 = vst [vmem:[%s135 + $0x398] sm:$0xff] %v3837
        %4350 = vst [vmem:[%s135 + $0x3a0] sm:$0xff] %v3838
        %4351 = vst [vmem:[%s135 + $0x3a8] sm:$0xff] %v3839
        %4352 = vst [vmem:[%s135 + $0x3b0] sm:$0xff] %v3840
        %4353 = vst [vmem:[%s135 + $0x3b8] sm:$0xff] %v3841
        %4354 = vst [vmem:[%s135 + $0x3c0] sm:$0xff] %v3842
        %4355 = vst [vmem:[%s135 + $0x3c8] sm:$0xff] %v3843
        %4356 = vst [vmem:[%s135 + $0x3d0] sm:$0xff] %v3844
        %4357 = vst [vmem:[%s135 + $0x3d8] sm:$0xff] %v3845
        %4358 = vst [vmem:[%s135 + $0x3e0] sm:$0xff] %v3846
        %4359 = vst [vmem:[%s135 + $0x3e8] sm:$0xff] %v3847
        %4360 = vst [vmem:[%s135 + $0x3f0] sm:$0xff] %v3848
        %4361 = vst [vmem:[%s135 + $0x3f8] sm:$0xff] %v3849
        %4362 = vst [vmem:[%s135 + $0x400] sm:$0xff] %v3850
        %4363 = vst [vmem:[%s135 + $0x408] sm:$0xff] %v3851
        %4364 = vst [vmem:[%s135 + $0x410] sm:$0xff] %v3852
        %4365 = vst [vmem:[%s135 + $0x418] sm:$0xff] %v3853
        %4366 = vst [vmem:[%s135 + $0x420] sm:$0xff] %v3854
        %4367 = vst [vmem:[%s135 + $0x428] sm:$0xff] %v3855
        %4368 = vst [vmem:[%s135 + $0x430] sm:$0xff] %v3856
        %4369 = vst [vmem:[%s135 + $0x438] sm:$0xff] %v3857
        %4370 = vst [vmem:[%s135 + $0x440] sm:$0xff] %v3858
        %4371 = vst [vmem:[%s135 + $0x448] sm:$0xff] %v3859
        %4372 = vst [vmem:[%s135 + $0x450] sm:$0xff] %v3860
        %4373 = vst [vmem:[%s135 + $0x458] sm:$0xff] %v3861
        %4374 = vst [vmem:[%s135 + $0x460] sm:$0xff] %v3862
        %4375 = vst [vmem:[%s135 + $0x468] sm:$0xff] %v3863
        %4376 = vst [vmem:[%s135 + $0x470] sm:$0xff] %v3864
        %4377 = vst [vmem:[%s135 + $0x478] sm:$0xff] %v3865
        %4378 = vst [vmem:[%s135 + $0x480] sm:$0xff] %v3866
        %4379 = vst [vmem:[%s135 + $0x488] sm:$0xff] %v3867
        %4380 = vst [vmem:[%s135 + $0x490] sm:$0xff] %v3868
        %4381 = vst [vmem:[%s135 + $0x498] sm:$0xff] %v3869
        %4382 = vst [vmem:[%s135 + $0x4a0] sm:$0xff] %v3870
        %4383 = vst [vmem:[%s135 + $0x4a8] sm:$0xff] %v3871
        %4384 = vst [vmem:[%s135 + $0x4b0] sm:$0xff] %v3872
        %4385 = vst [vmem:[%s135 + $0x4b8] sm:$0xff] %v3873
        %4386 = vst [vmem:[%s135 + $0x4c0] sm:$0xff] %v3874
        %4387 = vst [vmem:[%s135 + $0x4c8] sm:$0xff] %v3875
        %4388 = vst [vmem:[%s135 + $0x4d0] sm:$0xff] %v3876
        %4389 = vst [vmem:[%s135 + $0x4d8] sm:$0xff] %v3877
        %4390 = vst [vmem:[%s135 + $0x4e0] sm:$0xff] %v3878
        %4391 = vst [vmem:[%s135 + $0x4e8] sm:$0xff] %v3879
        %4392 = vst [vmem:[%s135 + $0x4f0] sm:$0xff] %v3880
        %4393 = vst [vmem:[%s135 + $0x4f8] sm:$0xff] %v3881
        %4394 = vst [vmem:[%s135 + $0x500] sm:$0xff] %v3882
        %4395 = vst [vmem:[%s135 + $0x508] sm:$0xff] %v3883
        %4396 = vst [vmem:[%s135 + $0x510] sm:$0xff] %v3884
        %4397 = vst [vmem:[%s135 + $0x518] sm:$0xff] %v3885
        %4398 = vst [vmem:[%s135 + $0x520] sm:$0xff] %v3886
        %4399 = vst [vmem:[%s135 + $0x528] sm:$0xff] %v3887
        %4400 = vst [vmem:[%s135 + $0x530] sm:$0xff] %v3888
        %4401 = vst [vmem:[%s135 + $0x538] sm:$0xff] %v3889
        %4402 = vst [vmem:[%s135 + $0x540] sm:$0xff] %v3890
        %4403 = vst [vmem:[%s135 + $0x548] sm:$0xff] %v3891
        %4404 = vst [vmem:[%s135 + $0x550] sm:$0xff] %v3892
        %4405 = vst [vmem:[%s135 + $0x558] sm:$0xff] %v3893
        %4406 = vst [vmem:[%s135 + $0x560] sm:$0xff] %v3894
        %4407 = vst [vmem:[%s135 + $0x568] sm:$0xff] %v3895
        %4408 = vst [vmem:[%s135 + $0x570] sm:$0xff] %v3896
        %4409 = vst [vmem:[%s135 + $0x578] sm:$0xff] %v3897
        %4410 = vst [vmem:[%s135 + $0x580] sm:$0xff] %v3898
        %4411 = vst [vmem:[%s135 + $0x588] sm:$0xff] %v3899
        %4412 = vst [vmem:[%s135 + $0x590] sm:$0xff] %v3900
        %4413 = vst [vmem:[%s135 + $0x598] sm:$0xff] %v3901
        %4414 = vst [vmem:[%s135 + $0x5a0] sm:$0xff] %v3902
        %4415 = vst [vmem:[%s135 + $0x5a8] sm:$0xff] %v3903
        %4416 = vst [vmem:[%s135 + $0x5b0] sm:$0xff] %v3904
        %4417 = vst [vmem:[%s135 + $0x5b8] sm:$0xff] %v3905
        %4418 = vst [vmem:[%s135 + $0x5c0] sm:$0xff] %v3906
        %4419 = vst [vmem:[%s135 + $0x5c8] sm:$0xff] %v3907
        %4420 = vst [vmem:[%s135 + $0x5d0] sm:$0xff] %v3908
        %4421 = vst [vmem:[%s135 + $0x5d8] sm:$0xff] %v3909
        %4422 = vst [vmem:[%s135 + $0x5e0] sm:$0xff] %v3910
        %4423 = vst [vmem:[%s135 + $0x5e8] sm:$0xff] %v3911
        %4424 = vst [vmem:[%s135 + $0x5f0] sm:$0xff] %v3912
        %4425 = vst [vmem:[%s135 + $0x5f8] sm:$0xff] %v3913
        %4426 = vst [vmem:[%s135 + $0x600] sm:$0xff] %v3914
        %4427 = vst [vmem:[%s135 + $0x608] sm:$0xff] %v3915
        %4428 = vst [vmem:[%s135 + $0x610] sm:$0xff] %v3916
        %4429 = vst [vmem:[%s135 + $0x618] sm:$0xff] %v3917
        %4430 = vst [vmem:[%s135 + $0x620] sm:$0xff] %v3918
        %4431 = vst [vmem:[%s135 + $0x628] sm:$0xff] %v3919
        %4432 = vst [vmem:[%s135 + $0x630] sm:$0xff] %v3920
        %4433 = vst [vmem:[%s135 + $0x638] sm:$0xff] %v3921
        %4434 = vst [vmem:[%s135 + $0x640] sm:$0xff] %v3922
        %4435 = vst [vmem:[%s135 + $0x648] sm:$0xff] %v3923
        %4436 = vst [vmem:[%s135 + $0x650] sm:$0xff] %v3924
        %4437 = vst [vmem:[%s135 + $0x658] sm:$0xff] %v3925
        %4438 = vst [vmem:[%s135 + $0x660] sm:$0xff] %v3926
        %4439 = vst [vmem:[%s135 + $0x668] sm:$0xff] %v3927
        %4440 = vst [vmem:[%s135 + $0x670] sm:$0xff] %v3928
        %4441 = vst [vmem:[%s135 + $0x678] sm:$0xff] %v3929
        %4442 = vst [vmem:[%s135 + $0x680] sm:$0xff] %v3930
        %4443 = vst [vmem:[%s135 + $0x688] sm:$0xff] %v3931
        %4444 = vst [vmem:[%s135 + $0x690] sm:$0xff] %v3932
        %4445 = vst [vmem:[%s135 + $0x698] sm:$0xff] %v3933
        %4446 = vst [vmem:[%s135 + $0x6a0] sm:$0xff] %v3934
        %4447 = vst [vmem:[%s135 + $0x6a8] sm:$0xff] %v3935
        %4448 = vst [vmem:[%s135 + $0x6b0] sm:$0xff] %v3936
        %4449 = vst [vmem:[%s135 + $0x6b8] sm:$0xff] %v3937
        %4450 = vst [vmem:[%s135 + $0x6c0] sm:$0xff] %v3938
        %4451 = vst [vmem:[%s135 + $0x6c8] sm:$0xff] %v3939
        %4452 = vst [vmem:[%s135 + $0x6d0] sm:$0xff] %v3940
        %4453 = vst [vmem:[%s135 + $0x6d8] sm:$0xff] %v3941
        %4454 = vst [vmem:[%s135 + $0x6e0] sm:$0xff] %v3942
        %4455 = vst [vmem:[%s135 + $0x6e8] sm:$0xff] %v3943
        %4456 = vst [vmem:[%s135 + $0x6f0] sm:$0xff] %v3944
        %4457 = vst [vmem:[%s135 + $0x6f8] sm:$0xff] %v3945
        %4458 = vst [vmem:[%s135 + $0x700] sm:$0xff] %v3946
        %4459 = vst [vmem:[%s135 + $0x708] sm:$0xff] %v3947
        %4460 = vst [vmem:[%s135 + $0x710] sm:$0xff] %v3948
        %4461 = vst [vmem:[%s135 + $0x718] sm:$0xff] %v3949
        %4462 = vst [vmem:[%s135 + $0x720] sm:$0xff] %v3950
        %4463 = vst [vmem:[%s135 + $0x728] sm:$0xff] %v3951
        %4464 = vst [vmem:[%s135 + $0x730] sm:$0xff] %v3952
        %4465 = vst [vmem:[%s135 + $0x738] sm:$0xff] %v3953
        %4466 = vst [vmem:[%s135 + $0x740] sm:$0xff] %v3954
        %4467 = vst [vmem:[%s135 + $0x748] sm:$0xff] %v3955
        %4468 = vst [vmem:[%s135 + $0x750] sm:$0xff] %v3956
        %4469 = vst [vmem:[%s135 + $0x758] sm:$0xff] %v3957
        %4470 = vst [vmem:[%s135 + $0x760] sm:$0xff] %v3958
        %4471 = vst [vmem:[%s135 + $0x768] sm:$0xff] %v3959
        %4472 = vst [vmem:[%s135 + $0x770] sm:$0xff] %v3960
        %4473 = vst [vmem:[%s135 + $0x778] sm:$0xff] %v3961
        %4474 = vst [vmem:[%s135 + $0x780] sm:$0xff] %v3962
        %4475 = vst [vmem:[%s135 + $0x788] sm:$0xff] %v3963
        %4476 = vst [vmem:[%s135 + $0x790] sm:$0xff] %v3964
        %4477 = vst [vmem:[%s135 + $0x798] sm:$0xff] %v3965
        %4478 = vst [vmem:[%s135 + $0x7a0] sm:$0xff] %v3966
        %4479 = vst [vmem:[%s135 + $0x7a8] sm:$0xff] %v3967
        %4480 = vst [vmem:[%s135 + $0x7b0] sm:$0xff] %v3968
        %4481 = vst [vmem:[%s135 + $0x7b8] sm:$0xff] %v3969
        %4482 = vst [vmem:[%s135 + $0x7c0] sm:$0xff] %v3970
        %4483 = vst [vmem:[%s135 + $0x7c8] sm:$0xff] %v3971
        %4484 = vst [vmem:[%s135 + $0x7d0] sm:$0xff] %v3972
        %4485 = vst [vmem:[%s135 + $0x7d8] sm:$0xff] %v3973
        %4486 = vst [vmem:[%s135 + $0x7e0] sm:$0xff] %v3974
        %4487 = vst [vmem:[%s135 + $0x7e8] sm:$0xff] %v3975
        %4488 = vst [vmem:[%s135 + $0x7f0] sm:$0xff] %v3976
        %4489 = vst [vmem:[%s135 + $0x7f8] sm:$0xff] %v3977
        %4490 = vst [vmem:[%s135 + $0x800] sm:$0xff] %v3978
        %4491 = vst [vmem:[%s135 + $0x808] sm:$0xff] %v3979
        %4492 = vst [vmem:[%s135 + $0x810] sm:$0xff] %v3980
        %4493 = vst [vmem:[%s135 + $0x818] sm:$0xff] %v3981
        %4494 = vst [vmem:[%s135 + $0x820] sm:$0xff] %v3982
        %4495 = vst [vmem:[%s135 + $0x828] sm:$0xff] %v3983
        %4496 = vst [vmem:[%s135 + $0x830] sm:$0xff] %v3984
        %4497 = vst [vmem:[%s135 + $0x838] sm:$0xff] %v3985
        %4498 = vst [vmem:[%s135 + $0x840] sm:$0xff] %v3986
        %4499 = vst [vmem:[%s135 + $0x848] sm:$0xff] %v3987
        %4500 = vst [vmem:[%s135 + $0x850] sm:$0xff] %v3988
        %4501 = vst [vmem:[%s135 + $0x858] sm:$0xff] %v3989
        %4502 = vst [vmem:[%s135 + $0x860] sm:$0xff] %v3990
        %4503 = vst [vmem:[%s135 + $0x868] sm:$0xff] %v3991
        %4504 = vst [vmem:[%s135 + $0x870] sm:$0xff] %v3992
        %4505 = vst [vmem:[%s135 + $0x878] sm:$0xff] %v3993
        %4506 = vst [vmem:[%s135 + $0x880] sm:$0xff] %v3994
        %4507 = vst [vmem:[%s135 + $0x888] sm:$0xff] %v3995
        %4508 = vst [vmem:[%s135 + $0x890] sm:$0xff] %v3996
        %4509 = vst [vmem:[%s135 + $0x898] sm:$0xff] %v3997
        %4510 = vst [vmem:[%s135 + $0x8a0] sm:$0xff] %v3998
        %4511 = vst [vmem:[%s135 + $0x8a8] sm:$0xff] %v3999
        %4512 = vst [vmem:[%s135 + $0x8b0] sm:$0xff] %v4000
        %4513 = vst [vmem:[%s135 + $0x8b8] sm:$0xff] %v4001
        %4514 = vst [vmem:[%s135 + $0x8c0] sm:$0xff] %v4002
        %4515 = vst [vmem:[%s135 + $0x8c8] sm:$0xff] %v4003
        %4516 = vst [vmem:[%s135 + $0x8d0] sm:$0xff] %v4004
        %4517 = vst [vmem:[%s135 + $0x8d8] sm:$0xff] %v4005
        %4518 = vst [vmem:[%s135 + $0x8e0] sm:$0xff] %v4006
        %4519 = vst [vmem:[%s135 + $0x8e8] sm:$0xff] %v4007
        %4520 = vst [vmem:[%s135 + $0x8f0] sm:$0xff] %v4008
        %4521 = vst [vmem:[%s135 + $0x8f8] sm:$0xff] %v4009
        %4522 = vst [vmem:[%s135 + $0x900] sm:$0xff] %v4010
        %4523 = vst [vmem:[%s135 + $0x908] sm:$0xff] %v4011
        %4524 = vst [vmem:[%s135 + $0x910] sm:$0xff] %v4012
        %4525 = vst [vmem:[%s135 + $0x918] sm:$0xff] %v4013
        %4526 = vst [vmem:[%s135 + $0x920] sm:$0xff] %v4014
        %4527 = vst [vmem:[%s135 + $0x928] sm:$0xff] %v4015
        %4528 = vst [vmem:[%s135 + $0x930] sm:$0xff] %v4016
        %4529 = vst [vmem:[%s135 + $0x938] sm:$0xff] %v4017
        %4530 = vst [vmem:[%s135 + $0x940] sm:$0xff] %v4018
        %4531 = vst [vmem:[%s135 + $0x948] sm:$0xff] %v4019
        %4532 = vst [vmem:[%s135 + $0x950] sm:$0xff] %v4020
        %4533 = vst [vmem:[%s135 + $0x958] sm:$0xff] %v4021
        %4534 = vst [vmem:[%s135 + $0x960] sm:$0xff] %v4022
        %4535 = vst [vmem:[%s135 + $0x968] sm:$0xff] %v4023
        %4536 = vst [vmem:[%s135 + $0x970] sm:$0xff] %v4024
        %4537 = vst [vmem:[%s135 + $0x978] sm:$0xff] %v4025
        %4538 = vst [vmem:[%s135 + $0x980] sm:$0xff] %v4026
        %4539 = vst [vmem:[%s135 + $0x988] sm:$0xff] %v4027
        %4540 = vst [vmem:[%s135 + $0x990] sm:$0xff] %v4028
        %4541 = vst [vmem:[%s135 + $0x998] sm:$0xff] %v4029
        %4542 = vst [vmem:[%s135 + $0x9a0] sm:$0xff] %v4030
        %4543 = vst [vmem:[%s135 + $0x9a8] sm:$0xff] %v4031
        %4544 = vst [vmem:[%s135 + $0x9b0] sm:$0xff] %v4032
        %4545 = vst [vmem:[%s135 + $0x9b8] sm:$0xff] %v4033
        %4546 = vst [vmem:[%s135 + $0x9c0] sm:$0xff] %v4034
        %4547 = vst [vmem:[%s135 + $0x9c8] sm:$0xff] %v4035
        %4548 = vst [vmem:[%s135 + $0x9d0] sm:$0xff] %v4036
        %4549 = vst [vmem:[%s135 + $0x9d8] sm:$0xff] %v4037
        %4550 = vst [vmem:[%s135 + $0x9e0] sm:$0xff] %v4038
        %4551 = vst [vmem:[%s135 + $0x9e8] sm:$0xff] %v4039
        %4552 = vst [vmem:[%s135 + $0x9f0] sm:$0xff] %v4040
        %4553 = vst [vmem:[%s135 + $0x9f8] sm:$0xff] %v4041
        %4554 = vst [vmem:[%s135 + $0xa00] sm:$0xff] %v4042
        %4555 = vst [vmem:[%s135 + $0xa08] sm:$0xff] %v4043
        %4556 = vst [vmem:[%s135 + $0xa10] sm:$0xff] %v4044
        %4557 = vst [vmem:[%s135 + $0xa18] sm:$0xff] %v4045
        %4558 = vst [vmem:[%s135 + $0xa20] sm:$0xff] %v4046
        %4559 = vst [vmem:[%s135 + $0xa28] sm:$0xff] %v4047
        %4560 = vst [vmem:[%s135 + $0xa30] sm:$0xff] %v4048
        %4561 = vst [vmem:[%s135 + $0xa38] sm:$0xff] %v4049
        %4562 = vst [vmem:[%s135 + $0xa40] sm:$0xff] %v4050
        %4563 = vst [vmem:[%s135 + $0xa48] sm:$0xff] %v4051
        %4564 = vst [vmem:[%s135 + $0xa50] sm:$0xff] %v4052
        %4565 = vst [vmem:[%s135 + $0xa58] sm:$0xff] %v4053
        %4566 = vst [vmem:[%s135 + $0xa60] sm:$0xff] %v4054
        %4567 = vst [vmem:[%s135 + $0xa68] sm:$0xff] %v4055
        %4568 = vst [vmem:[%s135 + $0xa70] sm:$0xff] %v4056
        %4569 = vst [vmem:[%s135 + $0xa78] sm:$0xff] %v4057
        %4570 = vst [vmem:[%s135 + $0xa80] sm:$0xff] %v4058
        %4571 = vst [vmem:[%s135 + $0xa88] sm:$0xff] %v4059
        %4572 = vst [vmem:[%s135 + $0xa90] sm:$0xff] %v4060
        %4573 = vst [vmem:[%s135 + $0xa98] sm:$0xff] %v4061
        %4574 = vst [vmem:[%s135 + $0xaa0] sm:$0xff] %v4062
        %4575 = vst [vmem:[%s135 + $0xaa8] sm:$0xff] %v4063
        %4576 = vst [vmem:[%s135 + $0xab0] sm:$0xff] %v4064
        %4577 = vst [vmem:[%s135 + $0xab8] sm:$0xff] %v4065
        %4578 = vst [vmem:[%s135 + $0xac0] sm:$0xff] %v4066
        %4579 = vst [vmem:[%s135 + $0xac8] sm:$0xff] %v4067
        %4580 = vst [vmem:[%s135 + $0xad0] sm:$0xff] %v4068
        %4581 = vst [vmem:[%s135 + $0xad8] sm:$0xff] %v4069
        %4582 = vst [vmem:[%s135 + $0xae0] sm:$0xff] %v4070
        %4583 = vst [vmem:[%s135 + $0xae8] sm:$0xff] %v4071
        %4584 = vst [vmem:[%s135 + $0xaf0] sm:$0xff] %v4072
        %4585 = vst [vmem:[%s135 + $0xaf8] sm:$0xff] %v4073
        %4586 = vst [vmem:[%s135 + $0xb00] sm:$0xff] %v4074
        %4587 = vst [vmem:[%s135 + $0xb08] sm:$0xff] %v4075
        %4588 = vst [vmem:[%s135 + $0xb10] sm:$0xff] %v4076
        %4589 = vst [vmem:[%s135 + $0xb18] sm:$0xff] %v4077
        %4590 = vst [vmem:[%s135 + $0xb20] sm:$0xff] %v4078
        %4591 = vst [vmem:[%s135 + $0xb28] sm:$0xff] %v4079
        %4592 = vst [vmem:[%s135 + $0xb30] sm:$0xff] %v4080
        %4593 = vst [vmem:[%s135 + $0xb38] sm:$0xff] %v4081
        %4594 = vst [vmem:[%s135 + $0xb40] sm:$0xff] %v4082
        %4595 = vst [vmem:[%s135 + $0xb48] sm:$0xff] %v4083
        %4596 = vst [vmem:[%s135 + $0xb50] sm:$0xff] %v4084
        %4597 = vst [vmem:[%s135 + $0xb58] sm:$0xff] %v4085
        %4598 = vst [vmem:[%s135 + $0xb60] sm:$0xff] %v4086
        %4599 = vst [vmem:[%s135 + $0xb68] sm:$0xff] %v4087
        %4600 = vst [vmem:[%s135 + $0xb70] sm:$0xff] %v4088
        %4601 = vst [vmem:[%s135 + $0xb78] sm:$0xff] %v4089
        %4602 = vst [vmem:[%s135 + $0xb80] sm:$0xff] %v4090
        %4603 = vst [vmem:[%s135 + $0xb88] sm:$0xff] %v4091
        %4604 = vst [vmem:[%s135 + $0xb90] sm:$0xff] %v4092
        %4605 = vst [vmem:[%s135 + $0xb98] sm:$0xff] %v4093
        %4606 = vst [vmem:[%s135 + $0xba0] sm:$0xff] %v4094
        %4607 = vst [vmem:[%s135 + $0xba8] sm:$0xff] %v4095
        %4608 = vst [vmem:[%s135 + $0xbb0] sm:$0xff] %v4096
        %4609 = vst [vmem:[%s135 + $0xbb8] sm:$0xff] %v4097
        %4610 = vst [vmem:[%s135 + $0xbc0] sm:$0xff] %v4098
        %4611 = vst [vmem:[%s135 + $0xbc8] sm:$0xff] %v4099
        %4612 = vst [vmem:[%s135 + $0xbd0] sm:$0xff] %v4100
        %4613 = vst [vmem:[%s135 + $0xbd8] sm:$0xff] %v4101
        %4614 = vst [vmem:[%s135 + $0xbe0] sm:$0xff] %v4102
        %4615 = vst [vmem:[%s135 + $0xbe8] sm:$0xff] %v4103
        %4616 = vst [vmem:[%s135 + $0xbf0] sm:$0xff] %v4104
        %4617 = vst [vmem:[%s135 + $0xbf8] sm:$0xff] %v4105
        %4618 = vst [vmem:[%s135 + $0xc00] sm:$0xff] %v4106
        %4619 = vst [vmem:[%s135 + $0xc08] sm:$0xff] %v4107
        %4620 = vst [vmem:[%s135 + $0xc10] sm:$0xff] %v4108
        %4621 = vst [vmem:[%s135 + $0xc18] sm:$0xff] %v4109
        %4622 = vst [vmem:[%s135 + $0xc20] sm:$0xff] %v4110
        %4623 = vst [vmem:[%s135 + $0xc28] sm:$0xff] %v4111
        %4624 = vst [vmem:[%s135 + $0xc30] sm:$0xff] %v4112
        %4625 = vst [vmem:[%s135 + $0xc38] sm:$0xff] %v4113
        %4626 = vst [vmem:[%s135 + $0xc40] sm:$0xff] %v4114
        %4627 = vst [vmem:[%s135 + $0xc48] sm:$0xff] %v4115
        %4628 = vst [vmem:[%s135 + $0xc50] sm:$0xff] %v4116
        %4629 = vst [vmem:[%s135 + $0xc58] sm:$0xff] %v4117
        %4630 = vst [vmem:[%s135 + $0xc60] sm:$0xff] %v4118
        %4631 = vst [vmem:[%s135 + $0xc68] sm:$0xff] %v4119
        %4632 = vst [vmem:[%s135 + $0xc70] sm:$0xff] %v4120
        %4633 = vst [vmem:[%s135 + $0xc78] sm:$0xff] %v4121
        %4634 = vst [vmem:[%s135 + $0xc80] sm:$0xff] %v4122
        %4635 = vst [vmem:[%s135 + $0xc88] sm:$0xff] %v4123
        %4636 = vst [vmem:[%s135 + $0xc90] sm:$0xff] %v4124
        %4637 = vst [vmem:[%s135 + $0xc98] sm:$0xff] %v4125
        %4638 = vst [vmem:[%s135 + $0xca0] sm:$0xff] %v4126
        %4639 = vst [vmem:[%s135 + $0xca8] sm:$0xff] %v4127
        %4640 = vst [vmem:[%s135 + $0xcb0] sm:$0xff] %v4128
        %4641 = vst [vmem:[%s135 + $0xcb8] sm:$0xff] %v4129
        %4642 = vst [vmem:[%s135 + $0xcc0] sm:$0xff] %v4130
        %4643 = vst [vmem:[%s135 + $0xcc8] sm:$0xff] %v4131
        %4644 = vst [vmem:[%s135 + $0xcd0] sm:$0xff] %v4132
        %4645 = vst [vmem:[%s135 + $0xcd8] sm:$0xff] %v4133
        %4646 = vst [vmem:[%s135 + $0xce0] sm:$0xff] %v4134
        %4647 = vst [vmem:[%s135 + $0xce8] sm:$0xff] %v4135
        %4648 = vst [vmem:[%s135 + $0xcf0] sm:$0xff] %v4136
        %4649 = vst [vmem:[%s135 + $0xcf8] sm:$0xff] %v4137
        %4650 = vst [vmem:[%s135 + $0xd00] sm:$0xff] %v4138
        %4651 = vst [vmem:[%s135 + $0xd08] sm:$0xff] %v4139
        %4652 = vst [vmem:[%s135 + $0xd10] sm:$0xff] %v4140
        %4653 = vst [vmem:[%s135 + $0xd18] sm:$0xff] %v4141
        %4654 = vst [vmem:[%s135 + $0xd20] sm:$0xff] %v4142
        %4655 = vst [vmem:[%s135 + $0xd28] sm:$0xff] %v4143
        %4656 = vst [vmem:[%s135 + $0xd30] sm:$0xff] %v4144
        %4657 = vst [vmem:[%s135 + $0xd38] sm:$0xff] %v4145
        %4658 = vst [vmem:[%s135 + $0xd40] sm:$0xff] %v4146
        %4659 = vst [vmem:[%s135 + $0xd48] sm:$0xff] %v4147
        %4660 = vst [vmem:[%s135 + $0xd50] sm:$0xff] %v4148
        %4661 = vst [vmem:[%s135 + $0xd58] sm:$0xff] %v4149
        %4662 = vst [vmem:[%s135 + $0xd60] sm:$0xff] %v4150
        %4663 = vst [vmem:[%s135 + $0xd68] sm:$0xff] %v4151
        %4664 = vst [vmem:[%s135 + $0xd70] sm:$0xff] %v4152
        %4665 = vst [vmem:[%s135 + $0xd78] sm:$0xff] %v4153
        %4666 = vst [vmem:[%s135 + $0xd80] sm:$0xff] %v4154
        %4667 = vst [vmem:[%s135 + $0xd88] sm:$0xff] %v4155
        %4668 = vst [vmem:[%s135 + $0xd90] sm:$0xff] %v4156
        %4669 = vst [vmem:[%s135 + $0xd98] sm:$0xff] %v4157
        %4670 = vst [vmem:[%s135 + $0xda0] sm:$0xff] %v4158
        %4671 = vst [vmem:[%s135 + $0xda8] sm:$0xff] %v4159
        %4672 = vst [vmem:[%s135 + $0xdb0] sm:$0xff] %v4160
        %4673 = vst [vmem:[%s135 + $0xdb8] sm:$0xff] %v4161
        %4674 = vst [vmem:[%s135 + $0xdc0] sm:$0xff] %v4162
        %4675 = vst [vmem:[%s135 + $0xdc8] sm:$0xff] %v4163
        %4676 = vst [vmem:[%s135 + $0xdd0] sm:$0xff] %v4164
        %4677 = vst [vmem:[%s135 + $0xdd8] sm:$0xff] %v4165
        %4678 = vst [vmem:[%s135 + $0xde0] sm:$0xff] %v4166
        %4679 = vst [vmem:[%s135 + $0xde8] sm:$0xff] %v4167
        %4680 = vst [vmem:[%s135 + $0xdf0] sm:$0xff] %v4168
        %4681 = vst [vmem:[%s135 + $0xdf8] sm:$0xff] %v4169
        %4682 = vst [vmem:[%s135 + $0xe00] sm:$0xff] %v4170
        %4683 = vst [vmem:[%s135 + $0xe08] sm:$0xff] %v4171
        %4684 = vst [vmem:[%s135 + $0xe10] sm:$0xff] %v4172
        %4685 = vst [vmem:[%s135 + $0xe18] sm:$0xff] %v4173
        %4686 = vst [vmem:[%s135 + $0xe20] sm:$0xff] %v4174
        %4687 = vst [vmem:[%s135 + $0xe28] sm:$0xff] %v4175
        %4688 = vst [vmem:[%s135 + $0xe30] sm:$0xff] %v4176
        %4689 = vst [vmem:[%s135 + $0xe38] sm:$0xff] %v4177
        %4690 = vst [vmem:[%s135 + $0xe40] sm:$0xff] %v4178
        %4691 = vst [vmem:[%s135 + $0xe48] sm:$0xff] %v4179
        %4692 = vst [vmem:[%s135 + $0xe50] sm:$0xff] %v4180
        %4693 = vst [vmem:[%s135 + $0xe58] sm:$0xff] %v4181
        %4694 = vst [vmem:[%s135 + $0xe60] sm:$0xff] %v4182
        %4695 = vst [vmem:[%s135 + $0xe68] sm:$0xff] %v4183
        %4696 = vst [vmem:[%s135 + $0xe70] sm:$0xff] %v4184
        %4697 = vst [vmem:[%s135 + $0xe78] sm:$0xff] %v4185
        %4698 = vst [vmem:[%s135 + $0xe80] sm:$0xff] %v4186
        %4699 = vst [vmem:[%s135 + $0xe88] sm:$0xff] %v4187
        %4700 = vst [vmem:[%s135 + $0xe90] sm:$0xff] %v4188
        %4701 = vst [vmem:[%s135 + $0xe98] sm:$0xff] %v4189
        %4702 = vst [vmem:[%s135 + $0xea0] sm:$0xff] %v4190
        %4703 = vst [vmem:[%s135 + $0xea8] sm:$0xff] %v4191
        %4704 = vst [vmem:[%s135 + $0xeb0] sm:$0xff] %v4192
        %4705 = vst [vmem:[%s135 + $0xeb8] sm:$0xff] %v4193
        %4706 = vst [vmem:[%s135 + $0xec0] sm:$0xff] %v4194
        %4707 = vst [vmem:[%s135 + $0xec8] sm:$0xff] %v4195
        %4708 = vst [vmem:[%s135 + $0xed0] sm:$0xff] %v4196
        %4709 = vst [vmem:[%s135 + $0xed8] sm:$0xff] %v4197
        %4710 = vst [vmem:[%s135 + $0xee0] sm:$0xff] %v4198
        %4711 = vst [vmem:[%s135 + $0xee8] sm:$0xff] %v4199
        %4712 = vst [vmem:[%s135 + $0xef0] sm:$0xff] %v4200
        %4713 = vst [vmem:[%s135 + $0xef8] sm:$0xff] %v4201
        %4714 = vst [vmem:[%s135 + $0xf00] sm:$0xff] %v4202
        %4715 = vst [vmem:[%s135 + $0xf08] sm:$0xff] %v4203
        %4716 = vst [vmem:[%s135 + $0xf10] sm:$0xff] %v4204
        %4717 = vst [vmem:[%s135 + $0xf18] sm:$0xff] %v4205
        %4718 = vst [vmem:[%s135 + $0xf20] sm:$0xff] %v4206
        %4719 = vst [vmem:[%s135 + $0xf28] sm:$0xff] %v4207
        %4720 = vst [vmem:[%s135 + $0xf30] sm:$0xff] %v4208
        %4721 = vst [vmem:[%s135 + $0xf38] sm:$0xff] %v4209
        %4722 = vst [vmem:[%s135 + $0xf40] sm:$0xff] %v4210
        %4723 = vst [vmem:[%s135 + $0xf48] sm:$0xff] %v4211
        %4724 = vst [vmem:[%s135 + $0xf50] sm:$0xff] %v4212
        %4725 = vst [vmem:[%s135 + $0xf58] sm:$0xff] %v4213
        %4726 = vst [vmem:[%s135 + $0xf60] sm:$0xff] %v4214
        %4727 = vst [vmem:[%s135 + $0xf68] sm:$0xff] %v4215
        %4728 = vst [vmem:[%s135 + $0xf70] sm:$0xff] %v4216
        %4729 = vst [vmem:[%s135 + $0xf78] sm:$0xff] %v4217
        %4730 = vst [vmem:[%s135 + $0xf80] sm:$0xff] %v4218
        %4731 = vst [vmem:[%s135 + $0xf88] sm:$0xff] %v4219
        %4732 = vst [vmem:[%s135 + $0xf90] sm:$0xff] %v4220
        %4733 = vst [vmem:[%s135 + $0xf98] sm:$0xff] %v4221
        %4734 = vst [vmem:[%s135 + $0xfa0] sm:$0xff] %v4222
        %4735 = vst [vmem:[%s135 + $0xfa8] sm:$0xff] %v4223
        %4736 = vst [vmem:[%s135 + $0xfb0] sm:$0xff] %v4224
        %4737 = vst [vmem:[%s135 + $0xfb8] sm:$0xff] %v4225
        %4738 = vst [vmem:[%s135 + $0xfc0] sm:$0xff] %v4226
        %4739 = vst [vmem:[%s135 + $0xfc8] sm:$0xff] %v4227
        %4740 = vst [vmem:[%s135 + $0xfd0] sm:$0xff] %v4228
        %4741 = vst [vmem:[%s135 + $0xfd8] sm:$0xff] %v4229
        %4742 = vst [vmem:[%s135 + $0xfe0] sm:$0xff] %v4230
        %4743 = vst [vmem:[%s135 + $0xfe8] sm:$0xff] %v4231
        %4744 = vst [vmem:[%s135 + $0xff0] sm:$0xff] %v4232
        %4745 = vst [vmem:[%s135 + $0xff8] sm:$0xff] %v4233
        %s4746 = sand.u32 %s52, 1
        %s4747 = scalar_lea.sflag [#allocation4], %s4746
        %s4748 = sand.u32 %s52, 1
        %s4749 = smul.addr %s4748, 4096
        %s4750 = scalar_lea.vmem [#allocation5], %s4749
        // Predicated region
        $region29: #{tpu_custom_call.1} parent=23 // pred_check
          %p4751 = pneg %p62
        $region30: #{tpu_custom_call.1} parent=23 // pred_check_branch
          %4753 = sbr.rel (%p4751) target = $region32
        $region31: #{tpu_custom_call.1} parent=23 // pred_region
          %s4754 = smul.u32 128, %s18
          %s4756 = ssub.s32 65536, 65536
          %4757 = vsyncadd %s4747, %s4756
          %s4758 = smul.addr %s4754, 4
          %s4759 = smul.addr %s4758, 128
          %s4760 = scalar_lea.hbm %s1, %s4759
          %s4761 = sshll.u32 %s4750, 4
          %s4762 = int_to_ptr.vmem [resolvable:$true] %s4761
          %4767 = dma.vmem_to_hbm [thread:$0]  %s4762, 65536, %s4760, %s4747, 512, 512, 32
        $region32: #{tpu_custom_call.1} parent=23 // pred_fallthru
          _
      $region24: #{tpu_custom_call.1} parent=5 // pred_fallthru
        _
      %p4768 = scmp.le.s32.totalorder 2, %s13
      // Predicated region
      $region33: #{tpu_custom_call.1} parent=5 // pred_check
        %p4769 = pneg %p4768
      $region34: #{tpu_custom_call.1} parent=5 // pred_check_branch
        %4771 = sbr.rel (%p4769) target = $region36
      $region35: #{tpu_custom_call.1} parent=5 // pred_region
        %s4772 = ssub.s32 %s13, 2
        // Predicated region
        $region37: #{tpu_custom_call.1} parent=35 // pred_check
          %p4773 = pneg %p68
        $region38: #{tpu_custom_call.1} parent=35 // pred_check_branch
          %4775 = sbr.rel (%p4773) target = $region40
        $region39: #{tpu_custom_call.1} parent=35 // pred_region
          %s4776 = sand.u32 %s53, 1
          %s4777 = scalar_lea.sflag [#allocation4], %s4776
          %s4778 = sand.u32 %s53, 1
          %s4779 = smul.addr %s4778, 4096
          %s4780 = scalar_lea.vmem [#allocation5], %s4779
          %4781 = dma.done %s4777, 65536
        $region40: #{tpu_custom_call.1} parent=35 // pred_fallthru
          _
      $region36: #{tpu_custom_call.1} parent=5 // pred_fallthru
        _
    $region6: #{tpu_custom_call.1} parent=1 // loop_footer
      %s17 = sadd.s32 1, %s13
    $region7: #{tpu_custom_call.1} parent=1 // loop_footer_branch
      %12 = sbr.rel target = $region3
    $region8: #{tpu_custom_call.1} parent=1 // loop_exit
      _
    %4782 = vsyncpa [#allocation3], 1
    %s4783 = scalar_lea.sflag [#allocation3], 1
    %4784 = vsyncpa %s4783, 1
    %4785 = vsyncpa [#allocation4], 1
    %s4786 = scalar_lea.sflag [#allocation4], 1
    %4787 = vsyncpa %s4786, 1

</llo_original>
